<compile_context>
chip_gen: v6e
topology: v6e:2x2x1
jax: 0.10.0
libtpu: 0.0.40
codegen_flags: <defaults>
</compile_context>

<pallas_src>
import math
import functools

import jax
import jax.numpy as jnp
from jax.experimental import pallas as pl
from jax.experimental.pallas import tpu as pltpu


def _encoder_block_kernel(params_ref,           # SMEM (4,) f32: [alpha1, bias1, alpha2, bias2]
                          x_ref,                # (S, D) f32   full-sequence x for this batch
                          neg_ref,              # (TQ, S) bf16 additive mask bias (0 / -1e9)
                          wq_ref, bq_ref, wk_ref, bk_ref,
                          wv_ref, bv_ref, wo_ref, bo_ref,
                          w1_ref, b1_ref, w2_ref, b2_ref,
                          o_ref,                # (TQ, D)
                          kT_ref,               # VMEM scratch (D, S) bf16  K^T cache (per batch)
                          v_ref,                # VMEM scratch (S, D) bf16  V cache  (per batch)
                          ctx_ref,              # VMEM scratch (TQ, D) bf16 per-head contexts
                          *, heads, eps, seq_tile):
    f32 = jnp.float32
    bf16 = jnp.bfloat16

    qi = pl.program_id(1)
    S, D = x_ref.shape
    TQ = seq_tile
    dk = D // heads

    alpha1 = params_ref[0]
    beta1 = params_ref[1]
    alpha2 = params_ref[2]
    beta2 = params_ref[3]

    def layernorm(v, alpha, beta):
        # torch LayerNormalization: mean over last dim, std with Bessel
        # correction (N-1), eps added to std (not variance), scalar gain/bias.
        mean = jnp.mean(v, axis=-1, keepdims=True)
        diff = v - mean
        var = jnp.sum(diff * diff, axis=-1, keepdims=True) * (1.0 / (D - 1))
        inv = 1.0 / (jnp.sqrt(var) + eps)        # exact divide (accuracy vs. torch)
        return alpha * diff * inv + beta

    # ---- prime the per-batch K^T / V caches once per batch element ----------
    @pl.when(qi == 0)
    def _():
        xnf = layernorm(x_ref[...].astype(f32), alpha1, beta1).astype(bf16)   # (S, D)
        kproj = jnp.dot(xnf, wk_ref[...], preferred_element_type=f32) + bk_ref[...]
        vproj = jnp.dot(xnf, wv_ref[...], preferred_element_type=f32) + bv_ref[...]
        kT_ref[...] = jnp.transpose(kproj).astype(bf16)   # one transpose per batch
        v_ref[...] = vproj.astype(bf16)

    # ---- query-row tile, sliced from the already-resident full block --------
    row = pl.multiple_of(qi * TQ, TQ)
    xq = x_ref[pl.ds(row, TQ), :].astype(f32)                                  # (TQ, D)
    xnq = layernorm(xq, alpha1, beta1).astype(bf16)

    # 1/sqrt(dk) already folded into wq / bq on the host.
    q = (jnp.dot(xnq, wq_ref[...], preferred_element_type=f32) + bq_ref[...]).astype(bf16)

    neg = neg_ref[...].astype(f32)                                             # (TQ, S)

    # Each head writes its context into the (TQ, D) bf16 scratch at lane offset
    # h*dk so ONE dense (TQ,D)@(D,D) output projection follows.
    for h in range(heads):
        qh = q[:, h * dk:(h + 1) * dk]                     # (TQ, dk) bf16
        kTh = kT_ref[h * dk:(h + 1) * dk, :]               # (dk, S)  bf16 (no transpose here)
        s = jnp.dot(qh, kTh, preferred_element_type=f32) + neg                # (TQ, S)
        s = s - jnp.max(s, axis=-1, keepdims=True)
        p = jnp.exp(s)
        p = p * pl.reciprocal(jnp.sum(p, axis=-1, keepdims=True), approx=True)
        ctx_ref[:, h * dk:(h + 1) * dk] = jnp.dot(
            p.astype(bf16), v_ref[:, h * dk:(h + 1) * dk],
            preferred_element_type=f32).astype(bf16)

    attn = jnp.dot(ctx_ref[...], wo_ref[...], preferred_element_type=f32) + bo_ref[...]
    x1 = xq + attn                                                             # residual 1

    # ---- sublayer 2: feed-forward on norm(x1), residual add -----------------
    xn2 = layernorm(x1, alpha2, beta2).astype(bf16)
    h1 = jnp.dot(xn2, w1_ref[...], preferred_element_type=f32) + b1_ref[...]
    h1 = jnp.maximum(h1, 0.0).astype(bf16)                                     # ReLU
    ffn = jnp.dot(h1, w2_ref[...], preferred_element_type=f32) + b2_ref[...]

    o_ref[...] = (x1 + ffn).astype(o_ref.dtype)                                # residual 2


def encoder_block(x, mask, params, weights, *, heads, eps=1e-6, seq_tile=None):
    """x: (B, S, D) f32; mask: (S, S) (or (B,S,S), batch-broadcast) with
    nonzero = keep; params: (4,) f32 [alpha1, bias1, alpha2, bias2];
    weights: dict of pre-transposed (in, out) weights and (1, out) biases."""
    B, S, D = x.shape
    d_ff = weights["w1"].shape[1]
    assert D % heads == 0
    dk = D // heads

    if seq_tile is None:
        if S <= 128:
            seq_tile = S
        elif S % 256 == 0:
            seq_tile = 256   # v6e/v7x 2x256^2 MXU; TODO(synk): prefer 128 on v5e
        else:
            seq_tile = 128
    TQ = seq_tile
    assert S % TQ == 0 and (TQ % 16 == 0 or TQ == S)

    # One shared (S, S) mask (src_mask broadcast over batch/heads), converted
    # ONCE on the host to an additive bias (0 keep, -1e9 masked) in bf16.
    mask2d = jnp.asarray(mask, jnp.float32)
    if mask2d.ndim == 3:
        mask2d = mask2d[0]   # batch-shared src_mask, as in the PyTorch module
    assert mask2d.shape == (S, S)
    neg_bias = jnp.where(mask2d == 0, -1.0e9, 0.0).astype(jnp.bfloat16)

    # Weights shipped as bf16 (native MXU dtype); biases stay f32.
    # Fold the 1/sqrt(dk) attention scale into wq / bq.
    scale = 1.0 / math.sqrt(dk)
    bf = lambda w: w.astype(jnp.bfloat16)
    wq = bf(weights["wq"] * scale)
    bq = weights["bq"] * scale
    wk, wv, wo = bf(weights["wk"]), bf(weights["wv"]), bf(weights["wo"])
    w1, w2 = bf(weights["w1"]), bf(weights["w2"])
    bk, bv, bo = weights["bk"], weights["bv"], weights["bo"]
    b1, b2 = weights["b1"], weights["b2"]

    # VMEM budget (conservatively assumes double-buffered weights), clamped to
    # the actual chip capacity (64 MiB on v7x, 128 MiB on v5e/v6e).
    w_bytes = 2 * (2 * (4 * D * D + 2 * D * d_ff) + 4 * (5 * D + d_ff))
    io_bytes = 2 * (4 * S * D + 2 * TQ * S + 4 * TQ * D)
    scratch_bytes = 2 * (2 * S * D + TQ * D)
    inter_bytes = 4 * (4 * S * D + TQ * S + TQ * d_ff + 6 * TQ * D)
    need = int(1.3 * (w_bytes + io_bytes + scratch_bytes + inter_bytes))
    try:
        cap = int(pltpu.get_tpu_info().vmem_capacity_bytes)
    except Exception:
        cap = 64 * 1024 * 1024
    vmem_limit = min(max(need, 16 * 1024 * 1024), int(0.85 * cap))

    kernel = functools.partial(_encoder_block_kernel,
                               heads=heads, eps=eps, seq_tile=TQ)

    def run(weight_mode):
        def const(shape):
            idx = lambda b, qi, _n=len(shape): (0,) * _n
            if weight_mode is None:
                return pl.BlockSpec(shape, idx)
            return pl.BlockSpec(shape, idx, pipeline_mode=weight_mode)

        grid_spec = pltpu.PrefetchScalarGridSpec(
            num_scalar_prefetch=0,
            grid=(B, S // TQ),
            in_specs=[
                pl.BlockSpec(memory_space=pltpu.MemorySpace.SMEM),    # params
                pl.BlockSpec((None, S, D), lambda b, qi: (b, 0, 0)),  # x (full seq; DMAed once per batch)
                pl.BlockSpec((TQ, S), lambda b, qi: (qi, 0)),         # additive mask bias row tile
                const((D, D)), const((1, D)),                         # wq, bq (pre-scaled)
                const((D, D)), const((1, D)),                         # wk, bk
                const((D, D)), const((1, D)),                         # wv, bv
                const((D, D)), const((1, D)),                         # wo, bo
                const((D, d_ff)), const((1, d_ff)),                   # w1, b1
                const((d_ff, D)), const((1, D)),                      # w2, b2
            ],
            out_specs=pl.BlockSpec((None, TQ, D), lambda b, qi: (b, qi, 0)),
            scratch_shapes=[
                pltpu.VMEM((D, S), jnp.bfloat16),    # K^T cache (per batch)
                pltpu.VMEM((S, D), jnp.bfloat16),    # V cache   (per batch)
                pltpu.VMEM((TQ, D), jnp.bfloat16),   # per-head contexts
            ],
        )
        return pl.pallas_call(
            kernel,
            out_shape=jax.ShapeDtypeStruct((B, S, D), x.dtype),
            grid_spec=grid_spec,
            compiler_params=pltpu.CompilerParams(
                dimension_semantics=("parallel", "arbitrary"),
                vmem_limit_bytes=vmem_limit),
        )(params, x, neg_bias,
          wq, bq, wk, bk, wv, bv, wo, bo, w1, b1, w2, b2)

    try:
        # Single-buffer grid-invariant weight/bias blocks (they never change).
        return run(pl.Buffered(1))
    except Exception:
        # TODO(synk): pipeline_mode=pl.Buffered(1) unsupported on this jax
        # build; fall back to default (double-buffered) weight blocks.
        return run(None)


def _init_weights(key, d_model, d_ff):
    ks = jax.random.split(key, 12)

    def lin(kw, kb, fan_in, fan_out):
        # deterministic, roughly torch-Linear-like scale; stored as (in, out)
        bound = 1.0 / math.sqrt(fan_in)
        w = jax.random.uniform(kw, (fan_in, fan_out), jnp.float32, -bound, bound)
        b = jax.random.uniform(kb, (1, fan_out), jnp.float32, -bound, bound)
        return w, b

    wq, bq = lin(ks[0], ks[1], d_model, d_model)
    wk, bk = lin(ks[2], ks[3], d_model, d_model)
    wv, bv = lin(ks[4], ks[5], d_model, d_model)
    wo, bo = lin(ks[6], ks[7], d_model, d_model)
    w1, b1 = lin(ks[8], ks[9], d_model, d_ff)
    w2, b2 = lin(ks[10], ks[11], d_ff, d_model)
    return dict(wq=wq, bq=bq, wk=wk, bk=bk, wv=wv, bv=bv, wo=wo, bo=bo,
                w1=w1, b1=b1, w2=w2, b2=b2)


def _reference(x, mask2d, params, weights, heads, eps=1e-6):
    """Pure-JAX f32 reference matching the PyTorch EncoderBlock (inference)."""
    B, S, D = x.shape
    dk = D // heads
    a1, g1, a2, g2 = (float(params[i]) for i in range(4))

    def ln(v, alpha, beta):
        mean = jnp.mean(v, -1, keepdims=True)
        std = jnp.std(v, -1, keepdims=True, ddof=1)
        return alpha * (v - mean) / (std + eps) + beta

    xn = ln(x, a1, g1)
    q = xn @ weights["wq"] + weights["bq"]
    k = xn @ weights["wk"] + weights["bk"]
    v = xn @ weights["wv"] + weights["bv"]

    def split(t):
        return t.reshape(B, S, heads, dk).transpose(0, 2, 1, 3)

    qh, kh, vh = split(q), split(k), split(v)
    s = jnp.einsum("bhqd,bhkd->bhqk", qh, kh) / math.sqrt(dk)
    s = jnp.where(mask2d[None, None] == 0, -1.0e9, s)
    p = jax.nn.softmax(s, axis=-1)
    ctx = jnp.einsum("bhqk,bhkd->bhqd", p, vh).transpose(0, 2, 1, 3).reshape(B, S, D)
    x1 = x + (ctx @ weights["wo"] + weights["bo"])
    xn2 = ln(x1, a2, g2)
    h1 = jnp.maximum(xn2 @ weights["w1"] + weights["b1"], 0.0)
    return x1 + (h1 @ weights["w2"] + weights["b2"])


if __name__ == "__main__":
    B, S, D, H, DFF = 2, 32, 64, 4, 128
    TQ = 16   # exercise the sequence-tile grid axis (grid = (B, S // TQ) = (2, 2))

    key = jax.random.PRNGKey(0)
    kx, kw = jax.random.split(key)
    x = jax.random.normal(kx, (B, S, D), jnp.float32)

    # causal-style source mask (1 = attend, 0 = masked), shared across batch
    mask = jnp.tril(jnp.ones((S, S), jnp.float32))

    weights = _init_weights(kw, D, DFF)
    # LayerNormalization params: alpha init 1.0, bias init 0.0 (two norms)
    params = jnp.array([1.0, 0.0, 1.0, 0.0], dtype=jnp.float32)

    out = encoder_block(x, mask, params, weights, heads=H, seq_tile=TQ)
    out = jax.block_until_ready(out)
    assert out.shape == (B, S, D) and out.dtype == jnp.float32
    assert bool(jnp.all(jnp.isfinite(out)))

    ref = _reference(x, mask, params, weights, H)
    err = float(jnp.max(jnp.abs(out - ref)))
    assert err < 5e-2, f"max abs err vs f32 reference: {err}"
    print("KERNEL_OK")
</pallas_src>

<mosaic_0001>
module attributes {stable_mosaic.version = 11 : i64} {
  func.func @_encoder_block_kernel(%arg0: i32, %arg1: i32, %arg2: memref<4xf32, #tpu.memory_space<smem>>, %arg3: memref<1x32x64xf32, #tpu.memory_space<vmem>>, %arg4: memref<16x32xbf16, #tpu.memory_space<vmem>>, %arg5: memref<64x64xbf16, #tpu.memory_space<vmem>>, %arg6: memref<1x64xf32, #tpu.memory_space<vmem>>, %arg7: memref<64x64xbf16, #tpu.memory_space<vmem>>, %arg8: memref<1x64xf32, #tpu.memory_space<vmem>>, %arg9: memref<64x64xbf16, #tpu.memory_space<vmem>>, %arg10: memref<1x64xf32, #tpu.memory_space<vmem>>, %arg11: memref<64x64xbf16, #tpu.memory_space<vmem>>, %arg12: memref<1x64xf32, #tpu.memory_space<vmem>>, %arg13: memref<64x128xbf16, #tpu.memory_space<vmem>>, %arg14: memref<1x128xf32, #tpu.memory_space<vmem>>, %arg15: memref<128x64xbf16, #tpu.memory_space<vmem>>, %arg16: memref<1x64xf32, #tpu.memory_space<vmem>>, %arg17: memref<1x16x64xf32, #tpu.memory_space<vmem>>, %arg18: memref<64x32xbf16, #tpu.memory_space<vmem>>, %arg19: memref<32x64xbf16, #tpu.memory_space<vmem>>, %arg20: memref<16x64xbf16, #tpu.memory_space<vmem>>) attributes {dimension_semantics = [#tpu.dimension_semantics<parallel>, #tpu.dimension_semantics<arbitrary>], iteration_bounds = array<i64: 2, 2>, scalar_prefetch = 0 : i64, scratch_operands = 3 : i64, tpu.core_type = #tpu.core_type<tc>, window_params = [{transform_indices = @transform_0, window_bounds = array<i64: 4>}, {transform_indices = @transform_1, window_bounds = array<i64: 1, 32, 64>}, {transform_indices = @transform_2, window_bounds = array<i64: 16, 32>}, {pipeline_mode = #tpu.pipeline_mode<synchronous>, transform_indices = @transform_3, window_bounds = array<i64: 64, 64>}, {pipeline_mode = #tpu.pipeline_mode<synchronous>, transform_indices = @transform_4, window_bounds = array<i64: 1, 64>}, {pipeline_mode = #tpu.pipeline_mode<synchronous>, transform_indices = @transform_5, window_bounds = array<i64: 64, 64>}, {pipeline_mode = #tpu.pipeline_mode<synchronous>, transform_indices = @transform_6, window_bounds = array<i64: 1, 64>}, {pipeline_mode = #tpu.pipeline_mode<synchronous>, transform_indices = @transform_7, window_bounds = array<i64: 64, 64>}, {pipeline_mode = #tpu.pipeline_mode<synchronous>, transform_indices = @transform_8, window_bounds = array<i64: 1, 64>}, {pipeline_mode = #tpu.pipeline_mode<synchronous>, transform_indices = @transform_9, window_bounds = array<i64: 64, 64>}, {pipeline_mode = #tpu.pipeline_mode<synchronous>, transform_indices = @transform_10, window_bounds = array<i64: 1, 64>}, {pipeline_mode = #tpu.pipeline_mode<synchronous>, transform_indices = @transform_11, window_bounds = array<i64: 64, 128>}, {pipeline_mode = #tpu.pipeline_mode<synchronous>, transform_indices = @transform_12, window_bounds = array<i64: 1, 128>}, {pipeline_mode = #tpu.pipeline_mode<synchronous>, transform_indices = @transform_13, window_bounds = array<i64: 128, 64>}, {pipeline_mode = #tpu.pipeline_mode<synchronous>, transform_indices = @transform_14, window_bounds = array<i64: 1, 64>}, {transform_indices = @transform_15, window_bounds = array<i64: 1, 16, 64>}]} {
    %c0 = arith.constant 0 : index
    %0 = memref.load %arg2[%c0] : memref<4xf32, #tpu.memory_space<smem>>
    %c1 = arith.constant 1 : index
    %1 = memref.load %arg2[%c1] : memref<4xf32, #tpu.memory_space<smem>>
    %c2 = arith.constant 2 : index
    %2 = memref.load %arg2[%c2] : memref<4xf32, #tpu.memory_space<smem>>
    %c3 = arith.constant 3 : index
    %3 = memref.load %arg2[%c3] : memref<4xf32, #tpu.memory_space<smem>>
    %c0_i32 = arith.constant 0 : i32
    %4 = arith.cmpi eq, %arg1, %c0_i32 : i32
    %5 = arith.extui %4 : i1 to i32
    %c0_i32_0 = arith.constant 0 : i32
    %6 = arith.cmpi ne, %5, %c0_i32_0 : i32
    scf.if %6 {
      %c0_79 = arith.constant 0 : index
      %c0_80 = arith.constant 0 : index
      %c0_81 = arith.constant 0 : index
      %166 = vector.load %arg3[%c0_79, %c0_80, %c0_81] : memref<1x32x64xf32, #tpu.memory_space<vmem>>, vector<1x32x64xf32>
      %167 = vector.shape_cast %166 : vector<1x32x64xf32> to vector<32x64xf32>
      %cst_82 = arith.constant dense<0.000000e+00> : vector<32xf32>
      %168 = vector.multi_reduction <add>, %167, %cst_82 [1] : vector<32x64xf32> to vector<32xf32>
      %169 = vector.shape_cast %168 : vector<32xf32> to vector<32x1xf32>
      %cst_83 = arith.constant 6.400000e+01 : f32
      %170 = vector.broadcast %cst_83 : f32 to vector<32x1xf32>
      %171 = arith.divf %169, %170 : vector<32x1xf32>
      %172 = vector.broadcast %171 : vector<32x1xf32> to vector<32x64xf32>
      %173 = arith.subf %167, %172 : vector<32x64xf32>
      %174 = arith.mulf %173, %173 : vector<32x64xf32>
      %cst_84 = arith.constant dense<0.000000e+00> : vector<32xf32>
      %175 = vector.multi_reduction <add>, %174, %cst_84 [1] : vector<32x64xf32> to vector<32xf32>
      %176 = vector.shape_cast %175 : vector<32xf32> to vector<32x1xf32>
      %cst_85 = arith.constant 0.0158730168 : f32
      %177 = vector.broadcast %cst_85 : f32 to vector<32x1xf32>
      %178 = arith.mulf %176, %177 : vector<32x1xf32>
      %179 = math.sqrt %178 : vector<32x1xf32>
      %cst_86 = arith.constant 9.99999997E-7 : f32
      %180 = vector.broadcast %cst_86 : f32 to vector<32x1xf32>
      %181 = arith.addf %179, %180 : vector<32x1xf32>
      %cst_87 = arith.constant 1.000000e+00 : f32
      %182 = vector.broadcast %cst_87 : f32 to vector<32x1xf32>
      %183 = arith.divf %182, %181 : vector<32x1xf32>
      %184 = vector.broadcast %0 : f32 to vector<32x64xf32>
      %185 = arith.mulf %184, %173 : vector<32x64xf32>
      %186 = vector.broadcast %183 : vector<32x1xf32> to vector<32x64xf32>
      %187 = arith.mulf %185, %186 : vector<32x64xf32>
      %188 = vector.broadcast %1 : f32 to vector<32x64xf32>
      %189 = arith.addf %187, %188 : vector<32x64xf32>
      %190 = arith.truncf %189 : vector<32x64xf32> to vector<32x64xbf16>
      %c0_88 = arith.constant 0 : index
      %c0_89 = arith.constant 0 : index
      %191 = vector.load %arg7[%c0_88, %c0_89] : memref<64x64xbf16, #tpu.memory_space<vmem>>, vector<64x64xbf16>
      %cst_90 = arith.constant dense<0.000000e+00> : vector<32x64xf32>
      %192 = tpu.matmul %190, %191, %cst_90 {dimension_numbers = #tpu.dot_dimension_numbers<[1], [0], [0], [1], [0, 0, 1, 1], [], []>} : vector<32x64xbf16>, vector<64x64xbf16>, vector<32x64xf32> -> vector<32x64xf32>
      %c0_91 = arith.constant 0 : index
      %c0_92 = arith.constant 0 : index
      %193 = vector.load %arg8[%c0_91, %c0_92] : memref<1x64xf32, #tpu.memory_space<vmem>>, vector<1x64xf32>
      %194 = vector.broadcast %193 : vector<1x64xf32> to vector<32x64xf32>
      %195 = arith.addf %192, %194 : vector<32x64xf32>
      %c0_93 = arith.constant 0 : index
      %c0_94 = arith.constant 0 : index
      %196 = vector.load %arg9[%c0_93, %c0_94] : memref<64x64xbf16, #tpu.memory_space<vmem>>, vector<64x64xbf16>
      %cst_95 = arith.constant dense<0.000000e+00> : vector<32x64xf32>
      %197 = tpu.matmul %190, %196, %cst_95 {dimension_numbers = #tpu.dot_dimension_numbers<[1], [0], [0], [1], [0, 0, 1, 1], [], []>} : vector<32x64xbf16>, vector<64x64xbf16>, vector<32x64xf32> -> vector<32x64xf32>
      %c0_96 = arith.constant 0 : index
      %c0_97 = arith.constant 0 : index
      %198 = vector.load %arg10[%c0_96, %c0_97] : memref<1x64xf32, #tpu.memory_space<vmem>>, vector<1x64xf32>
      %199 = vector.broadcast %198 : vector<1x64xf32> to vector<32x64xf32>
      %200 = arith.addf %197, %199 : vector<32x64xf32>
      %201 = tpu.transpose %195, [1, 0] : vector<32x64xf32> -> vector<64x32xf32>
      %202 = arith.truncf %201 : vector<64x32xf32> to vector<64x32xbf16>
      %c0_98 = arith.constant 0 : index
      %c0_99 = arith.constant 0 : index
      %203 = vector.load %arg18[%c0_98, %c0_99] : memref<64x32xbf16, #tpu.memory_space<vmem>>, vector<64x32xbf16>
      tpu.vector_store %arg18[%c0_98, %c0_99], %202 {strides = array<i32>} : memref<64x32xbf16, #tpu.memory_space<vmem>>, vector<64x32xbf16>,
      %204 = arith.truncf %200 : vector<32x64xf32> to vector<32x64xbf16>
      %c0_100 = arith.constant 0 : index
      %c0_101 = arith.constant 0 : index
      %205 = vector.load %arg19[%c0_100, %c0_101] : memref<32x64xbf16, #tpu.memory_space<vmem>>, vector<32x64xbf16>
      tpu.vector_store %arg19[%c0_100, %c0_101], %204 {strides = array<i32>} : memref<32x64xbf16, #tpu.memory_space<vmem>>, vector<32x64xbf16>,
    } else {
    }
    %c16_i32 = arith.constant 16 : i32
    %7 = arith.muli %arg1, %c16_i32 : i32
    %8 = tpu.assume_multiple %7, 16 : i32
    %c0_1 = arith.constant 0 : index
    %9 = arith.index_cast %8 : i32 to index
    %c0_2 = arith.constant 0 : index
    %10 = vector.load %arg3[%c0_1, %9, %c0_2] : memref<1x32x64xf32, #tpu.memory_space<vmem>>, vector<1x16x64xf32>
    %11 = vector.shape_cast %10 : vector<1x16x64xf32> to vector<16x64xf32>
    %cst = arith.constant dense<0.000000e+00> : vector<16xf32>
    %12 = vector.multi_reduction <add>, %11, %cst [1] : vector<16x64xf32> to vector<16xf32>
    %13 = vector.shape_cast %12 : vector<16xf32> to vector<16x1xf32>
    %cst_3 = arith.constant 6.400000e+01 : f32
    %14 = vector.broadcast %cst_3 : f32 to vector<16x1xf32>
    %15 = arith.divf %13, %14 : vector<16x1xf32>
    %16 = vector.broadcast %15 : vector<16x1xf32> to vector<16x64xf32>
    %17 = arith.subf %11, %16 : vector<16x64xf32>
    %18 = arith.mulf %17, %17 : vector<16x64xf32>
    %cst_4 = arith.constant dense<0.000000e+00> : vector<16xf32>
    %19 = vector.multi_reduction <add>, %18, %cst_4 [1] : vector<16x64xf32> to vector<16xf32>
    %20 = vector.shape_cast %19 : vector<16xf32> to vector<16x1xf32>
    %cst_5 = arith.constant 0.0158730168 : f32
    %21 = vector.broadcast %cst_5 : f32 to vector<16x1xf32>
    %22 = arith.mulf %20, %21 : vector<16x1xf32>
    %23 = math.sqrt %22 : vector<16x1xf32>
    %cst_6 = arith.constant 9.99999997E-7 : f32
    %24 = vector.broadcast %cst_6 : f32 to vector<16x1xf32>
    %25 = arith.addf %23, %24 : vector<16x1xf32>
    %cst_7 = arith.constant 1.000000e+00 : f32
    %26 = vector.broadcast %cst_7 : f32 to vector<16x1xf32>
    %27 = arith.divf %26, %25 : vector<16x1xf32>
    %28 = vector.broadcast %0 : f32 to vector<16x64xf32>
    %29 = arith.mulf %28, %17 : vector<16x64xf32>
    %30 = vector.broadcast %27 : vector<16x1xf32> to vector<16x64xf32>
    %31 = arith.mulf %29, %30 : vector<16x64xf32>
    %32 = vector.broadcast %1 : f32 to vector<16x64xf32>
    %33 = arith.addf %31, %32 : vector<16x64xf32>
    %34 = arith.truncf %33 : vector<16x64xf32> to vector<16x64xbf16>
    %c0_8 = arith.constant 0 : index
    %c0_9 = arith.constant 0 : index
    %35 = vector.load %arg5[%c0_8, %c0_9] : memref<64x64xbf16, #tpu.memory_space<vmem>>, vector<64x64xbf16>
    %cst_10 = arith.constant dense<0.000000e+00> : vector<16x64xf32>
    %36 = tpu.matmul %34, %35, %cst_10 {dimension_numbers = #tpu.dot_dimension_numbers<[1], [0], [0], [1], [0, 0, 1, 1], [], []>} : vector<16x64xbf16>, vector<64x64xbf16>, vector<16x64xf32> -> vector<16x64xf32>
    %c0_11 = arith.constant 0 : index
    %c0_12 = arith.constant 0 : index
    %37 = vector.load %arg6[%c0_11, %c0_12] : memref<1x64xf32, #tpu.memory_space<vmem>>, vector<1x64xf32>
    %38 = vector.broadcast %37 : vector<1x64xf32> to vector<16x64xf32>
    %39 = arith.addf %36, %38 : vector<16x64xf32>
    %40 = arith.truncf %39 : vector<16x64xf32> to vector<16x64xbf16>
    %c0_13 = arith.constant 0 : index
    %c0_14 = arith.constant 0 : index
    %41 = vector.load %arg4[%c0_13, %c0_14] : memref<16x32xbf16, #tpu.memory_space<vmem>>, vector<16x32xbf16>
    %42 = arith.extf %41 : vector<16x32xbf16> to vector<16x32xf32>
    %43 = vector.extract_strided_slice %40 {offsets = [0, 0], sizes = [16, 16], strides = [1, 1]} : vector<16x64xbf16> to vector<16x16xbf16>
    %c0_15 = arith.constant 0 : index
    %c0_16 = arith.constant 0 : index
    %44 = vector.load %arg18[%c0_15, %c0_16] : memref<64x32xbf16, #tpu.memory_space<vmem>>, vector<16x32xbf16>
    %cst_17 = arith.constant dense<0.000000e+00> : vector<16x32xf32>
    %45 = tpu.matmul %43, %44, %cst_17 {dimension_numbers = #tpu.dot_dimension_numbers<[1], [0], [0], [1], [0, 0, 1, 1], [], []>} : vector<16x16xbf16>, vector<16x32xbf16>, vector<16x32xf32> -> vector<16x32xf32>
    %46 = arith.addf %45, %42 : vector<16x32xf32>
    %cst_18 = arith.constant dense<0xFF800000> : vector<16xf32>
    %47 = vector.multi_reduction <maximumf>, %46, %cst_18 [1] : vector<16x32xf32> to vector<16xf32>
    %48 = vector.shape_cast %47 : vector<16xf32> to vector<16x1xf32>
    %49 = vector.broadcast %48 : vector<16x1xf32> to vector<16x32xf32>
    %50 = arith.subf %46, %49 : vector<16x32xf32>
    %51 = math.exp %50 : vector<16x32xf32>
    %cst_19 = arith.constant dense<0.000000e+00> : vector<16xf32>
    %52 = vector.multi_reduction <add>, %51, %cst_19 [1] : vector<16x32xf32> to vector<16xf32>
    %53 = vector.shape_cast %52 : vector<16xf32> to vector<16x1xf32>
    %54 = tpu.reciprocal %53 {approx = true} : vector<16x1xf32> -> vector<16x1xf32>
    %55 = vector.broadcast %54 : vector<16x1xf32> to vector<16x32xf32>
    %56 = arith.mulf %51, %55 : vector<16x32xf32>
    %57 = arith.truncf %56 : vector<16x32xf32> to vector<16x32xbf16>
    %c0_20 = arith.constant 0 : index
    %c0_21 = arith.constant 0 : index
    %58 = vector.load %arg19[%c0_20, %c0_21] : memref<32x64xbf16, #tpu.memory_space<vmem>>, vector<32x16xbf16>
    %cst_22 = arith.constant dense<0.000000e+00> : vector<16x16xf32>
    %59 = tpu.matmul %57, %58, %cst_22 {dimension_numbers = #tpu.dot_dimension_numbers<[1], [0], [0], [1], [0, 0, 1, 1], [], []>} : vector<16x32xbf16>, vector<32x16xbf16>, vector<16x16xf32> -> vector<16x16xf32>
    %60 = arith.truncf %59 : vector<16x16xf32> to vector<16x16xbf16>
    %c0_23 = arith.constant 0 : index
    %c0_24 = arith.constant 0 : index
    %61 = vector.load %arg20[%c0_23, %c0_24] : memref<16x64xbf16, #tpu.memory_space<vmem>>, vector<16x16xbf16>
    tpu.vector_store %arg20[%c0_23, %c0_24], %60 {strides = array<i32>} : memref<16x64xbf16, #tpu.memory_space<vmem>>, vector<16x16xbf16>,
    %62 = vector.extract_strided_slice %40 {offsets = [0, 16], sizes = [16, 16], strides = [1, 1]} : vector<16x64xbf16> to vector<16x16xbf16>
    %c16 = arith.constant 16 : index
    %c0_25 = arith.constant 0 : index
    %63 = vector.load %arg18[%c16, %c0_25] : memref<64x32xbf16, #tpu.memory_space<vmem>>, vector<16x32xbf16>
    %cst_26 = arith.constant dense<0.000000e+00> : vector<16x32xf32>
    %64 = tpu.matmul %62, %63, %cst_26 {dimension_numbers = #tpu.dot_dimension_numbers<[1], [0], [0], [1], [0, 0, 1, 1], [], []>} : vector<16x16xbf16>, vector<16x32xbf16>, vector<16x32xf32> -> vector<16x32xf32>
    %65 = arith.addf %64, %42 : vector<16x32xf32>
    %cst_27 = arith.constant dense<0xFF800000> : vector<16xf32>
    %66 = vector.multi_reduction <maximumf>, %65, %cst_27 [1] : vector<16x32xf32> to vector<16xf32>
    %67 = vector.shape_cast %66 : vector<16xf32> to vector<16x1xf32>
    %68 = vector.broadcast %67 : vector<16x1xf32> to vector<16x32xf32>
    %69 = arith.subf %65, %68 : vector<16x32xf32>
    %70 = math.exp %69 : vector<16x32xf32>
    %cst_28 = arith.constant dense<0.000000e+00> : vector<16xf32>
    %71 = vector.multi_reduction <add>, %70, %cst_28 [1] : vector<16x32xf32> to vector<16xf32>
    %72 = vector.shape_cast %71 : vector<16xf32> to vector<16x1xf32>
    %73 = tpu.reciprocal %72 {approx = true} : vector<16x1xf32> -> vector<16x1xf32>
    %74 = vector.broadcast %73 : vector<16x1xf32> to vector<16x32xf32>
    %75 = arith.mulf %70, %74 : vector<16x32xf32>
    %76 = arith.truncf %75 : vector<16x32xf32> to vector<16x32xbf16>
    %c0_29 = arith.constant 0 : index
    %c16_30 = arith.constant 16 : index
    %77 = vector.load %arg19[%c0_29, %c16_30] : memref<32x64xbf16, #tpu.memory_space<vmem>>, vector<32x16xbf16>
    %cst_31 = arith.constant dense<0.000000e+00> : vector<16x16xf32>
    %78 = tpu.matmul %76, %77, %cst_31 {dimension_numbers = #tpu.dot_dimension_numbers<[1], [0], [0], [1], [0, 0, 1, 1], [], []>} : vector<16x32xbf16>, vector<32x16xbf16>, vector<16x16xf32> -> vector<16x16xf32>
    %79 = arith.truncf %78 : vector<16x16xf32> to vector<16x16xbf16>
    %c0_32 = arith.constant 0 : index
    %c16_33 = arith.constant 16 : index
    %80 = vector.load %arg20[%c0_32, %c16_33] : memref<16x64xbf16, #tpu.memory_space<vmem>>, vector<16x16xbf16>
    tpu.vector_store %arg20[%c0_32, %c16_33], %79 {strides = array<i32>} : memref<16x64xbf16, #tpu.memory_space<vmem>>, vector<16x16xbf16>,
    %81 = vector.extract_strided_slice %40 {offsets = [0, 32], sizes = [16, 16], strides = [1, 1]} : vector<16x64xbf16> to vector<16x16xbf16>
    %c32 = arith.constant 32 : index
    %c0_34 = arith.constant 0 : index
    %82 = vector.load %arg18[%c32, %c0_34] : memref<64x32xbf16, #tpu.memory_space<vmem>>, vector<16x32xbf16>
    %cst_35 = arith.constant dense<0.000000e+00> : vector<16x32xf32>
    %83 = tpu.matmul %81, %82, %cst_35 {dimension_numbers = #tpu.dot_dimension_numbers<[1], [0], [0], [1], [0, 0, 1, 1], [], []>} : vector<16x16xbf16>, vector<16x32xbf16>, vector<16x32xf32> -> vector<16x32xf32>
    %84 = arith.addf %83, %42 : vector<16x32xf32>
    %cst_36 = arith.constant dense<0xFF800000> : vector<16xf32>
    %85 = vector.multi_reduction <maximumf>, %84, %cst_36 [1] : vector<16x32xf32> to vector<16xf32>
    %86 = vector.shape_cast %85 : vector<16xf32> to vector<16x1xf32>
    %87 = vector.broadcast %86 : vector<16x1xf32> to vector<16x32xf32>
    %88 = arith.subf %84, %87 : vector<16x32xf32>
    %89 = math.exp %88 : vector<16x32xf32>
    %cst_37 = arith.constant dense<0.000000e+00> : vector<16xf32>
    %90 = vector.multi_reduction <add>, %89, %cst_37 [1] : vector<16x32xf32> to vector<16xf32>
    %91 = vector.shape_cast %90 : vector<16xf32> to vector<16x1xf32>
    %92 = tpu.reciprocal %91 {approx = true} : vector<16x1xf32> -> vector<16x1xf32>
    %93 = vector.broadcast %92 : vector<16x1xf32> to vector<16x32xf32>
    %94 = arith.mulf %89, %93 : vector<16x32xf32>
    %95 = arith.truncf %94 : vector<16x32xf32> to vector<16x32xbf16>
    %c0_38 = arith.constant 0 : index
    %c32_39 = arith.constant 32 : index
    %96 = vector.load %arg19[%c0_38, %c32_39] : memref<32x64xbf16, #tpu.memory_space<vmem>>, vector<32x16xbf16>
    %cst_40 = arith.constant dense<0.000000e+00> : vector<16x16xf32>
    %97 = tpu.matmul %95, %96, %cst_40 {dimension_numbers = #tpu.dot_dimension_numbers<[1], [0], [0], [1], [0, 0, 1, 1], [], []>} : vector<16x32xbf16>, vector<32x16xbf16>, vector<16x16xf32> -> vector<16x16xf32>
    %98 = arith.truncf %97 : vector<16x16xf32> to vector<16x16xbf16>
    %c0_41 = arith.constant 0 : index
    %c32_42 = arith.constant 32 : index
    %99 = vector.load %arg20[%c0_41, %c32_42] : memref<16x64xbf16, #tpu.memory_space<vmem>>, vector<16x16xbf16>
    tpu.vector_store %arg20[%c0_41, %c32_42], %98 {strides = array<i32>} : memref<16x64xbf16, #tpu.memory_space<vmem>>, vector<16x16xbf16>,
    %100 = vector.extract_strided_slice %40 {offsets = [0, 48], sizes = [16, 16], strides = [1, 1]} : vector<16x64xbf16> to vector<16x16xbf16>
    %c48 = arith.constant 48 : index
    %c0_43 = arith.constant 0 : index
    %101 = vector.load %arg18[%c48, %c0_43] : memref<64x32xbf16, #tpu.memory_space<vmem>>, vector<16x32xbf16>
    %cst_44 = arith.constant dense<0.000000e+00> : vector<16x32xf32>
    %102 = tpu.matmul %100, %101, %cst_44 {dimension_numbers = #tpu.dot_dimension_numbers<[1], [0], [0], [1], [0, 0, 1, 1], [], []>} : vector<16x16xbf16>, vector<16x32xbf16>, vector<16x32xf32> -> vector<16x32xf32>
    %103 = arith.addf %102, %42 : vector<16x32xf32>
    %cst_45 = arith.constant dense<0xFF800000> : vector<16xf32>
    %104 = vector.multi_reduction <maximumf>, %103, %cst_45 [1] : vector<16x32xf32> to vector<16xf32>
    %105 = vector.shape_cast %104 : vector<16xf32> to vector<16x1xf32>
    %106 = vector.broadcast %105 : vector<16x1xf32> to vector<16x32xf32>
    %107 = arith.subf %103, %106 : vector<16x32xf32>
    %108 = math.exp %107 : vector<16x32xf32>
    %cst_46 = arith.constant dense<0.000000e+00> : vector<16xf32>
    %109 = vector.multi_reduction <add>, %108, %cst_46 [1] : vector<16x32xf32> to vector<16xf32>
    %110 = vector.shape_cast %109 : vector<16xf32> to vector<16x1xf32>
    %111 = tpu.reciprocal %110 {approx = true} : vector<16x1xf32> -> vector<16x1xf32>
    %112 = vector.broadcast %111 : vector<16x1xf32> to vector<16x32xf32>
    %113 = arith.mulf %108, %112 : vector<16x32xf32>
    %114 = arith.truncf %113 : vector<16x32xf32> to vector<16x32xbf16>
    %c0_47 = arith.constant 0 : index
    %c48_48 = arith.constant 48 : index
    %115 = vector.load %arg19[%c0_47, %c48_48] : memref<32x64xbf16, #tpu.memory_space<vmem>>, vector<32x16xbf16>
    %cst_49 = arith.constant dense<0.000000e+00> : vector<16x16xf32>
    %116 = tpu.matmul %114, %115, %cst_49 {dimension_numbers = #tpu.dot_dimension_numbers<[1], [0], [0], [1], [0, 0, 1, 1], [], []>} : vector<16x32xbf16>, vector<32x16xbf16>, vector<16x16xf32> -> vector<16x16xf32>
    %117 = arith.truncf %116 : vector<16x16xf32> to vector<16x16xbf16>
    %c0_50 = arith.constant 0 : index
    %c48_51 = arith.constant 48 : index
    %118 = vector.load %arg20[%c0_50, %c48_51] : memref<16x64xbf16, #tpu.memory_space<vmem>>, vector<16x16xbf16>
    tpu.vector_store %arg20[%c0_50, %c48_51], %117 {strides = array<i32>} : memref<16x64xbf16, #tpu.memory_space<vmem>>, vector<16x16xbf16>,
    %c0_52 = arith.constant 0 : index
    %c0_53 = arith.constant 0 : index
    %119 = vector.load %arg20[%c0_52, %c0_53] : memref<16x64xbf16, #tpu.memory_space<vmem>>, vector<16x64xbf16>
    %c0_54 = arith.constant 0 : index
    %c0_55 = arith.constant 0 : index
    %120 = vector.load %arg11[%c0_54, %c0_55] : memref<64x64xbf16, #tpu.memory_space<vmem>>, vector<64x64xbf16>
    %cst_56 = arith.constant dense<0.000000e+00> : vector<16x64xf32>
    %121 = tpu.matmul %119, %120, %cst_56 {dimension_numbers = #tpu.dot_dimension_numbers<[1], [0], [0], [1], [0, 0, 1, 1], [], []>} : vector<16x64xbf16>, vector<64x64xbf16>, vector<16x64xf32> -> vector<16x64xf32>
    %c0_57 = arith.constant 0 : index
    %c0_58 = arith.constant 0 : index
    %122 = vector.load %arg12[%c0_57, %c0_58] : memref<1x64xf32, #tpu.memory_space<vmem>>, vector<1x64xf32>
    %123 = vector.broadcast %122 : vector<1x64xf32> to vector<16x64xf32>
    %124 = arith.addf %121, %123 : vector<16x64xf32>
    %125 = arith.addf %11, %124 : vector<16x64xf32>
    %cst_59 = arith.constant dense<0.000000e+00> : vector<16xf32>
    %126 = vector.multi_reduction <add>, %125, %cst_59 [1] : vector<16x64xf32> to vector<16xf32>
    %127 = vector.shape_cast %126 : vector<16xf32> to vector<16x1xf32>
    %cst_60 = arith.constant 6.400000e+01 : f32
    %128 = vector.broadcast %cst_60 : f32 to vector<16x1xf32>
    %129 = arith.divf %127, %128 : vector<16x1xf32>
    %130 = vector.broadcast %129 : vector<16x1xf32> to vector<16x64xf32>
    %131 = arith.subf %125, %130 : vector<16x64xf32>
    %132 = arith.mulf %131, %131 : vector<16x64xf32>
    %cst_61 = arith.constant dense<0.000000e+00> : vector<16xf32>
    %133 = vector.multi_reduction <add>, %132, %cst_61 [1] : vector<16x64xf32> to vector<16xf32>
    %134 = vector.shape_cast %133 : vector<16xf32> to vector<16x1xf32>
    %cst_62 = arith.constant 0.0158730168 : f32
    %135 = vector.broadcast %cst_62 : f32 to vector<16x1xf32>
    %136 = arith.mulf %134, %135 : vector<16x1xf32>
    %137 = math.sqrt %136 : vector<16x1xf32>
    %cst_63 = arith.constant 9.99999997E-7 : f32
    %138 = vector.broadcast %cst_63 : f32 to vector<16x1xf32>
    %139 = arith.addf %137, %138 : vector<16x1xf32>
    %cst_64 = arith.constant 1.000000e+00 : f32
    %140 = vector.broadcast %cst_64 : f32 to vector<16x1xf32>
    %141 = arith.divf %140, %139 : vector<16x1xf32>
    %142 = vector.broadcast %2 : f32 to vector<16x64xf32>
    %143 = arith.mulf %142, %131 : vector<16x64xf32>
    %144 = vector.broadcast %141 : vector<16x1xf32> to vector<16x64xf32>
    %145 = arith.mulf %143, %144 : vector<16x64xf32>
    %146 = vector.broadcast %3 : f32 to vector<16x64xf32>
    %147 = arith.addf %145, %146 : vector<16x64xf32>
    %148 = arith.truncf %147 : vector<16x64xf32> to vector<16x64xbf16>
    %c0_65 = arith.constant 0 : index
    %c0_66 = arith.constant 0 : index
    %149 = vector.load %arg13[%c0_65, %c0_66] : memref<64x128xbf16, #tpu.memory_space<vmem>>, vector<64x128xbf16>
    %cst_67 = arith.constant dense<0.000000e+00> : vector<16x128xf32>
    %150 = tpu.matmul %148, %149, %cst_67 {dimension_numbers = #tpu.dot_dimension_numbers<[1], [0], [0], [1], [0, 0, 1, 1], [], []>} : vector<16x64xbf16>, vector<64x128xbf16>, vector<16x128xf32> -> vector<16x128xf32>
    %c0_68 = arith.constant 0 : index
    %c0_69 = arith.constant 0 : index
    %151 = vector.load %arg14[%c0_68, %c0_69] : memref<1x128xf32, #tpu.memory_space<vmem>>, vector<1x128xf32>
    %152 = vector.broadcast %151 : vector<1x128xf32> to vector<16x128xf32>
    %153 = arith.addf %150, %152 : vector<16x128xf32>
    %cst_70 = arith.constant 0.000000e+00 : f32
    %154 = vector.broadcast %cst_70 : f32 to vector<16x128xf32>
    %155 = arith.maximumf %153, %154 : vector<16x128xf32>
    %156 = arith.truncf %155 : vector<16x128xf32> to vector<16x128xbf16>
    %c0_71 = arith.constant 0 : index
    %c0_72 = arith.constant 0 : index
    %157 = vector.load %arg15[%c0_71, %c0_72] : memref<128x64xbf16, #tpu.memory_space<vmem>>, vector<128x64xbf16>
    %cst_73 = arith.constant dense<0.000000e+00> : vector<16x64xf32>
    %158 = tpu.matmul %156, %157, %cst_73 {dimension_numbers = #tpu.dot_dimension_numbers<[1], [0], [0], [1], [0, 0, 1, 1], [], []>} : vector<16x128xbf16>, vector<128x64xbf16>, vector<16x64xf32> -> vector<16x64xf32>
    %c0_74 = arith.constant 0 : index
    %c0_75 = arith.constant 0 : index
    %159 = vector.load %arg16[%c0_74, %c0_75] : memref<1x64xf32, #tpu.memory_space<vmem>>, vector<1x64xf32>
    %160 = vector.broadcast %159 : vector<1x64xf32> to vector<16x64xf32>
    %161 = arith.addf %158, %160 : vector<16x64xf32>
    %162 = arith.addf %125, %161 : vector<16x64xf32>
    %c0_76 = arith.constant 0 : index
    %c0_77 = arith.constant 0 : index
    %c0_78 = arith.constant 0 : index
    %163 = vector.load %arg17[%c0_76, %c0_77, %c0_78] : memref<1x16x64xf32, #tpu.memory_space<vmem>>, vector<1x16x64xf32>
    %164 = vector.shape_cast %163 : vector<1x16x64xf32> to vector<16x64xf32>
    %165 = vector.shape_cast %162 : vector<16x64xf32> to vector<1x16x64xf32>
    tpu.vector_store %arg17[%c0_76, %c0_77, %c0_78], %165 {strides = array<i32>} : memref<1x16x64xf32, #tpu.memory_space<vmem>>, vector<1x16x64xf32>,
    return
  }
  func.func @transform_0(%arg0: i32, %arg1: i32) -> i32 {
    %c0_i32 = arith.constant 0 : i32
    %c0_i32_0 = arith.constant 0 : i32
    return %c0_i32 : i32
  }
  func.func @transform_1(%arg0: i32, %arg1: i32) -> (i32, i32, i32) {
    %c0_i32 = arith.constant 0 : i32
    %c0_i32_0 = arith.constant 0 : i32
    %c0_i32_1 = arith.constant 0 : i32
    return %arg0, %c0_i32, %c0_i32_0 : i32, i32, i32
  }
  func.func @transform_2(%arg0: i32, %arg1: i32) -> (i32, i32) {
    %c0_i32 = arith.constant 0 : i32
    %c0_i32_0 = arith.constant 0 : i32
    return %arg1, %c0_i32 : i32, i32
  }
  func.func @transform_3(%arg0: i32, %arg1: i32) -> (i32, i32) {
    %c0_i32 = arith.constant 0 : i32
    %c0_i32_0 = arith.constant 0 : i32
    %c0_i32_1 = arith.constant 0 : i32
    return %c0_i32, %c0_i32_0 : i32, i32
  }
  func.func @transform_4(%arg0: i32, %arg1: i32) -> (i32, i32) {
    %c0_i32 = arith.constant 0 : i32
    %c0_i32_0 = arith.constant 0 : i32
    %c0_i32_1 = arith.constant 0 : i32
    return %c0_i32, %c0_i32_0 : i32, i32
  }
  func.func @transform_5(%arg0: i32, %arg1: i32) -> (i32, i32) {
    %c0_i32 = arith.constant 0 : i32
    %c0_i32_0 = arith.constant 0 : i32
    %c0_i32_1 = arith.constant 0 : i32
    return %c0_i32, %c0_i32_0 : i32, i32
  }
  func.func @transform_6(%arg0: i32, %arg1: i32) -> (i32, i32) {
    %c0_i32 = arith.constant 0 : i32
    %c0_i32_0 = arith.constant 0 : i32
    %c0_i32_1 = arith.constant 0 : i32
    return %c0_i32, %c0_i32_0 : i32, i32
  }
  func.func @transform_7(%arg0: i32, %arg1: i32) -> (i32, i32) {
    %c0_i32 = arith.constant 0 : i32
    %c0_i32_0 = arith.constant 0 : i32
    %c0_i32_1 = arith.constant 0 : i32
    return %c0_i32, %c0_i32_0 : i32, i32
  }
  func.func @transform_8(%arg0: i32, %arg1: i32) -> (i32, i32) {
    %c0_i32 = arith.constant 0 : i32
    %c0_i32_0 = arith.constant 0 : i32
    %c0_i32_1 = arith.constant 0 : i32
    return %c0_i32, %c0_i32_0 : i32, i32
  }
  func.func @transform_9(%arg0: i32, %arg1: i32) -> (i32, i32) {
    %c0_i32 = arith.constant 0 : i32
    %c0_i32_0 = arith.constant 0 : i32
    %c0_i32_1 = arith.constant 0 : i32
    return %c0_i32, %c0_i32_0 : i32, i32
  }
  func.func @transform_10(%arg0: i32, %arg1: i32) -> (i32, i32) {
    %c0_i32 = arith.constant 0 : i32
    %c0_i32_0 = arith.constant 0 : i32
    %c0_i32_1 = arith.constant 0 : i32
    return %c0_i32, %c0_i32_0 : i32, i32
  }
  func.func @transform_11(%arg0: i32, %arg1: i32) -> (i32, i32) {
    %c0_i32 = arith.constant 0 : i32
    %c0_i32_0 = arith.constant 0 : i32
    %c0_i32_1 = arith.constant 0 : i32
    return %c0_i32, %c0_i32_0 : i32, i32
  }
  func.func @transform_12(%arg0: i32, %arg1: i32) -> (i32, i32) {
    %c0_i32 = arith.constant 0 : i32
    %c0_i32_0 = arith.constant 0 : i32
    %c0_i32_1 = arith.constant 0 : i32
    return %c0_i32, %c0_i32_0 : i32, i32
  }
  func.func @transform_13(%arg0: i32, %arg1: i32) -> (i32, i32) {
    %c0_i32 = arith.constant 0 : i32
    %c0_i32_0 = arith.constant 0 : i32
    %c0_i32_1 = arith.constant 0 : i32
    return %c0_i32, %c0_i32_0 : i32, i32
  }
  func.func @transform_14(%arg0: i32, %arg1: i32) -> (i32, i32) {
    %c0_i32 = arith.constant 0 : i32
    %c0_i32_0 = arith.constant 0 : i32
    %c0_i32_1 = arith.constant 0 : i32
    return %c0_i32, %c0_i32_0 : i32, i32
  }
  func.func @transform_15(%arg0: i32, %arg1: i32) -> (i32, i32, i32) {
    %c0_i32 = arith.constant 0 : i32
    %c0_i32_0 = arith.constant 0 : i32
    return %arg0, %arg1, %c0_i32 : i32, i32, i32
  }
}

module attributes {stable_mosaic.version = 11 : i64} {
  func.func @_encoder_block_kernel(%arg0: i32, %arg1: i32, %arg2: memref<4xf32, #tpu.memory_space<smem>>, %arg3: memref<1x32x64xf32, #tpu.memory_space<vmem>>, %arg4: memref<16x32xbf16, #tpu.memory_space<vmem>>, %arg5: memref<64x64xbf16, #tpu.memory_space<vmem>>, %arg6: memref<1x64xf32, #tpu.memory_space<vmem>>, %arg7: memref<64x64xbf16, #tpu.memory_space<vmem>>, %arg8: memref<1x64xf32, #tpu.memory_space<vmem>>, %arg9: memref<64x64xbf16, #tpu.memory_space<vmem>>, %arg10: memref<1x64xf32, #tpu.memory_space<vmem>>, %arg11: memref<64x64xbf16, #tpu.memory_space<vmem>>, %arg12: memref<1x64xf32, #tpu.memory_space<vmem>>, %arg13: memref<64x128xbf16, #tpu.memory_space<vmem>>, %arg14: memref<1x128xf32, #tpu.memory_space<vmem>>, %arg15: memref<128x64xbf16, #tpu.memory_space<vmem>>, %arg16: memref<1x64xf32, #tpu.memory_space<vmem>>, %arg17: memref<1x16x64xf32, #tpu.memory_space<vmem>>, %arg18: memref<64x32xbf16, #tpu.memory_space<vmem>>, %arg19: memref<32x64xbf16, #tpu.memory_space<vmem>>, %arg20: memref<16x64xbf16, #tpu.memory_space<vmem>>) attributes {dimension_semantics = [#tpu.dimension_semantics<parallel>, #tpu.dimension_semantics<arbitrary>], iteration_bounds = array<i64: 2, 2>, scalar_prefetch = 0 : i64, scratch_operands = 3 : i64, tpu.core_type = #tpu.core_type<tc>, window_params = [{transform_indices = @transform_0, window_bounds = array<i64: 4>}, {transform_indices = @transform_1, window_bounds = array<i64: 1, 32, 64>}, {transform_indices = @transform_2, window_bounds = array<i64: 16, 32>}, {pipeline_mode = #tpu.pipeline_mode<synchronous>, transform_indices = @transform_3, window_bounds = array<i64: 64, 64>}, {pipeline_mode = #tpu.pipeline_mode<synchronous>, transform_indices = @transform_4, window_bounds = array<i64: 1, 64>}, {pipeline_mode = #tpu.pipeline_mode<synchronous>, transform_indices = @transform_5, window_bounds = array<i64: 64, 64>}, {pipeline_mode = #tpu.pipeline_mode<synchronous>, transform_indices = @transform_6, window_bounds = array<i64: 1, 64>}, {pipeline_mode = #tpu.pipeline_mode<synchronous>, transform_indices = @transform_7, window_bounds = array<i64: 64, 64>}, {pipeline_mode = #tpu.pipeline_mode<synchronous>, transform_indices = @transform_8, window_bounds = array<i64: 1, 64>}, {pipeline_mode = #tpu.pipeline_mode<synchronous>, transform_indices = @transform_9, window_bounds = array<i64: 64, 64>}, {pipeline_mode = #tpu.pipeline_mode<synchronous>, transform_indices = @transform_10, window_bounds = array<i64: 1, 64>}, {pipeline_mode = #tpu.pipeline_mode<synchronous>, transform_indices = @transform_11, window_bounds = array<i64: 64, 128>}, {pipeline_mode = #tpu.pipeline_mode<synchronous>, transform_indices = @transform_12, window_bounds = array<i64: 1, 128>}, {pipeline_mode = #tpu.pipeline_mode<synchronous>, transform_indices = @transform_13, window_bounds = array<i64: 128, 64>}, {pipeline_mode = #tpu.pipeline_mode<synchronous>, transform_indices = @transform_14, window_bounds = array<i64: 1, 64>}, {transform_indices = @transform_15, window_bounds = array<i64: 1, 16, 64>}]} {
    %c0 = arith.constant 0 : index
    %0 = memref.load %arg2[%c0] : memref<4xf32, #tpu.memory_space<smem>>
    %c1 = arith.constant 1 : index
    %1 = memref.load %arg2[%c1] : memref<4xf32, #tpu.memory_space<smem>>
    %c2 = arith.constant 2 : index
    %2 = memref.load %arg2[%c2] : memref<4xf32, #tpu.memory_space<smem>>
    %c3 = arith.constant 3 : index
    %3 = memref.load %arg2[%c3] : memref<4xf32, #tpu.memory_space<smem>>
    %c0_i32 = arith.constant 0 : i32
    %4 = arith.cmpi eq, %arg1, %c0_i32 : i32
    %5 = arith.extui %4 : i1 to i32
    %c0_i32_0 = arith.constant 0 : i32
    %6 = arith.cmpi ne, %5, %c0_i32_0 : i32
    scf.if %6 {
      %c0_79 = arith.constant 0 : index
      %c0_80 = arith.constant 0 : index
      %c0_81 = arith.constant 0 : index
      %166 = vector.load %arg3[%c0_79, %c0_80, %c0_81] : memref<1x32x64xf32, #tpu.memory_space<vmem>>, vector<1x32x64xf32>
      %167 = vector.shape_cast %166 : vector<1x32x64xf32> to vector<32x64xf32>
      %cst_82 = arith.constant dense<0.000000e+00> : vector<32xf32>
      %168 = vector.multi_reduction <add>, %167, %cst_82 [1] : vector<32x64xf32> to vector<32xf32>
      %169 = vector.shape_cast %168 : vector<32xf32> to vector<32x1xf32>
      %cst_83 = arith.constant 6.400000e+01 : f32
      %170 = vector.broadcast %cst_83 : f32 to vector<32x1xf32>
      %171 = arith.divf %169, %170 : vector<32x1xf32>
      %172 = vector.broadcast %171 : vector<32x1xf32> to vector<32x64xf32>
      %173 = arith.subf %167, %172 : vector<32x64xf32>
      %174 = arith.mulf %173, %173 : vector<32x64xf32>
      %cst_84 = arith.constant dense<0.000000e+00> : vector<32xf32>
      %175 = vector.multi_reduction <add>, %174, %cst_84 [1] : vector<32x64xf32> to vector<32xf32>
      %176 = vector.shape_cast %175 : vector<32xf32> to vector<32x1xf32>
      %cst_85 = arith.constant 0.0158730168 : f32
      %177 = vector.broadcast %cst_85 : f32 to vector<32x1xf32>
      %178 = arith.mulf %176, %177 : vector<32x1xf32>
      %179 = math.sqrt %178 : vector<32x1xf32>
      %cst_86 = arith.constant 9.99999997E-7 : f32
      %180 = vector.broadcast %cst_86 : f32 to vector<32x1xf32>
      %181 = arith.addf %179, %180 : vector<32x1xf32>
      %cst_87 = arith.constant 1.000000e+00 : f32
      %182 = vector.broadcast %cst_87 : f32 to vector<32x1xf32>
      %183 = arith.divf %182, %181 : vector<32x1xf32>
      %184 = vector.broadcast %0 : f32 to vector<32x64xf32>
      %185 = arith.mulf %184, %173 : vector<32x64xf32>
      %186 = vector.broadcast %183 : vector<32x1xf32> to vector<32x64xf32>
      %187 = arith.mulf %185, %186 : vector<32x64xf32>
      %188 = vector.broadcast %1 : f32 to vector<32x64xf32>
      %189 = arith.addf %187, %188 : vector<32x64xf32>
      %190 = arith.truncf %189 : vector<32x64xf32> to vector<32x64xbf16>
      %c0_88 = arith.constant 0 : index
      %c0_89 = arith.constant 0 : index
      %191 = vector.load %arg7[%c0_88, %c0_89] : memref<64x64xbf16, #tpu.memory_space<vmem>>, vector<64x64xbf16>
      %cst_90 = arith.constant dense<0.000000e+00> : vector<32x64xf32>
      %192 = tpu.matmul %190, %191, %cst_90 {dimension_numbers = #tpu.dot_dimension_numbers<[1], [0], [0], [1], [0, 0, 1, 1], [], []>} : vector<32x64xbf16>, vector<64x64xbf16>, vector<32x64xf32> -> vector<32x64xf32>
      %c0_91 = arith.constant 0 : index
      %c0_92 = arith.constant 0 : index
      %193 = vector.load %arg8[%c0_91, %c0_92] : memref<1x64xf32, #tpu.memory_space<vmem>>, vector<1x64xf32>
      %194 = vector.broadcast %193 : vector<1x64xf32> to vector<32x64xf32>
      %195 = arith.addf %192, %194 : vector<32x64xf32>
      %c0_93 = arith.constant 0 : index
      %c0_94 = arith.constant 0 : index
      %196 = vector.load %arg9[%c0_93, %c0_94] : memref<64x64xbf16, #tpu.memory_space<vmem>>, vector<64x64xbf16>
      %cst_95 = arith.constant dense<0.000000e+00> : vector<32x64xf32>
      %197 = tpu.matmul %190, %196, %cst_95 {dimension_numbers = #tpu.dot_dimension_numbers<[1], [0], [0], [1], [0, 0, 1, 1], [], []>} : vector<32x64xbf16>, vector<64x64xbf16>, vector<32x64xf32> -> vector<32x64xf32>
      %c0_96 = arith.constant 0 : index
      %c0_97 = arith.constant 0 : index
      %198 = vector.load %arg10[%c0_96, %c0_97] : memref<1x64xf32, #tpu.memory_space<vmem>>, vector<1x64xf32>
      %199 = vector.broadcast %198 : vector<1x64xf32> to vector<32x64xf32>
      %200 = arith.addf %197, %199 : vector<32x64xf32>
      %201 = tpu.transpose %195, [1, 0] : vector<32x64xf32> -> vector<64x32xf32>
      %202 = arith.truncf %201 : vector<64x32xf32> to vector<64x32xbf16>
      %c0_98 = arith.constant 0 : index
      %c0_99 = arith.constant 0 : index
      %203 = vector.load %arg18[%c0_98, %c0_99] : memref<64x32xbf16, #tpu.memory_space<vmem>>, vector<64x32xbf16>
      tpu.vector_store %arg18[%c0_98, %c0_99], %202 {strides = array<i32>} : memref<64x32xbf16, #tpu.memory_space<vmem>>, vector<64x32xbf16>,
      %204 = arith.truncf %200 : vector<32x64xf32> to vector<32x64xbf16>
      %c0_100 = arith.constant 0 : index
      %c0_101 = arith.constant 0 : index
      %205 = vector.load %arg19[%c0_100, %c0_101] : memref<32x64xbf16, #tpu.memory_space<vmem>>, vector<32x64xbf16>
      tpu.vector_store %arg19[%c0_100, %c0_101], %204 {strides = array<i32>} : memref<32x64xbf16, #tpu.memory_space<vmem>>, vector<32x64xbf16>,
    } else {
    }
    %c16_i32 = arith.constant 16 : i32
    %7 = arith.muli %arg1, %c16_i32 : i32
    %8 = tpu.assume_multiple %7, 16 : i32
    %c0_1 = arith.constant 0 : index
    %9 = arith.index_cast %8 : i32 to index
    %c0_2 = arith.constant 0 : index
    %10 = vector.load %arg3[%c0_1, %9, %c0_2] : memref<1x32x64xf32, #tpu.memory_space<vmem>>, vector<1x16x64xf32>
    %11 = vector.shape_cast %10 : vector<1x16x64xf32> to vector<16x64xf32>
    %cst = arith.constant dense<0.000000e+00> : vector<16xf32>
    %12 = vector.multi_reduction <add>, %11, %cst [1] : vector<16x64xf32> to vector<16xf32>
    %13 = vector.shape_cast %12 : vector<16xf32> to vector<16x1xf32>
    %cst_3 = arith.constant 6.400000e+01 : f32
    %14 = vector.broadcast %cst_3 : f32 to vector<16x1xf32>
    %15 = arith.divf %13, %14 : vector<16x1xf32>
    %16 = vector.broadcast %15 : vector<16x1xf32> to vector<16x64xf32>
    %17 = arith.subf %11, %16 : vector<16x64xf32>
    %18 = arith.mulf %17, %17 : vector<16x64xf32>
    %cst_4 = arith.constant dense<0.000000e+00> : vector<16xf32>
    %19 = vector.multi_reduction <add>, %18, %cst_4 [1] : vector<16x64xf32> to vector<16xf32>
    %20 = vector.shape_cast %19 : vector<16xf32> to vector<16x1xf32>
    %cst_5 = arith.constant 0.0158730168 : f32
    %21 = vector.broadcast %cst_5 : f32 to vector<16x1xf32>
    %22 = arith.mulf %20, %21 : vector<16x1xf32>
    %23 = math.sqrt %22 : vector<16x1xf32>
    %cst_6 = arith.constant 9.99999997E-7 : f32
    %24 = vector.broadcast %cst_6 : f32 to vector<16x1xf32>
    %25 = arith.addf %23, %24 : vector<16x1xf32>
    %cst_7 = arith.constant 1.000000e+00 : f32
    %26 = vector.broadcast %cst_7 : f32 to vector<16x1xf32>
    %27 = arith.divf %26, %25 : vector<16x1xf32>
    %28 = vector.broadcast %0 : f32 to vector<16x64xf32>
    %29 = arith.mulf %28, %17 : vector<16x64xf32>
    %30 = vector.broadcast %27 : vector<16x1xf32> to vector<16x64xf32>
    %31 = arith.mulf %29, %30 : vector<16x64xf32>
    %32 = vector.broadcast %1 : f32 to vector<16x64xf32>
    %33 = arith.addf %31, %32 : vector<16x64xf32>
    %34 = arith.truncf %33 : vector<16x64xf32> to vector<16x64xbf16>
    %c0_8 = arith.constant 0 : index
    %c0_9 = arith.constant 0 : index
    %35 = vector.load %arg5[%c0_8, %c0_9] : memref<64x64xbf16, #tpu.memory_space<vmem>>, vector<64x64xbf16>
    %cst_10 = arith.constant dense<0.000000e+00> : vector<16x64xf32>
    %36 = tpu.matmul %34, %35, %cst_10 {dimension_numbers = #tpu.dot_dimension_numbers<[1], [0], [0], [1], [0, 0, 1, 1], [], []>} : vector<16x64xbf16>, vector<64x64xbf16>, vector<16x64xf32> -> vector<16x64xf32>
    %c0_11 = arith.constant 0 : index
    %c0_12 = arith.constant 0 : index
    %37 = vector.load %arg6[%c0_11, %c0_12] : memref<1x64xf32, #tpu.memory_space<vmem>>, vector<1x64xf32>
    %38 = vector.broadcast %37 : vector<1x64xf32> to vector<16x64xf32>
    %39 = arith.addf %36, %38 : vector<16x64xf32>
    %40 = arith.truncf %39 : vector<16x64xf32> to vector<16x64xbf16>
    %c0_13 = arith.constant 0 : index
    %c0_14 = arith.constant 0 : index
    %41 = vector.load %arg4[%c0_13, %c0_14] : memref<16x32xbf16, #tpu.memory_space<vmem>>, vector<16x32xbf16>
    %42 = arith.extf %41 : vector<16x32xbf16> to vector<16x32xf32>
    %43 = vector.extract_strided_slice %40 {offsets = [0, 0], sizes = [16, 16], strides = [1, 1]} : vector<16x64xbf16> to vector<16x16xbf16>
    %c0_15 = arith.constant 0 : index
    %c0_16 = arith.constant 0 : index
    %44 = vector.load %arg18[%c0_15, %c0_16] : memref<64x32xbf16, #tpu.memory_space<vmem>>, vector<16x32xbf16>
    %cst_17 = arith.constant dense<0.000000e+00> : vector<16x32xf32>
    %45 = tpu.matmul %43, %44, %cst_17 {dimension_numbers = #tpu.dot_dimension_numbers<[1], [0], [0], [1], [0, 0, 1, 1], [], []>} : vector<16x16xbf16>, vector<16x32xbf16>, vector<16x32xf32> -> vector<16x32xf32>
    %46 = arith.addf %45, %42 : vector<16x32xf32>
    %cst_18 = arith.constant dense<0xFF800000> : vector<16xf32>
    %47 = vector.multi_reduction <maximumf>, %46, %cst_18 [1] : vector<16x32xf32> to vector<16xf32>
    %48 = vector.shape_cast %47 : vector<16xf32> to vector<16x1xf32>
    %49 = vector.broadcast %48 : vector<16x1xf32> to vector<16x32xf32>
    %50 = arith.subf %46, %49 : vector<16x32xf32>
    %51 = math.exp %50 : vector<16x32xf32>
    %cst_19 = arith.constant dense<0.000000e+00> : vector<16xf32>
    %52 = vector.multi_reduction <add>, %51, %cst_19 [1] : vector<16x32xf32> to vector<16xf32>
    %53 = vector.shape_cast %52 : vector<16xf32> to vector<16x1xf32>
    %54 = tpu.reciprocal %53 {approx = true} : vector<16x1xf32> -> vector<16x1xf32>
    %55 = vector.broadcast %54 : vector<16x1xf32> to vector<16x32xf32>
    %56 = arith.mulf %51, %55 : vector<16x32xf32>
    %57 = arith.truncf %56 : vector<16x32xf32> to vector<16x32xbf16>
    %c0_20 = arith.constant 0 : index
    %c0_21 = arith.constant 0 : index
    %58 = vector.load %arg19[%c0_20, %c0_21] : memref<32x64xbf16, #tpu.memory_space<vmem>>, vector<32x16xbf16>
    %cst_22 = arith.constant dense<0.000000e+00> : vector<16x16xf32>
    %59 = tpu.matmul %57, %58, %cst_22 {dimension_numbers = #tpu.dot_dimension_numbers<[1], [0], [0], [1], [0, 0, 1, 1], [], []>} : vector<16x32xbf16>, vector<32x16xbf16>, vector<16x16xf32> -> vector<16x16xf32>
    %60 = arith.truncf %59 : vector<16x16xf32> to vector<16x16xbf16>
    %c0_23 = arith.constant 0 : index
    %c0_24 = arith.constant 0 : index
    %61 = vector.load %arg20[%c0_23, %c0_24] : memref<16x64xbf16, #tpu.memory_space<vmem>>, vector<16x16xbf16>
    tpu.vector_store %arg20[%c0_23, %c0_24], %60 {strides = array<i32>} : memref<16x64xbf16, #tpu.memory_space<vmem>>, vector<16x16xbf16>,
    %62 = vector.extract_strided_slice %40 {offsets = [0, 16], sizes = [16, 16], strides = [1, 1]} : vector<16x64xbf16> to vector<16x16xbf16>
    %c16 = arith.constant 16 : index
    %c0_25 = arith.constant 0 : index
    %63 = vector.load %arg18[%c16, %c0_25] : memref<64x32xbf16, #tpu.memory_space<vmem>>, vector<16x32xbf16>
    %cst_26 = arith.constant dense<0.000000e+00> : vector<16x32xf32>
    %64 = tpu.matmul %62, %63, %cst_26 {dimension_numbers = #tpu.dot_dimension_numbers<[1], [0], [0], [1], [0, 0, 1, 1], [], []>} : vector<16x16xbf16>, vector<16x32xbf16>, vector<16x32xf32> -> vector<16x32xf32>
    %65 = arith.addf %64, %42 : vector<16x32xf32>
    %cst_27 = arith.constant dense<0xFF800000> : vector<16xf32>
    %66 = vector.multi_reduction <maximumf>, %65, %cst_27 [1] : vector<16x32xf32> to vector<16xf32>
    %67 = vector.shape_cast %66 : vector<16xf32> to vector<16x1xf32>
    %68 = vector.broadcast %67 : vector<16x1xf32> to vector<16x32xf32>
    %69 = arith.subf %65, %68 : vector<16x32xf32>
    %70 = math.exp %69 : vector<16x32xf32>
    %cst_28 = arith.constant dense<0.000000e+00> : vector<16xf32>
    %71 = vector.multi_reduction <add>, %70, %cst_28 [1] : vector<16x32xf32> to vector<16xf32>
    %72 = vector.shape_cast %71 : vector<16xf32> to vector<16x1xf32>
    %73 = tpu.reciprocal %72 {approx = true} : vector<16x1xf32> -> vector<16x1xf32>
    %74 = vector.broadcast %73 : vector<16x1xf32> to vector<16x32xf32>
    %75 = arith.mulf %70, %74 : vector<16x32xf32>
    %76 = arith.truncf %75 : vector<16x32xf32> to vector<16x32xbf16>
    %c0_29 = arith.constant 0 : index
    %c16_30 = arith.constant 16 : index
    %77 = vector.load %arg19[%c0_29, %c16_30] : memref<32x64xbf16, #tpu.memory_space<vmem>>, vector<32x16xbf16>
    %cst_31 = arith.constant dense<0.000000e+00> : vector<16x16xf32>
    %78 = tpu.matmul %76, %77, %cst_31 {dimension_numbers = #tpu.dot_dimension_numbers<[1], [0], [0], [1], [0, 0, 1, 1], [], []>} : vector<16x32xbf16>, vector<32x16xbf16>, vector<16x16xf32> -> vector<16x16xf32>
    %79 = arith.truncf %78 : vector<16x16xf32> to vector<16x16xbf16>
    %c0_32 = arith.constant 0 : index
    %c16_33 = arith.constant 16 : index
    %80 = vector.load %arg20[%c0_32, %c16_33] : memref<16x64xbf16, #tpu.memory_space<vmem>>, vector<16x16xbf16>
    tpu.vector_store %arg20[%c0_32, %c16_33], %79 {strides = array<i32>} : memref<16x64xbf16, #tpu.memory_space<vmem>>, vector<16x16xbf16>,
    %81 = vector.extract_strided_slice %40 {offsets = [0, 32], sizes = [16, 16], strides = [1, 1]} : vector<16x64xbf16> to vector<16x16xbf16>
    %c32 = arith.constant 32 : index
    %c0_34 = arith.constant 0 : index
    %82 = vector.load %arg18[%c32, %c0_34] : memref<64x32xbf16, #tpu.memory_space<vmem>>, vector<16x32xbf16>
    %cst_35 = arith.constant dense<0.000000e+00> : vector<16x32xf32>
    %83 = tpu.matmul %81, %82, %cst_35 {dimension_numbers = #tpu.dot_dimension_numbers<[1], [0], [0], [1], [0, 0, 1, 1], [], []>} : vector<16x16xbf16>, vector<16x32xbf16>, vector<16x32xf32> -> vector<16x32xf32>
    %84 = arith.addf %83, %42 : vector<16x32xf32>
    %cst_36 = arith.constant dense<0xFF800000> : vector<16xf32>
    %85 = vector.multi_reduction <maximumf>, %84, %cst_36 [1] : vector<16x32xf32> to vector<16xf32>
    %86 = vector.shape_cast %85 : vector<16xf32> to vector<16x1xf32>
    %87 = vector.broadcast %86 : vector<16x1xf32> to vector<16x32xf32>
    %88 = arith.subf %84, %87 : vector<16x32xf32>
    %89 = math.exp %88 : vector<16x32xf32>
    %cst_37 = arith.constant dense<0.000000e+00> : vector<16xf32>
    %90 = vector.multi_reduction <add>, %89, %cst_37 [1] : vector<16x32xf32> to vector<16xf32>
    %91 = vector.shape_cast %90 : vector<16xf32> to vector<16x1xf32>
    %92 = tpu.reciprocal %91 {approx = true} : vector<16x1xf32> -> vector<16x1xf32>
    %93 = vector.broadcast %92 : vector<16x1xf32> to vector<16x32xf32>
    %94 = arith.mulf %89, %93 : vector<16x32xf32>
    %95 = arith.truncf %94 : vector<16x32xf32> to vector<16x32xbf16>
    %c0_38 = arith.constant 0 : index
    %c32_39 = arith.constant 32 : index
    %96 = vector.load %arg19[%c0_38, %c32_39] : memref<32x64xbf16, #tpu.memory_space<vmem>>, vector<32x16xbf16>
    %cst_40 = arith.constant dense<0.000000e+00> : vector<16x16xf32>
    %97 = tpu.matmul %95, %96, %cst_40 {dimension_numbers = #tpu.dot_dimension_numbers<[1], [0], [0], [1], [0, 0, 1, 1], [], []>} : vector<16x32xbf16>, vector<32x16xbf16>, vector<16x16xf32> -> vector<16x16xf32>
    %98 = arith.truncf %97 : vector<16x16xf32> to vector<16x16xbf16>
    %c0_41 = arith.constant 0 : index
    %c32_42 = arith.constant 32 : index
    %99 = vector.load %arg20[%c0_41, %c32_42] : memref<16x64xbf16, #tpu.memory_space<vmem>>, vector<16x16xbf16>
    tpu.vector_store %arg20[%c0_41, %c32_42], %98 {strides = array<i32>} : memref<16x64xbf16, #tpu.memory_space<vmem>>, vector<16x16xbf16>,
    %100 = vector.extract_strided_slice %40 {offsets = [0, 48], sizes = [16, 16], strides = [1, 1]} : vector<16x64xbf16> to vector<16x16xbf16>
    %c48 = arith.constant 48 : index
    %c0_43 = arith.constant 0 : index
    %101 = vector.load %arg18[%c48, %c0_43] : memref<64x32xbf16, #tpu.memory_space<vmem>>, vector<16x32xbf16>
    %cst_44 = arith.constant dense<0.000000e+00> : vector<16x32xf32>
    %102 = tpu.matmul %100, %101, %cst_44 {dimension_numbers = #tpu.dot_dimension_numbers<[1], [0], [0], [1], [0, 0, 1, 1], [], []>} : vector<16x16xbf16>, vector<16x32xbf16>, vector<16x32xf32> -> vector<16x32xf32>
    %103 = arith.addf %102, %42 : vector<16x32xf32>
    %cst_45 = arith.constant dense<0xFF800000> : vector<16xf32>
    %104 = vector.multi_reduction <maximumf>, %103, %cst_45 [1] : vector<16x32xf32> to vector<16xf32>
    %105 = vector.shape_cast %104 : vector<16xf32> to vector<16x1xf32>
    %106 = vector.broadcast %105 : vector<16x1xf32> to vector<16x32xf32>
    %107 = arith.subf %103, %106 : vector<16x32xf32>
    %108 = math.exp %107 : vector<16x32xf32>
    %cst_46 = arith.constant dense<0.000000e+00> : vector<16xf32>
    %109 = vector.multi_reduction <add>, %108, %cst_46 [1] : vector<16x32xf32> to vector<16xf32>
    %110 = vector.shape_cast %109 : vector<16xf32> to vector<16x1xf32>
    %111 = tpu.reciprocal %110 {approx = true} : vector<16x1xf32> -> vector<16x1xf32>
    %112 = vector.broadcast %111 : vector<16x1xf32> to vector<16x32xf32>
    %113 = arith.mulf %108, %112 : vector<16x32xf32>
    %114 = arith.truncf %113 : vector<16x32xf32> to vector<16x32xbf16>
    %c0_47 = arith.constant 0 : index
    %c48_48 = arith.constant 48 : index
    %115 = vector.load %arg19[%c0_47, %c48_48] : memref<32x64xbf16, #tpu.memory_space<vmem>>, vector<32x16xbf16>
    %cst_49 = arith.constant dense<0.000000e+00> : vector<16x16xf32>
    %116 = tpu.matmul %114, %115, %cst_49 {dimension_numbers = #tpu.dot_dimension_numbers<[1], [0], [0], [1], [0, 0, 1, 1], [], []>} : vector<16x32xbf16>, vector<32x16xbf16>, vector<16x16xf32> -> vector<16x16xf32>
    %117 = arith.truncf %116 : vector<16x16xf32> to vector<16x16xbf16>
    %c0_50 = arith.constant 0 : index
    %c48_51 = arith.constant 48 : index
    %118 = vector.load %arg20[%c0_50, %c48_51] : memref<16x64xbf16, #tpu.memory_space<vmem>>, vector<16x16xbf16>
    tpu.vector_store %arg20[%c0_50, %c48_51], %117 {strides = array<i32>} : memref<16x64xbf16, #tpu.memory_space<vmem>>, vector<16x16xbf16>,
    %c0_52 = arith.constant 0 : index
    %c0_53 = arith.constant 0 : index
    %119 = vector.load %arg20[%c0_52, %c0_53] : memref<16x64xbf16, #tpu.memory_space<vmem>>, vector<16x64xbf16>
    %c0_54 = arith.constant 0 : index
    %c0_55 = arith.constant 0 : index
    %120 = vector.load %arg11[%c0_54, %c0_55] : memref<64x64xbf16, #tpu.memory_space<vmem>>, vector<64x64xbf16>
    %cst_56 = arith.constant dense<0.000000e+00> : vector<16x64xf32>
    %121 = tpu.matmul %119, %120, %cst_56 {dimension_numbers = #tpu.dot_dimension_numbers<[1], [0], [0], [1], [0, 0, 1, 1], [], []>} : vector<16x64xbf16>, vector<64x64xbf16>, vector<16x64xf32> -> vector<16x64xf32>
    %c0_57 = arith.constant 0 : index
    %c0_58 = arith.constant 0 : index
    %122 = vector.load %arg12[%c0_57, %c0_58] : memref<1x64xf32, #tpu.memory_space<vmem>>, vector<1x64xf32>
    %123 = vector.broadcast %122 : vector<1x64xf32> to vector<16x64xf32>
    %124 = arith.addf %121, %123 : vector<16x64xf32>
    %125 = arith.addf %11, %124 : vector<16x64xf32>
    %cst_59 = arith.constant dense<0.000000e+00> : vector<16xf32>
    %126 = vector.multi_reduction <add>, %125, %cst_59 [1] : vector<16x64xf32> to vector<16xf32>
    %127 = vector.shape_cast %126 : vector<16xf32> to vector<16x1xf32>
    %cst_60 = arith.constant 6.400000e+01 : f32
    %128 = vector.broadcast %cst_60 : f32 to vector<16x1xf32>
    %129 = arith.divf %127, %128 : vector<16x1xf32>
    %130 = vector.broadcast %129 : vector<16x1xf32> to vector<16x64xf32>
    %131 = arith.subf %125, %130 : vector<16x64xf32>
    %132 = arith.mulf %131, %131 : vector<16x64xf32>
    %cst_61 = arith.constant dense<0.000000e+00> : vector<16xf32>
    %133 = vector.multi_reduction <add>, %132, %cst_61 [1] : vector<16x64xf32> to vector<16xf32>
    %134 = vector.shape_cast %133 : vector<16xf32> to vector<16x1xf32>
    %cst_62 = arith.constant 0.0158730168 : f32
    %135 = vector.broadcast %cst_62 : f32 to vector<16x1xf32>
    %136 = arith.mulf %134, %135 : vector<16x1xf32>
    %137 = math.sqrt %136 : vector<16x1xf32>
    %cst_63 = arith.constant 9.99999997E-7 : f32
    %138 = vector.broadcast %cst_63 : f32 to vector<16x1xf32>
    %139 = arith.addf %137, %138 : vector<16x1xf32>
    %cst_64 = arith.constant 1.000000e+00 : f32
    %140 = vector.broadcast %cst_64 : f32 to vector<16x1xf32>
    %141 = arith.divf %140, %139 : vector<16x1xf32>
    %142 = vector.broadcast %2 : f32 to vector<16x64xf32>
    %143 = arith.mulf %142, %131 : vector<16x64xf32>
    %144 = vector.broadcast %141 : vector<16x1xf32> to vector<16x64xf32>
    %145 = arith.mulf %143, %144 : vector<16x64xf32>
    %146 = vector.broadcast %3 : f32 to vector<16x64xf32>
    %147 = arith.addf %145, %146 : vector<16x64xf32>
    %148 = arith.truncf %147 : vector<16x64xf32> to vector<16x64xbf16>
    %c0_65 = arith.constant 0 : index
    %c0_66 = arith.constant 0 : index
    %149 = vector.load %arg13[%c0_65, %c0_66] : memref<64x128xbf16, #tpu.memory_space<vmem>>, vector<64x128xbf16>
    %cst_67 = arith.constant dense<0.000000e+00> : vector<16x128xf32>
    %150 = tpu.matmul %148, %149, %cst_67 {dimension_numbers = #tpu.dot_dimension_numbers<[1], [0], [0], [1], [0, 0, 1, 1], [], []>} : vector<16x64xbf16>, vector<64x128xbf16>, vector<16x128xf32> -> vector<16x128xf32>
    %c0_68 = arith.constant 0 : index
    %c0_69 = arith.constant 0 : index
    %151 = vector.load %arg14[%c0_68, %c0_69] : memref<1x128xf32, #tpu.memory_space<vmem>>, vector<1x128xf32>
    %152 = vector.broadcast %151 : vector<1x128xf32> to vector<16x128xf32>
    %153 = arith.addf %150, %152 : vector<16x128xf32>
    %cst_70 = arith.constant 0.000000e+00 : f32
    %154 = vector.broadcast %cst_70 : f32 to vector<16x128xf32>
    %155 = arith.maximumf %153, %154 : vector<16x128xf32>
    %156 = arith.truncf %155 : vector<16x128xf32> to vector<16x128xbf16>
    %c0_71 = arith.constant 0 : index
    %c0_72 = arith.constant 0 : index
    %157 = vector.load %arg15[%c0_71, %c0_72] : memref<128x64xbf16, #tpu.memory_space<vmem>>, vector<128x64xbf16>
    %cst_73 = arith.constant dense<0.000000e+00> : vector<16x64xf32>
    %158 = tpu.matmul %156, %157, %cst_73 {dimension_numbers = #tpu.dot_dimension_numbers<[1], [0], [0], [1], [0, 0, 1, 1], [], []>} : vector<16x128xbf16>, vector<128x64xbf16>, vector<16x64xf32> -> vector<16x64xf32>
    %c0_74 = arith.constant 0 : index
    %c0_75 = arith.constant 0 : index
    %159 = vector.load %arg16[%c0_74, %c0_75] : memref<1x64xf32, #tpu.memory_space<vmem>>, vector<1x64xf32>
    %160 = vector.broadcast %159 : vector<1x64xf32> to vector<16x64xf32>
    %161 = arith.addf %158, %160 : vector<16x64xf32>
    %162 = arith.addf %125, %161 : vector<16x64xf32>
    %c0_76 = arith.constant 0 : index
    %c0_77 = arith.constant 0 : index
    %c0_78 = arith.constant 0 : index
    %163 = vector.load %arg17[%c0_76, %c0_77, %c0_78] : memref<1x16x64xf32, #tpu.memory_space<vmem>>, vector<1x16x64xf32>
    %164 = vector.shape_cast %163 : vector<1x16x64xf32> to vector<16x64xf32>
    %165 = vector.shape_cast %162 : vector<16x64xf32> to vector<1x16x64xf32>
    tpu.vector_store %arg17[%c0_76, %c0_77, %c0_78], %165 {strides = array<i32>} : memref<1x16x64xf32, #tpu.memory_space<vmem>>, vector<1x16x64xf32>,
    return
  }
  func.func @transform_0(%arg0: i32, %arg1: i32) -> i32 {
    %c0_i32 = arith.constant 0 : i32
    %c0_i32_0 = arith.constant 0 : i32
    return %c0_i32 : i32
  }
  func.func @transform_1(%arg0: i32, %arg1: i32) -> (i32, i32, i32) {
    %c0_i32 = arith.constant 0 : i32
    %c0_i32_0 = arith.constant 0 : i32
    %c0_i32_1 = arith.constant 0 : i32
    return %arg0, %c0_i32, %c0_i32_0 : i32, i32, i32
  }
  func.func @transform_2(%arg0: i32, %arg1: i32) -> (i32, i32) {
    %c0_i32 = arith.constant 0 : i32
    %c0_i32_0 = arith.constant 0 : i32
    return %arg1, %c0_i32 : i32, i32
  }
  func.func @transform_3(%arg0: i32, %arg1: i32) -> (i32, i32) {
    %c0_i32 = arith.constant 0 : i32
    %c0_i32_0 = arith.constant 0 : i32
    %c0_i32_1 = arith.constant 0 : i32
    return %c0_i32, %c0_i32_0 : i32, i32
  }
  func.func @transform_4(%arg0: i32, %arg1: i32) -> (i32, i32) {
    %c0_i32 = arith.constant 0 : i32
    %c0_i32_0 = arith.constant 0 : i32
    %c0_i32_1 = arith.constant 0 : i32
    return %c0_i32, %c0_i32_0 : i32, i32
  }
  func.func @transform_5(%arg0: i32, %arg1: i32) -> (i32, i32) {
    %c0_i32 = arith.constant 0 : i32
    %c0_i32_0 = arith.constant 0 : i32
    %c0_i32_1 = arith.constant 0 : i32
    return %c0_i32, %c0_i32_0 : i32, i32
  }
  func.func @transform_6(%arg0: i32, %arg1: i32) -> (i32, i32) {
    %c0_i32 = arith.constant 0 : i32
    %c0_i32_0 = arith.constant 0 : i32
    %c0_i32_1 = arith.constant 0 : i32
    return %c0_i32, %c0_i32_0 : i32, i32
  }
  func.func @transform_7(%arg0: i32, %arg1: i32) -> (i32, i32) {
    %c0_i32 = arith.constant 0 : i32
    %c0_i32_0 = arith.constant 0 : i32
    %c0_i32_1 = arith.constant 0 : i32
    return %c0_i32, %c0_i32_0 : i32, i32
  }
  func.func @transform_8(%arg0: i32, %arg1: i32) -> (i32, i32) {
    %c0_i32 = arith.constant 0 : i32
    %c0_i32_0 = arith.constant 0 : i32
    %c0_i32_1 = arith.constant 0 : i32
    return %c0_i32, %c0_i32_0 : i32, i32
  }
  func.func @transform_9(%arg0: i32, %arg1: i32) -> (i32, i32) {
    %c0_i32 = arith.constant 0 : i32
    %c0_i32_0 = arith.constant 0 : i32
    %c0_i32_1 = arith.constant 0 : i32
    return %c0_i32, %c0_i32_0 : i32, i32
  }
  func.func @transform_10(%arg0: i32, %arg1: i32) -> (i32, i32) {
    %c0_i32 = arith.constant 0 : i32
    %c0_i32_0 = arith.constant 0 : i32
    %c0_i32_1 = arith.constant 0 : i32
    return %c0_i32, %c0_i32_0 : i32, i32
  }
  func.func @transform_11(%arg0: i32, %arg1: i32) -> (i32, i32) {
    %c0_i32 = arith.constant 0 : i32
    %c0_i32_0 = arith.constant 0 : i32
    %c0_i32_1 = arith.constant 0 : i32
    return %c0_i32, %c0_i32_0 : i32, i32
  }
  func.func @transform_12(%arg0: i32, %arg1: i32) -> (i32, i32) {
    %c0_i32 = arith.constant 0 : i32
    %c0_i32_0 = arith.constant 0 : i32
    %c0_i32_1 = arith.constant 0 : i32
    return %c0_i32, %c0_i32_0 : i32, i32
  }
  func.func @transform_13(%arg0: i32, %arg1: i32) -> (i32, i32) {
    %c0_i32 = arith.constant 0 : i32
    %c0_i32_0 = arith.constant 0 : i32
    %c0_i32_1 = arith.constant 0 : i32
    return %c0_i32, %c0_i32_0 : i32, i32
  }
  func.func @transform_14(%arg0: i32, %arg1: i32) -> (i32, i32) {
    %c0_i32 = arith.constant 0 : i32
    %c0_i32_0 = arith.constant 0 : i32
    %c0_i32_1 = arith.constant 0 : i32
    return %c0_i32, %c0_i32_0 : i32, i32
  }
  func.func @transform_15(%arg0: i32, %arg1: i32) -> (i32, i32, i32) {
    %c0_i32 = arith.constant 0 : i32
    %c0_i32_0 = arith.constant 0 : i32
    return %arg0, %arg1, %c0_i32 : i32, i32, i32
  }
}

</mosaic_0001>

<llo_original>
// kernel: tpu_custom_call.1
$region0: #{tpu_custom_call.1}
  #allocation0 [shape = 'u32[]', space=smem, size = 0x4, offset = 0x4, fixed_abs, tag = 'smem constant byte address 0x4 - core index']
  #allocation1 [shape = 'u32[144,128]{1,0:T(1,128)}', space=vmem, size = 0x12000, scoped, tag = 'internal scratch']
  #allocation2 [shape = 'bf16[64,32]{1,0:T(8,128)(2,1)}', space=vmem, size = 0x4000, scoped, tag = 'scratch operand']
  #allocation3 [shape = 'bf16[32,64]{1,0:T(8,128)(2,1)}', space=vmem, size = 0x2000, scoped, tag = 'scratch operand']
  #allocation4 [shape = 'bf16[16,64]{1,0:T(8,128)(2,1)}', space=vmem, size = 0x1000, scoped, tag = 'scratch operand']
  %s0 = inlined_call_operand.vmem [shape: f32[4], index: 0, kind: input, shape index: {}]
  %s1 = inlined_call_operand.vmem [shape: f32[2,32,64], index: 1, kind: input, shape index: {}]
  %s2 = inlined_call_operand.hbm [shape: bf16[32,32], index: 2, kind: input, shape index: {}]
  %s3 = inlined_call_operand.vmem [shape: bf16[64,64], index: 3, kind: input, shape index: {}]
  %s4 = inlined_call_operand.vmem [shape: f32[1,64], index: 4, kind: input, shape index: {}]
  %s5 = inlined_call_operand.hbm [shape: bf16[64,64], index: 5, kind: input, shape index: {}]
  %s6 = inlined_call_operand.vmem [shape: f32[1,64], index: 6, kind: input, shape index: {}]
  %s7 = inlined_call_operand.hbm [shape: bf16[64,64], index: 7, kind: input, shape index: {}]
  %s8 = inlined_call_operand.vmem [shape: f32[1,64], index: 8, kind: input, shape index: {}]
  %s9 = inlined_call_operand.hbm [shape: bf16[64,64], index: 9, kind: input, shape index: {}]
  %s10 = inlined_call_operand.vmem [shape: f32[1,64], index: 10, kind: input, shape index: {}]
  %s11 = inlined_call_operand.hbm [shape: bf16[64,128], index: 11, kind: input, shape index: {}]
  %s12 = inlined_call_operand.vmem [shape: f32[1,128], index: 12, kind: input, shape index: {}]
  %s13 = inlined_call_operand.vmem [shape: bf16[128,64], index: 13, kind: input, shape index: {}]
  %s14 = inlined_call_operand.vmem [shape: f32[1,64], index: 14, kind: input, shape index: {}]
  %s15 = inlined_call_operand.hbm [shape: f32[2,32,64], index: 15, kind: output, shape index: {}]
  %s16 = sld [smem:[#allocation0]]
  $region121: #{tpu_custom_call.1} parent=0
    _
  %s18 = ssub.s32 1, %s16
  %s19 = scalar_select 0, %s18, %s16
  $region1: #{tpu_custom_call.1} parent=0
    #allocation5 [shape = 'u8[512]{0}', space=smem, size = 0x200, scoped, tag = 'input window, operand 0, single buffered']
    #allocation6 [shape = 's32[2]{0}', space=sflag, size = 0x8, scoped, tag = 'scoped memory for tpu_custom_call.1']
    #allocation7 [shape = 's32[2]{0}', space=sflag, size = 0x8, scoped, tag = 'scoped memory for tpu_custom_call.1']
    #allocation8 [shape = 's32[2]{0}', space=sflag, size = 0x8, scoped, tag = 'scoped memory for tpu_custom_call.1']
    #allocation9 [shape = 'u8[8192]{0}', space=vmem, size = 0x2000, scoped, tag = 'input window, operand 2']
    #allocation10 [shape = 'u8[16384]{0}', space=vmem, size = 0x4000, scoped, tag = 'input window, operand 5, single buffered']
    #allocation11 [shape = 's32[1]{0}', space=sflag, size = 0x4, scoped, tag = 'scoped memory for tpu_custom_call.1']
    #allocation12 [shape = 'u8[16384]{0}', space=vmem, size = 0x4000, scoped, tag = 'input window, operand 7, single buffered']
    #allocation13 [shape = 'u8[16384]{0}', space=vmem, size = 0x4000, scoped, tag = 'input window, operand 9, single buffered']
    #allocation14 [shape = 's32[1]{0}', space=sflag, size = 0x4, scoped, tag = 'scoped memory for tpu_custom_call.1']
    #allocation15 [shape = 'u8[16384]{0}', space=vmem, size = 0x4000, scoped, tag = 'input window, operand 11, single buffered']
    #allocation16 [shape = 'u8[16384]{0}', space=vmem, size = 0x4000, scoped, tag = 'output window, operand 0']
    %20 = vsyncpa [#allocation8], 0
    %21 = vsyncpa [#allocation6], 0
    %s22 = scalar_lea.sflag [#allocation6], 1
    %23 = vsyncpa %s22, 0
    %24 = vsyncpa [#allocation11], 0
    %25 = vsyncpa [#allocation14], 0
    %26 = vsyncpa [#allocation7], 0
    %s27 = scalar_lea.sflag [#allocation7], 1
    %28 = vsyncpa %s27, 0
    loop: start=0, step=1, limit=6
    $region2: #{tpu_custom_call.1} parent=1 // loop_pre_header
      _
    $region3: #{tpu_custom_call.1} parent=1 // loop_header
      %s30 = sphi 0, %s34
      %p31 = scmp.ge.s32.totalorder %s30, 6
      %s37 = sphi 0, %s49
      %s38 = sphi 0, %s45
      %s39 = sphi 0, %s37
      %s40 = sphi 0, %s38
      %s41 = sphi 0, %s39
      %s42 = sphi 0, %s40
      %s50 = sphi 0, %s50
      %s52 = sphi 0, %s50
      %s53 = sphi 0, %s52
      %s67 = sphi 0, %s53
      %s73 = sphi 0, %s75
      %s76 = sphi 0, %s73
      %s77 = sphi 0, %s76
      %s93 = sphi 0, %s77
      %s99 = sphi 0, %s101
      %s102 = sphi 0, %s99
      %s103 = sphi 0, %s102
      %s119 = sphi 0, %s103
      %s123 = sphi 0, %s123
      %s125 = sphi 0, %s123
      %s126 = sphi 0, %s125
      %s140 = sphi 0, %s126
      %s144 = sphi 0, %s144
      %s146 = sphi 0, %s144
      %s147 = sphi 0, %s146
      %s161 = sphi 0, %s147
      %s165 = sphi 0, %s165
      %s167 = sphi 0, %s165
      %s168 = sphi 0, %s167
      %s182 = sphi 0, %s168
      %s186 = sphi 0, %s186
      %s188 = sphi 0, %s186
      %s189 = sphi 0, %s188
      %s203 = sphi 0, %s189
      %s207 = sphi 0, %s207
      %s209 = sphi 0, %s207
      %s210 = sphi 0, %s209
      %s224 = sphi 0, %s210
      %s228 = sphi 0, %s228
      %s230 = sphi 0, %s228
      %s231 = sphi 0, %s230
      %s245 = sphi 0, %s231
      %s249 = sphi 0, %s249
      %s251 = sphi 0, %s249
      %s252 = sphi 0, %s251
      %s266 = sphi 0, %s252
      %s270 = sphi 0, %s270
      %s272 = sphi 0, %s270
      %s273 = sphi 0, %s272
      %s287 = sphi 0, %s273
      %s291 = sphi 0, %s291
      %s293 = sphi 0, %s291
      %s294 = sphi 0, %s293
      %s308 = sphi 0, %s294
      %s312 = sphi 0, %s312
      %s314 = sphi 0, %s312
      %s315 = sphi 0, %s314
      %s329 = sphi 0, %s315
      %s333 = sphi 0, %s333
      %s335 = sphi 0, %s333
      %s336 = sphi 0, %s335
      %s350 = sphi 0, %s336
      %s354 = sphi 0, %s354
      %s356 = sphi 0, %s354
      %s357 = sphi 0, %s356
      %s371 = sphi 0, %s357
      %s379 = sphi 0, %s381
      %s382 = sphi 0, %s379
      %s383 = sphi 0, %s382
      %s399 = sphi 0, %s383
    $region4: #{tpu_custom_call.1} parent=1 // loop_header_branch
      %33 = sbr.rel (%p31) target = $region8
    $region5: #{tpu_custom_call.1} parent=1 // loop_body
      %s35 = ssub.s32 %s30, 1
      %s36 = ssub.s32 %s30, 2
      %s43 = sadd.s32 1, %s38
      %p44 = scmp.ge.s32.totalorder %s43, 2
      %s45 = scalar_select %p44, 0, %s43
      %s46 = sadd.s32 1, %s37
      %s47 = scalar_select %p44, %s46, %s37
      %p48 = scmp.ge.s32.totalorder %s47, 2
      %s49 = scalar_select %p48, 0, %s47
      %s51 = sadd.s32 %s50, 1
      %p54 = scmp.eq.s32.totalorder %s30, 3
      %p55 = scmp.ne.s32.totalorder %s50, %s52
      %p56 = scmp.eq.s32.totalorder %s30, 0
      %p57 = por %p55, %p56
      %p58 = scmp.ne.s32.totalorder %s50, %s52
      %p59 = scmp.eq.s32.totalorder %s35, 3
      %p60 = por %p58, %p59
      %p61 = scmp.ne.s32.totalorder %s52, %s53
      %p62 = scmp.eq.s32.totalorder %s35, 0
      %p63 = por %p61, %p62
      %p64 = scmp.ne.s32.totalorder %s52, %s53
      %p65 = scmp.eq.s32.totalorder %s36, 3
      %p66 = por %p64, %p65
      %p68 = scmp.ne.s32.totalorder %s53, %s67
      %p69 = scmp.eq.s32.totalorder %s36, 0
      %p70 = por %p68, %p69
      %s71 = ssub.s32 %s37, %s49
      %p72 = scmp.eq.s32.totalorder %s71, 0
      %s74 = sadd.s32 %s73, 1
      %s75 = scalar_select %p72, %s73, %s74
      %p78 = pneg %p72
      %p79 = scmp.eq.s32.totalorder %s30, 3
      %p80 = por %p78, %p79
      %p81 = scmp.ne.s32.totalorder %s73, %s76
      %p82 = scmp.eq.s32.totalorder %s30, 0
      %p83 = por %p81, %p82
      %p84 = scmp.ne.s32.totalorder %s73, %s76
      %p85 = scmp.eq.s32.totalorder %s35, 3
      %p86 = por %p84, %p85
      %p87 = scmp.ne.s32.totalorder %s76, %s77
      %p88 = scmp.eq.s32.totalorder %s35, 0
      %p89 = por %p87, %p88
      %p90 = scmp.ne.s32.totalorder %s76, %s77
      %p91 = scmp.eq.s32.totalorder %s36, 3
      %p92 = por %p90, %p91
      %p94 = scmp.ne.s32.totalorder %s77, %s93
      %p95 = scmp.eq.s32.totalorder %s36, 0
      %p96 = por %p94, %p95
      %s97 = ssub.s32 %s38, %s45
      %p98 = scmp.eq.s32.totalorder %s97, 0
      %s100 = sadd.s32 %s99, 1
      %s101 = scalar_select %p98, %s99, %s100
      %p104 = pneg %p98
      %p105 = scmp.eq.s32.totalorder %s30, 3
      %p106 = por %p104, %p105
      %p107 = scmp.ne.s32.totalorder %s99, %s102
      %p108 = scmp.eq.s32.totalorder %s30, 0
      %p109 = por %p107, %p108
      %p110 = scmp.ne.s32.totalorder %s99, %s102
      %p111 = scmp.eq.s32.totalorder %s35, 3
      %p112 = por %p110, %p111
      %p113 = scmp.ne.s32.totalorder %s102, %s103
      %p114 = scmp.eq.s32.totalorder %s35, 0
      %p115 = por %p113, %p114
      %p116 = scmp.ne.s32.totalorder %s102, %s103
      %p117 = scmp.eq.s32.totalorder %s36, 3
      %p118 = por %p116, %p117
      %p120 = scmp.ne.s32.totalorder %s103, %s119
      %p121 = scmp.eq.s32.totalorder %s36, 0
      %p122 = por %p120, %p121
      %s124 = sadd.s32 %s123, 1
      %p127 = scmp.eq.s32.totalorder %s30, 3
      %p128 = scmp.ne.s32.totalorder %s123, %s125
      %p129 = scmp.eq.s32.totalorder %s30, 0
      %p130 = por %p128, %p129
      %p131 = scmp.ne.s32.totalorder %s123, %s125
      %p132 = scmp.eq.s32.totalorder %s35, 3
      %p133 = por %p131, %p132
      %p134 = scmp.ne.s32.totalorder %s125, %s126
      %p135 = scmp.eq.s32.totalorder %s35, 0
      %p136 = por %p134, %p135
      %p137 = scmp.ne.s32.totalorder %s125, %s126
      %p138 = scmp.eq.s32.totalorder %s36, 3
      %p139 = por %p137, %p138
      %p141 = scmp.ne.s32.totalorder %s126, %s140
      %p142 = scmp.eq.s32.totalorder %s36, 0
      %p143 = por %p141, %p142
      %s145 = sadd.s32 %s144, 1
      %p148 = scmp.eq.s32.totalorder %s30, 3
      %p149 = scmp.ne.s32.totalorder %s144, %s146
      %p150 = scmp.eq.s32.totalorder %s30, 0
      %p151 = por %p149, %p150
      %p152 = scmp.ne.s32.totalorder %s144, %s146
      %p153 = scmp.eq.s32.totalorder %s35, 3
      %p154 = por %p152, %p153
      %p155 = scmp.ne.s32.totalorder %s146, %s147
      %p156 = scmp.eq.s32.totalorder %s35, 0
      %p157 = por %p155, %p156
      %p158 = scmp.ne.s32.totalorder %s146, %s147
      %p159 = scmp.eq.s32.totalorder %s36, 3
      %p160 = por %p158, %p159
      %p162 = scmp.ne.s32.totalorder %s147, %s161
      %p163 = scmp.eq.s32.totalorder %s36, 0
      %p164 = por %p162, %p163
      %s166 = sadd.s32 %s165, 1
      %p169 = scmp.eq.s32.totalorder %s30, 3
      %p170 = scmp.ne.s32.totalorder %s165, %s167
      %p171 = scmp.eq.s32.totalorder %s30, 0
      %p172 = por %p170, %p171
      %p173 = scmp.ne.s32.totalorder %s165, %s167
      %p174 = scmp.eq.s32.totalorder %s35, 3
      %p175 = por %p173, %p174
      %p176 = scmp.ne.s32.totalorder %s167, %s168
      %p177 = scmp.eq.s32.totalorder %s35, 0
      %p178 = por %p176, %p177
      %p179 = scmp.ne.s32.totalorder %s167, %s168
      %p180 = scmp.eq.s32.totalorder %s36, 3
      %p181 = por %p179, %p180
      %p183 = scmp.ne.s32.totalorder %s168, %s182
      %p184 = scmp.eq.s32.totalorder %s36, 0
      %p185 = por %p183, %p184
      %s187 = sadd.s32 %s186, 1
      %p190 = scmp.eq.s32.totalorder %s30, 3
      %p191 = scmp.ne.s32.totalorder %s186, %s188
      %p192 = scmp.eq.s32.totalorder %s30, 0
      %p193 = por %p191, %p192
      %p194 = scmp.ne.s32.totalorder %s186, %s188
      %p195 = scmp.eq.s32.totalorder %s35, 3
      %p196 = por %p194, %p195
      %p197 = scmp.ne.s32.totalorder %s188, %s189
      %p198 = scmp.eq.s32.totalorder %s35, 0
      %p199 = por %p197, %p198
      %p200 = scmp.ne.s32.totalorder %s188, %s189
      %p201 = scmp.eq.s32.totalorder %s36, 3
      %p202 = por %p200, %p201
      %p204 = scmp.ne.s32.totalorder %s189, %s203
      %p205 = scmp.eq.s32.totalorder %s36, 0
      %p206 = por %p204, %p205
      %s208 = sadd.s32 %s207, 1
      %p211 = scmp.eq.s32.totalorder %s30, 3
      %p212 = scmp.ne.s32.totalorder %s207, %s209
      %p213 = scmp.eq.s32.totalorder %s30, 0
      %p214 = por %p212, %p213
      %p215 = scmp.ne.s32.totalorder %s207, %s209
      %p216 = scmp.eq.s32.totalorder %s35, 3
      %p217 = por %p215, %p216
      %p218 = scmp.ne.s32.totalorder %s209, %s210
      %p219 = scmp.eq.s32.totalorder %s35, 0
      %p220 = por %p218, %p219
      %p221 = scmp.ne.s32.totalorder %s209, %s210
      %p222 = scmp.eq.s32.totalorder %s36, 3
      %p223 = por %p221, %p222
      %p225 = scmp.ne.s32.totalorder %s210, %s224
      %p226 = scmp.eq.s32.totalorder %s36, 0
      %p227 = por %p225, %p226
      %s229 = sadd.s32 %s228, 1
      %p232 = scmp.eq.s32.totalorder %s30, 3
      %p233 = scmp.ne.s32.totalorder %s228, %s230
      %p234 = scmp.eq.s32.totalorder %s30, 0
      %p235 = por %p233, %p234
      %p236 = scmp.ne.s32.totalorder %s228, %s230
      %p237 = scmp.eq.s32.totalorder %s35, 3
      %p238 = por %p236, %p237
      %p239 = scmp.ne.s32.totalorder %s230, %s231
      %p240 = scmp.eq.s32.totalorder %s35, 0
      %p241 = por %p239, %p240
      %p242 = scmp.ne.s32.totalorder %s230, %s231
      %p243 = scmp.eq.s32.totalorder %s36, 3
      %p244 = por %p242, %p243
      %p246 = scmp.ne.s32.totalorder %s231, %s245
      %p247 = scmp.eq.s32.totalorder %s36, 0
      %p248 = por %p246, %p247
      %s250 = sadd.s32 %s249, 1
      %p253 = scmp.eq.s32.totalorder %s30, 3
      %p254 = scmp.ne.s32.totalorder %s249, %s251
      %p255 = scmp.eq.s32.totalorder %s30, 0
      %p256 = por %p254, %p255
      %p257 = scmp.ne.s32.totalorder %s249, %s251
      %p258 = scmp.eq.s32.totalorder %s35, 3
      %p259 = por %p257, %p258
      %p260 = scmp.ne.s32.totalorder %s251, %s252
      %p261 = scmp.eq.s32.totalorder %s35, 0
      %p262 = por %p260, %p261
      %p263 = scmp.ne.s32.totalorder %s251, %s252
      %p264 = scmp.eq.s32.totalorder %s36, 3
      %p265 = por %p263, %p264
      %p267 = scmp.ne.s32.totalorder %s252, %s266
      %p268 = scmp.eq.s32.totalorder %s36, 0
      %p269 = por %p267, %p268
      %s271 = sadd.s32 %s270, 1
      %p274 = scmp.eq.s32.totalorder %s30, 3
      %p275 = scmp.ne.s32.totalorder %s270, %s272
      %p276 = scmp.eq.s32.totalorder %s30, 0
      %p277 = por %p275, %p276
      %p278 = scmp.ne.s32.totalorder %s270, %s272
      %p279 = scmp.eq.s32.totalorder %s35, 3
      %p280 = por %p278, %p279
      %p281 = scmp.ne.s32.totalorder %s272, %s273
      %p282 = scmp.eq.s32.totalorder %s35, 0
      %p283 = por %p281, %p282
      %p284 = scmp.ne.s32.totalorder %s272, %s273
      %p285 = scmp.eq.s32.totalorder %s36, 3
      %p286 = por %p284, %p285
      %p288 = scmp.ne.s32.totalorder %s273, %s287
      %p289 = scmp.eq.s32.totalorder %s36, 0
      %p290 = por %p288, %p289
      %s292 = sadd.s32 %s291, 1
      %p295 = scmp.eq.s32.totalorder %s30, 3
      %p296 = scmp.ne.s32.totalorder %s291, %s293
      %p297 = scmp.eq.s32.totalorder %s30, 0
      %p298 = por %p296, %p297
      %p299 = scmp.ne.s32.totalorder %s291, %s293
      %p300 = scmp.eq.s32.totalorder %s35, 3
      %p301 = por %p299, %p300
      %p302 = scmp.ne.s32.totalorder %s293, %s294
      %p303 = scmp.eq.s32.totalorder %s35, 0
      %p304 = por %p302, %p303
      %p305 = scmp.ne.s32.totalorder %s293, %s294
      %p306 = scmp.eq.s32.totalorder %s36, 3
      %p307 = por %p305, %p306
      %p309 = scmp.ne.s32.totalorder %s294, %s308
      %p310 = scmp.eq.s32.totalorder %s36, 0
      %p311 = por %p309, %p310
      %s313 = sadd.s32 %s312, 1
      %p316 = scmp.eq.s32.totalorder %s30, 3
      %p317 = scmp.ne.s32.totalorder %s312, %s314
      %p318 = scmp.eq.s32.totalorder %s30, 0
      %p319 = por %p317, %p318
      %p320 = scmp.ne.s32.totalorder %s312, %s314
      %p321 = scmp.eq.s32.totalorder %s35, 3
      %p322 = por %p320, %p321
      %p323 = scmp.ne.s32.totalorder %s314, %s315
      %p324 = scmp.eq.s32.totalorder %s35, 0
      %p325 = por %p323, %p324
      %p326 = scmp.ne.s32.totalorder %s314, %s315
      %p327 = scmp.eq.s32.totalorder %s36, 3
      %p328 = por %p326, %p327
      %p330 = scmp.ne.s32.totalorder %s315, %s329
      %p331 = scmp.eq.s32.totalorder %s36, 0
      %p332 = por %p330, %p331
      %s334 = sadd.s32 %s333, 1
      %p337 = scmp.eq.s32.totalorder %s30, 3
      %p338 = scmp.ne.s32.totalorder %s333, %s335
      %p339 = scmp.eq.s32.totalorder %s30, 0
      %p340 = por %p338, %p339
      %p341 = scmp.ne.s32.totalorder %s333, %s335
      %p342 = scmp.eq.s32.totalorder %s35, 3
      %p343 = por %p341, %p342
      %p344 = scmp.ne.s32.totalorder %s335, %s336
      %p345 = scmp.eq.s32.totalorder %s35, 0
      %p346 = por %p344, %p345
      %p347 = scmp.ne.s32.totalorder %s335, %s336
      %p348 = scmp.eq.s32.totalorder %s36, 3
      %p349 = por %p347, %p348
      %p351 = scmp.ne.s32.totalorder %s336, %s350
      %p352 = scmp.eq.s32.totalorder %s36, 0
      %p353 = por %p351, %p352
      %s355 = sadd.s32 %s354, 1
      %p358 = scmp.eq.s32.totalorder %s30, 3
      %p359 = scmp.ne.s32.totalorder %s354, %s356
      %p360 = scmp.eq.s32.totalorder %s30, 0
      %p361 = por %p359, %p360
      %p362 = scmp.ne.s32.totalorder %s354, %s356
      %p363 = scmp.eq.s32.totalorder %s35, 3
      %p364 = por %p362, %p363
      %p365 = scmp.ne.s32.totalorder %s356, %s357
      %p366 = scmp.eq.s32.totalorder %s35, 0
      %p367 = por %p365, %p366
      %p368 = scmp.ne.s32.totalorder %s356, %s357
      %p369 = scmp.eq.s32.totalorder %s36, 3
      %p370 = por %p368, %p369
      %p372 = scmp.ne.s32.totalorder %s357, %s371
      %p373 = scmp.eq.s32.totalorder %s36, 0
      %p374 = por %p372, %p373
      %s375 = ssub.s32 %s37, %s49
      %s376 = ssub.s32 %s38, %s45
      %s377 = sor.u32 %s375, %s376
      %p378 = scmp.eq.s32.totalorder %s377, 0
      %s380 = sadd.s32 %s379, 1
      %s381 = scalar_select %p378, %s379, %s380
      %p384 = pneg %p378
      %p385 = scmp.eq.s32.totalorder %s30, 3
      %p386 = por %p384, %p385
      %p387 = scmp.ne.s32.totalorder %s379, %s382
      %p388 = scmp.eq.s32.totalorder %s30, 0
      %p389 = por %p387, %p388
      %p390 = scmp.ne.s32.totalorder %s379, %s382
      %p391 = scmp.eq.s32.totalorder %s35, 3
      %p392 = por %p390, %p391
      %p393 = scmp.ne.s32.totalorder %s382, %s383
      %p394 = scmp.eq.s32.totalorder %s35, 0
      %p395 = por %p393, %p394
      %p396 = scmp.ne.s32.totalorder %s382, %s383
      %p397 = scmp.eq.s32.totalorder %s36, 3
      %p398 = por %p396, %p397
      %p400 = scmp.ne.s32.totalorder %s383, %s399
      %p401 = scmp.eq.s32.totalorder %s36, 0
      %p402 = por %p400, %p401
      %p403 = scmp.le.s32.totalorder 1, %s30
      %p404 = scmp.lt.s32.totalorder %s30, 5
      %p405 = pnand %p403, %p404
      %p406 = pneg %p405
      // Predicated region
      $region9: #{tpu_custom_call.1} parent=5 // pred_check
        _
      $region10: #{tpu_custom_call.1} parent=5 // pred_check_branch
        %408 = sbr.rel (%p405) target = $region12
      $region11: #{tpu_custom_call.1} parent=5 // pred_region
        %s409 = ssub.s32 %s30, 1
        // Predicated region
        $region13: #{tpu_custom_call.1} parent=11 // pred_check
          %p410 = pneg %p63
        $region14: #{tpu_custom_call.1} parent=11 // pred_check_branch
          %412 = sbr.rel (%p410) target = $region16
        $region15: #{tpu_custom_call.1} parent=11 // pred_region
          %s414 = ssub.s32 16, 16
          %415 = vsyncadd [#allocation8], %s414
          %s417 = sshll.u32 %s0, 4
          %s418 = int_to_ptr.vmem [resolvable:$true] %s417
          %420 = dma.vmem_to_smem %s418, 16, [#allocation5], [#allocation8]
        $region16: #{tpu_custom_call.1} parent=11 // pred_fallthru
          _
        // Predicated region
        $region17: #{tpu_custom_call.1} parent=11 // pred_check
          %p421 = pneg %p136
        $region18: #{tpu_custom_call.1} parent=11 // pred_check_branch
          %423 = sbr.rel (%p421) target = $region20
        $region19: #{tpu_custom_call.1} parent=11 // pred_region
          _
        $region20: #{tpu_custom_call.1} parent=11 // pred_fallthru
          _
        // Predicated region
        $region21: #{tpu_custom_call.1} parent=11 // pred_check
          %p424 = pneg %p157
        $region22: #{tpu_custom_call.1} parent=11 // pred_check_branch
          %426 = sbr.rel (%p424) target = $region24
        $region23: #{tpu_custom_call.1} parent=11 // pred_region
          _
        $region24: #{tpu_custom_call.1} parent=11 // pred_fallthru
          _
        // Predicated region
        $region25: #{tpu_custom_call.1} parent=11 // pred_check
          %p427 = pneg %p178
        $region26: #{tpu_custom_call.1} parent=11 // pred_check_branch
          %429 = sbr.rel (%p427) target = $region28
        $region27: #{tpu_custom_call.1} parent=11 // pred_region
          %s431 = ssub.s32 512, 512
          %432 = vsyncadd [#allocation11], %s431
          %s433 = sshll.u32 [#allocation10], 4
          %s434 = int_to_ptr.vmem [resolvable:$true] %s433
          %439 = dma.hbm_to_vmem [thread:$0]  %s5, 512, %s434, [#allocation11], 64, 64, 4
        $region28: #{tpu_custom_call.1} parent=11 // pred_fallthru
          _
        // Predicated region
        $region29: #{tpu_custom_call.1} parent=11 // pred_check
          %p440 = pneg %p199
        $region30: #{tpu_custom_call.1} parent=11 // pred_check_branch
          %442 = sbr.rel (%p440) target = $region32
        $region31: #{tpu_custom_call.1} parent=11 // pred_region
          _
        $region32: #{tpu_custom_call.1} parent=11 // pred_fallthru
          _
        // Predicated region
        $region33: #{tpu_custom_call.1} parent=11 // pred_check
          %p443 = pneg %p220
        $region34: #{tpu_custom_call.1} parent=11 // pred_check_branch
          %445 = sbr.rel (%p443) target = $region36
        $region35: #{tpu_custom_call.1} parent=11 // pred_region
          %s447 = ssub.s32 512, 512
          %448 = vsyncadd [#allocation11], %s447
          %s449 = sshll.u32 [#allocation12], 4
          %s450 = int_to_ptr.vmem [resolvable:$true] %s449
          %455 = dma.hbm_to_vmem [thread:$0]  %s7, 512, %s450, [#allocation11], 64, 64, 4
        $region36: #{tpu_custom_call.1} parent=11 // pred_fallthru
          _
        // Predicated region
        $region37: #{tpu_custom_call.1} parent=11 // pred_check
          %p456 = pneg %p241
        $region38: #{tpu_custom_call.1} parent=11 // pred_check_branch
          %458 = sbr.rel (%p456) target = $region40
        $region39: #{tpu_custom_call.1} parent=11 // pred_region
          _
        $region40: #{tpu_custom_call.1} parent=11 // pred_fallthru
          _
        // Predicated region
        $region41: #{tpu_custom_call.1} parent=11 // pred_check
          %p459 = pneg %p262
        $region42: #{tpu_custom_call.1} parent=11 // pred_check_branch
          %461 = sbr.rel (%p459) target = $region44
        $region43: #{tpu_custom_call.1} parent=11 // pred_region
          %s463 = ssub.s32 512, 512
          %464 = vsyncadd [#allocation14], %s463
          %s465 = sshll.u32 [#allocation13], 4
          %s466 = int_to_ptr.vmem [resolvable:$true] %s465
          %471 = dma.hbm_to_vmem [thread:$0]  %s9, 512, %s466, [#allocation14], 64, 64, 4
        $region44: #{tpu_custom_call.1} parent=11 // pred_fallthru
          _
        // Predicated region
        $region45: #{tpu_custom_call.1} parent=11 // pred_check
          %p472 = pneg %p283
        $region46: #{tpu_custom_call.1} parent=11 // pred_check_branch
          %474 = sbr.rel (%p472) target = $region48
        $region47: #{tpu_custom_call.1} parent=11 // pred_region
          _
        $region48: #{tpu_custom_call.1} parent=11 // pred_fallthru
          _
        // Predicated region
        $region49: #{tpu_custom_call.1} parent=11 // pred_check
          %p475 = pneg %p304
        $region50: #{tpu_custom_call.1} parent=11 // pred_check_branch
          %477 = sbr.rel (%p475) target = $region52
        $region51: #{tpu_custom_call.1} parent=11 // pred_region
          %s479 = ssub.s32 512, 512
          %480 = vsyncadd [#allocation14], %s479
          %s481 = sshll.u32 [#allocation15], 4
          %s482 = int_to_ptr.vmem [resolvable:$true] %s481
          %487 = dma.hbm_to_vmem [thread:$0]  %s11, 512, %s482, [#allocation14], 64, 64, 4
        $region52: #{tpu_custom_call.1} parent=11 // pred_fallthru
          _
        // Predicated region
        $region53: #{tpu_custom_call.1} parent=11 // pred_check
          %p488 = pneg %p325
        $region54: #{tpu_custom_call.1} parent=11 // pred_check_branch
          %490 = sbr.rel (%p488) target = $region56
        $region55: #{tpu_custom_call.1} parent=11 // pred_region
          _
        $region56: #{tpu_custom_call.1} parent=11 // pred_fallthru
          _
        // Predicated region
        $region57: #{tpu_custom_call.1} parent=11 // pred_check
          %p491 = pneg %p346
        $region58: #{tpu_custom_call.1} parent=11 // pred_check_branch
          %493 = sbr.rel (%p491) target = $region60
        $region59: #{tpu_custom_call.1} parent=11 // pred_region
          _
        $region60: #{tpu_custom_call.1} parent=11 // pred_fallthru
          _
        // Predicated region
        $region61: #{tpu_custom_call.1} parent=11 // pred_check
          %p494 = pneg %p367
        $region62: #{tpu_custom_call.1} parent=11 // pred_check_branch
          %496 = sbr.rel (%p494) target = $region64
        $region63: #{tpu_custom_call.1} parent=11 // pred_region
          _
        $region64: #{tpu_custom_call.1} parent=11 // pred_fallthru
          _
      $region12: #{tpu_custom_call.1} parent=5 // pred_fallthru
        _
      %p497 = scmp.lt.s32.totalorder %s30, 4
      // Predicated region
      $region65: #{tpu_custom_call.1} parent=5 // pred_check
        %p498 = pneg %p497
      $region66: #{tpu_custom_call.1} parent=5 // pred_check_branch
        %500 = sbr.rel (%p498) target = $region68
      $region67: #{tpu_custom_call.1} parent=5 // pred_region
        // Predicated region
        $region69: #{tpu_custom_call.1} parent=67 // pred_check
          %p501 = pneg %p83
        $region70: #{tpu_custom_call.1} parent=67 // pred_check_branch
          %503 = sbr.rel (%p501) target = $region72
        $region71: #{tpu_custom_call.1} parent=67 // pred_region
          %p504 = scmp.lt.s32.totalorder %s37, 1
          %s505 = scalar_select %p504, %s37, 1
          %s506 = smul.addr %s505, 4
          %s507 = smul.addr %s506, 8
          %s508 = scalar_lea.vmem %s1, %s507
        $region72: #{tpu_custom_call.1} parent=67 // pred_fallthru
          _
        // Predicated region
        $region73: #{tpu_custom_call.1} parent=67 // pred_check
          %p509 = pneg %p109
        $region74: #{tpu_custom_call.1} parent=67 // pred_check_branch
          %511 = sbr.rel (%p509) target = $region76
        $region75: #{tpu_custom_call.1} parent=67 // pred_region
          %s512 = sand.u32 %s99, 1
          %s513 = scalar_lea.sflag [#allocation6], %s512
          %s514 = sand.u32 %s99, 1
          %s515 = smul.addr %s514, 8
          %s516 = scalar_lea.vmem [#allocation9], %s515
          %s517 = smul.u32 2, %s38
          %s519 = ssub.s32 128, 128
          %520 = vsyncadd %s513, %s519
          %s521 = smul.addr %s517, 64
          %s522 = scalar_lea.hbm %s2, %s521
          %s523 = sshll.u32 %s516, 4
          %s524 = int_to_ptr.vmem [resolvable:$true] %s523
          %529 = dma.hbm_to_vmem [thread:$0]  %s522, 128, %s524, %s513, 64, 64, 4
        $region76: #{tpu_custom_call.1} parent=67 // pred_fallthru
          _
      $region68: #{tpu_custom_call.1} parent=5 // pred_fallthru
        _
      %p530 = scmp.le.s32.totalorder 1, %s30
      %p531 = scmp.lt.s32.totalorder %s30, 5
      %p532 = pnand %p530, %p531
      %p533 = pneg %p532
      // Predicated region
      $region77: #{tpu_custom_call.1} parent=5 // pred_check
        _
      $region78: #{tpu_custom_call.1} parent=5 // pred_check_branch
        %535 = sbr.rel (%p532) target = $region80
      $region79: #{tpu_custom_call.1} parent=5 // pred_region
        %s536 = ssub.s32 %s30, 1
        // Predicated region
        $region81: #{tpu_custom_call.1} parent=79 // pred_check
          %p537 = pneg %p63
        $region82: #{tpu_custom_call.1} parent=79 // pred_check_branch
          %539 = sbr.rel (%p537) target = $region84
        $region83: #{tpu_custom_call.1} parent=79 // pred_region
          %540 = dma.done [#allocation8], 16
        $region84: #{tpu_custom_call.1} parent=79 // pred_fallthru
          _
        %s541 = sand.u32 %s102, 1
        %s542 = scalar_lea.sflag [#allocation6], %s541
        %s543 = sand.u32 %s102, 1
        %s544 = smul.addr %s543, 8
        %s545 = scalar_lea.vmem [#allocation9], %s544
        // Predicated region
        $region85: #{tpu_custom_call.1} parent=79 // pred_check
          %p546 = pneg %p115
        $region86: #{tpu_custom_call.1} parent=79 // pred_check_branch
          %548 = sbr.rel (%p546) target = $region88
        $region87: #{tpu_custom_call.1} parent=79 // pred_region
          %549 = dma.done %s542, 128
        $region88: #{tpu_custom_call.1} parent=79 // pred_fallthru
          _
        // Predicated region
        $region89: #{tpu_custom_call.1} parent=79 // pred_check
          %p550 = pneg %p178
        $region90: #{tpu_custom_call.1} parent=79 // pred_check_branch
          %552 = sbr.rel (%p550) target = $region92
        $region91: #{tpu_custom_call.1} parent=79 // pred_region
          %553 = dma.done [#allocation11], 512
        $region92: #{tpu_custom_call.1} parent=79 // pred_fallthru
          _
        // Predicated region
        $region93: #{tpu_custom_call.1} parent=79 // pred_check
          %p554 = pneg %p220
        $region94: #{tpu_custom_call.1} parent=79 // pred_check_branch
          %556 = sbr.rel (%p554) target = $region96
        $region95: #{tpu_custom_call.1} parent=79 // pred_region
          %557 = dma.done [#allocation11], 512
        $region96: #{tpu_custom_call.1} parent=79 // pred_fallthru
          _
        // Predicated region
        $region97: #{tpu_custom_call.1} parent=79 // pred_check
          %p558 = pneg %p262
        $region98: #{tpu_custom_call.1} parent=79 // pred_check_branch
          %560 = sbr.rel (%p558) target = $region100
        $region99: #{tpu_custom_call.1} parent=79 // pred_region
          %561 = dma.done [#allocation14], 512
        $region100: #{tpu_custom_call.1} parent=79 // pred_fallthru
          _
        // Predicated region
        $region101: #{tpu_custom_call.1} parent=79 // pred_check
          %p562 = pneg %p304
        $region102: #{tpu_custom_call.1} parent=79 // pred_check_branch
          %564 = sbr.rel (%p562) target = $region104
        $region103: #{tpu_custom_call.1} parent=79 // pred_region
          %565 = dma.done [#allocation14], 512
        $region104: #{tpu_custom_call.1} parent=79 // pred_fallthru
          _
        %566 = sfence
        %p567 = pneg %p63
        %p568 = pneg %p60
        %p569 = scmp.lt.s32.totalorder %s39, 1
        %s570 = scalar_select %p569, %s39, 1
        %s571 = smul.addr %s570, 4
        %s572 = smul.addr %s571, 8
        %s573 = scalar_lea.vmem %s1, %s572
        %p574 = pneg %p89
        %p575 = pneg %p86
        %s576 = sand.u32 %s102, 1
        %s577 = scalar_lea.sflag [#allocation6], %s576
        %s578 = sand.u32 %s102, 1
        %s579 = smul.addr %s578, 8
        %s580 = scalar_lea.vmem [#allocation9], %s579
        %p581 = pneg %p115
        %p582 = pneg %p112
        %p583 = pneg %p136
        %p584 = pneg %p133
        %p585 = pneg %p157
        %p586 = pneg %p154
        %p587 = pneg %p178
        %p588 = pneg %p175
        %p589 = pneg %p199
        %p590 = pneg %p196
        %p591 = pneg %p220
        %p592 = pneg %p217
        %p593 = pneg %p241
        %p594 = pneg %p238
        %p595 = pneg %p262
        %p596 = pneg %p259
        %p597 = pneg %p283
        %p598 = pneg %p280
        %p599 = pneg %p304
        %p600 = pneg %p301
        %p601 = pneg %p325
        %p602 = pneg %p322
        %p603 = pneg %p346
        %p604 = pneg %p343
        %p605 = pneg %p367
        %p606 = pneg %p364
        %p607 = pneg %p395
        %p608 = pneg %p392
        %s609 = sand.u32 %s382, 1
        %s610 = scalar_lea.sflag [#allocation7], %s609
        %s611 = sand.u32 %s382, 1
        %s612 = smul.addr %s611, 16
        %s613 = scalar_lea.vmem [#allocation16], %s612
        %p614 = scmp.lt.s32.totalorder %s39, 1
        %s615 = scalar_select %p614, %s39, 1
        %s616 = smul.addr %s615, 4
        %s617 = smul.addr %s616, 8
        %s618 = scalar_lea.vmem %s1, %s617
        %s619 = smul.u32 2, %s40
        %s620 = smul.u32 2, %s40
        %s622 = sld [smem:[#allocation5]]
        %s623 = sld [smem:[#allocation5 + $0x1]]
        %s624 = sld [smem:[#allocation5 + $0x2]]
        %s625 = sld [smem:[#allocation5 + $0x3]]
        %p626 = scmp.eq.s32.totalorder %s40, 0
        // Predicated region
        $region105: #{tpu_custom_call.1} parent=79 // pred_check
          %p627 = pneg %p626
        $region106: #{tpu_custom_call.1} parent=79 // pred_check_branch
          %629 = sbr.rel (%p627) target = $region108
        $region107: #{tpu_custom_call.1} parent=79 // pred_region
          %v630 = vld [vmem:[%s618] sm:$0xff]
          %v631 = vld [vmem:[%s618 + $0x8] sm:$0xff]
          %v632 = vld [vmem:[%s618 + $0x10] sm:$0xff]
          %v633 = vld [vmem:[%s618 + $0x18] sm:$0xff]
          %vm634 = vcmask 523264
          %v635 = vsel %vm634, %v630, 0.0
          %636 = vadd.xlane.f32.xlu0 %v635
          %v637 = vpop.xlane.xlu0 %636
          %v638 = vsel %vm634, %v631, 0.0
          %639 = vadd.xlane.f32.xlu0 %v638
          %v640 = vpop.xlane.xlu0 %639
          %v641 = vsel %vm634, %v632, 0.0
          %642 = vadd.xlane.f32.xlu0 %v641
          %v643 = vpop.xlane.xlu0 %642
          %v644 = vsel %vm634, %v633, 0.0
          %645 = vadd.xlane.f32.xlu0 %v644
          %v646 = vpop.xlane.xlu0 %645
          %v647 = vrcp.pop 64.0
          %v648 = vmul.f32 %v637, %v647
          %v649 = vmul.f32 %v640, %v647
          %v650 = vmul.f32 %v643, %v647
          %v651 = vmul.f32 %v646, %v647
          %v652 = vsub.f32 %v630, %v648
          %v653 = vsub.f32 %v631, %v649
          %v654 = vsub.f32 %v632, %v650
          %v655 = vsub.f32 %v633, %v651
          %v656 = vmul.f32 %v652, %v652
          %v657 = vmul.f32 %v653, %v653
          %v658 = vmul.f32 %v654, %v654
          %v659 = vmul.f32 %v655, %v655
          %v660 = vsel %vm634, %v656, 0.0
          %661 = vadd.xlane.f32.xlu0 %v660
          %v662 = vpop.xlane.xlu0 %661
          %v663 = vsel %vm634, %v657, 0.0
          %664 = vadd.xlane.f32.xlu0 %v663
          %v665 = vpop.xlane.xlu0 %664
          %v666 = vsel %vm634, %v658, 0.0
          %667 = vadd.xlane.f32.xlu0 %v666
          %v668 = vpop.xlane.xlu0 %667
          %v669 = vsel %vm634, %v659, 0.0
          %670 = vadd.xlane.f32.xlu0 %v669
          %v671 = vpop.xlane.xlu0 %670
          %v672 = vmul.f32 %v662, 0.015873017
          %v673 = vmul.f32 %v665, 0.015873017
          %v674 = vmul.f32 %v668, 0.015873017
          %v675 = vmul.f32 %v671, 0.015873017
          %v676 = vrsqrt.pop %v672
          %v677 = vmul.f32 %v672, %v676
          %vm678 = vcmp.eq.f32.partialorder %v672, inf
          %v679 = vsel %vm678, %v672, %v677
          %vm680 = vcmp.eq.f32.partialorder %v672, 0.0
          %v681 = vand.u32 %v672, 2147483648
          %v682 = vsel %vm680, %v681, %v679
          %v683 = vrsqrt.pop %v673
          %v684 = vmul.f32 %v673, %v683
          %vm685 = vcmp.eq.f32.partialorder %v673, inf
          %v686 = vsel %vm685, %v673, %v684
          %vm687 = vcmp.eq.f32.partialorder %v673, 0.0
          %v688 = vand.u32 %v673, 2147483648
          %v689 = vsel %vm687, %v688, %v686
          %v690 = vrsqrt.pop %v674
          %v691 = vmul.f32 %v674, %v690
          %vm692 = vcmp.eq.f32.partialorder %v674, inf
          %v693 = vsel %vm692, %v674, %v691
          %vm694 = vcmp.eq.f32.partialorder %v674, 0.0
          %v695 = vand.u32 %v674, 2147483648
          %v696 = vsel %vm694, %v695, %v693
          %v697 = vrsqrt.pop %v675
          %v698 = vmul.f32 %v675, %v697
          %vm699 = vcmp.eq.f32.partialorder %v675, inf
          %v700 = vsel %vm699, %v675, %v698
          %vm701 = vcmp.eq.f32.partialorder %v675, 0.0
          %v702 = vand.u32 %v675, 2147483648
          %v703 = vsel %vm701, %v702, %v700
          %v704 = vadd.f32 %v682, 1e-06
          %v705 = vadd.f32 %v689, 1e-06
          %v706 = vadd.f32 %v696, 1e-06
          %v707 = vadd.f32 %v703, 1e-06
          %v708 = vrcp.pop %v704
          %v709 = vmul.f32 1.0, %v708
          %v710 = vrcp.pop %v705
          %v711 = vmul.f32 1.0, %v710
          %v712 = vrcp.pop %v706
          %v713 = vmul.f32 1.0, %v712
          %v714 = vrcp.pop %v707
          %v715 = vmul.f32 1.0, %v714
          %v716 = vstv %s622
          %v717 = vmul.f32 %v716, %v652
          %v718 = vmul.f32 %v716, %v653
          %v719 = vmul.f32 %v716, %v654
          %v720 = vmul.f32 %v716, %v655
          %v721 = vmul.f32 %v717, %v709
          %v722 = vmul.f32 %v718, %v711
          %v723 = vmul.f32 %v719, %v713
          %v724 = vmul.f32 %v720, %v715
          %v725 = vstv %s623
          %v726 = vadd.f32 %v721, %v725
          %v727 = vadd.f32 %v722, %v725
          %v728 = vadd.f32 %v723, %v725
          %v729 = vadd.f32 %v724, %v725
          %v730 = vpack.c.bf16 %v727, %v726
          %v731 = vpack.c.bf16 %v729, %v728
          %v732 = vld [vmem:[#allocation10] sm:$0xf]
          %v733 = vld [vmem:[#allocation10 + $0x4] sm:$0xf]
          %v734 = vld [vmem:[#allocation10 + $0x8] sm:$0xf]
          %v735 = vld [vmem:[#allocation10 + $0xc] sm:$0xf]
          %v736 = vld [vmem:[#allocation10 + $0x10] sm:$0xf]
          %v737 = vld [vmem:[#allocation10 + $0x14] sm:$0xf]
          %v738 = vld [vmem:[#allocation10 + $0x18] sm:$0xf]
          %v739 = vld [vmem:[#allocation10 + $0x1c] sm:$0xf]
          %v740 = vld [vmem:[%s6] sm:$0x1]
          %v742 = vlaneseq
          %v743 = vshrl.u32 %v742, 7
          %v744 = vsub.s32 0, %v743
          %v745 = vrot.slane %v740, %v744
          %v755 = vunpack.c.l.b16 %v732
          %v756 = vunpack.c.l.b16 %v733
          %v757 = vunpack.c.l.b16 %v734
          %v758 = vunpack.c.l.b16 %v735
          %v759 = vunpack.c.l.b16 %v736
          %v760 = vunpack.c.l.b16 %v737
          %v761 = vunpack.c.l.b16 %v738
          %v762 = vunpack.c.l.b16 %v739
          %v763 = vpack.c.b16 %v756, %v755
          %v764 = vpack.c.b16 %v758, %v757
          %v765 = vpack.c.b16 %v760, %v759
          %v766 = vpack.c.b16 %v762, %v761
          %v772 = vsel %vm634, %v730, 0
          %v775 = vsel %vm634, %v731, 0
          %777 = vmatprep.subr.bf16.mxu0 0
          %778 = vmatpush1.bf16.msra.mxu0 0
          %779 = vmatprep.subr.bf16.mxu0 0
          %780 = vmatpush1.bf16.msra.mxu0 0
          %781 = vmatprep.subr.bf16.mxu0 0
          %782 = vmatpush1.bf16.msra.mxu0 0
          %783 = vmatprep.subr.bf16.mxu0 0
          %784 = vmatpush1.bf16.msra.mxu0 0
          %785 = vmatprep.subr.bf16.mxu0 0
          %786 = vmatpush1.bf16.msra.mxu0 %v766
          %787 = vmatprep.subr.bf16.mxu0 0
          %788 = vmatpush1.bf16.msra.mxu0 %v765
          %789 = vmatprep.subr.bf16.mxu0 0
          %790 = vmatpush1.bf16.msra.mxu0 %v764
          %791 = vmatprep.subr.bf16.mxu0 0
          %792 = vmatpush1.bf16.msra.mxu0 %v763
          %793 = vmatprep.subr.bf16.mxu0 0
          %794 = vmatpush2.bf16.msra.mxu0 0
          %795 = vmatprep.subr.bf16.mxu0 0
          %796 = vmatpush2.bf16.msra.mxu0 0
          %797 = vmatprep.subr.bf16.mxu0 0
          %798 = vmatpush2.bf16.msra.mxu0 0
          %799 = vmatprep.subr.bf16.mxu0 0
          %800 = vmatpush2.bf16.msra.mxu0 0
          %801 = vmatprep.subr.bf16.mxu0 0
          %802 = vmatpush2.bf16.msra.mxu0 0
          %803 = vmatprep.subr.bf16.mxu0 0
          %804 = vmatpush2.bf16.msra.mxu0 0
          %805 = vmatprep.subr.bf16.mxu0 0
          %806 = vmatpush2.bf16.msra.mxu0 0
          %807 = vmatprep.subr.bf16.mxu0 0
          %808 = vmatpush2.bf16.msra.mxu0 0
          %809 = vmatprep.mubr.bf16.mxu0 0
          %810 = vmatmul.mubr.bf16.gmra.mxu0 %v772
          %v811 = vpop.f32.mrf.mxu0
          %v812 = vadd.f32 %v745, %v811
          %v813 = vpop.f32.mrf.mxu0
          %v814 = vpop.f32.mrf.mxu0
          %v815 = vadd.f32 %v745, %v814
          %v816 = vpop.f32.mrf.mxu0
          %817 = vmatprep.mubr.bf16.mxu0 0
          %818 = vmatmul.mubr.bf16.gmra.mxu0 %v775
          %v819 = vpop.f32.mrf.mxu0
          %v820 = vadd.f32 %v745, %v819
          %v821 = vpop.f32.mrf.mxu0
          %v822 = vpop.f32.mrf.mxu0
          %v823 = vadd.f32 %v745, %v822
          %v824 = vpop.f32.mrf.mxu0
          %825 = vdwg.mxu0
          %v826 = vld [vmem:[#allocation12] sm:$0xf]
          %v827 = vld [vmem:[#allocation12 + $0x4] sm:$0xf]
          %v828 = vld [vmem:[#allocation12 + $0x8] sm:$0xf]
          %v829 = vld [vmem:[#allocation12 + $0xc] sm:$0xf]
          %v830 = vld [vmem:[#allocation12 + $0x10] sm:$0xf]
          %v831 = vld [vmem:[#allocation12 + $0x14] sm:$0xf]
          %v832 = vld [vmem:[#allocation12 + $0x18] sm:$0xf]
          %v833 = vld [vmem:[#allocation12 + $0x1c] sm:$0xf]
          %v834 = vld [vmem:[%s8] sm:$0x1]
          %v836 = vlaneseq
          %v837 = vshrl.u32 %v836, 7
          %v838 = vsub.s32 0, %v837
          %v839 = vrot.slane %v834, %v838
          %v849 = vunpack.c.l.b16 %v826
          %v850 = vunpack.c.l.b16 %v827
          %v851 = vunpack.c.l.b16 %v828
          %v852 = vunpack.c.l.b16 %v829
          %v853 = vunpack.c.l.b16 %v830
          %v854 = vunpack.c.l.b16 %v831
          %v855 = vunpack.c.l.b16 %v832
          %v856 = vunpack.c.l.b16 %v833
          %v857 = vpack.c.b16 %v850, %v849
          %v858 = vpack.c.b16 %v852, %v851
          %v859 = vpack.c.b16 %v854, %v853
          %v860 = vpack.c.b16 %v856, %v855
          %865 = vmatprep.subr.bf16.mxu0 0
          %866 = vmatpush1.bf16.msra.mxu0 0
          %867 = vmatprep.subr.bf16.mxu0 0
          %868 = vmatpush1.bf16.msra.mxu0 0
          %869 = vmatprep.subr.bf16.mxu0 0
          %870 = vmatpush1.bf16.msra.mxu0 0
          %871 = vmatprep.subr.bf16.mxu0 0
          %872 = vmatpush1.bf16.msra.mxu0 0
          %873 = vmatprep.subr.bf16.mxu0 0
          %874 = vmatpush1.bf16.msra.mxu0 %v860
          %875 = vmatprep.subr.bf16.mxu0 0
          %876 = vmatpush1.bf16.msra.mxu0 %v859
          %877 = vmatprep.subr.bf16.mxu0 0
          %878 = vmatpush1.bf16.msra.mxu0 %v858
          %879 = vmatprep.subr.bf16.mxu0 0
          %880 = vmatpush1.bf16.msra.mxu0 %v857
          %881 = vmatprep.subr.bf16.mxu0 0
          %882 = vmatpush2.bf16.msra.mxu0 0
          %883 = vmatprep.subr.bf16.mxu0 0
          %884 = vmatpush2.bf16.msra.mxu0 0
          %885 = vmatprep.subr.bf16.mxu0 0
          %886 = vmatpush2.bf16.msra.mxu0 0
          %887 = vmatprep.subr.bf16.mxu0 0
          %888 = vmatpush2.bf16.msra.mxu0 0
          %889 = vmatprep.subr.bf16.mxu0 0
          %890 = vmatpush2.bf16.msra.mxu0 0
          %891 = vmatprep.subr.bf16.mxu0 0
          %892 = vmatpush2.bf16.msra.mxu0 0
          %893 = vmatprep.subr.bf16.mxu0 0
          %894 = vmatpush2.bf16.msra.mxu0 0
          %895 = vmatprep.subr.bf16.mxu0 0
          %896 = vmatpush2.bf16.msra.mxu0 0
          %897 = vmatprep.mubr.bf16.mxu0 0
          %898 = vmatmul.mubr.bf16.gmra.mxu0 %v772
          %v899 = vpop.f32.mrf.mxu0
          %v900 = vadd.f32 %v839, %v899
          %v901 = vpop.f32.mrf.mxu0
          %v902 = vpop.f32.mrf.mxu0
          %v903 = vadd.f32 %v839, %v902
          %v904 = vpop.f32.mrf.mxu0
          %905 = vmatprep.mubr.bf16.mxu0 0
          %906 = vmatmul.mubr.bf16.gmra.mxu0 %v775
          %v907 = vpop.f32.mrf.mxu0
          %v908 = vadd.f32 %v839, %v907
          %v909 = vpop.f32.mrf.mxu0
          %v910 = vpop.f32.mrf.mxu0
          %v911 = vadd.f32 %v839, %v910
          %v912 = vpop.f32.mrf.mxu0
          %913 = vdwg.mxu0
          %914 = vxpose.xlu0.b32.start [1/16] %v812, 128
          %915 = vxpose.xlu0.b32.cont [2/16] %v815, 128
          %916 = vxpose.xlu0.b32.cont [3/16] %v820, 128
          %917 = vxpose.xlu0.b32.cont [4/16] %v823, 128
          %918 = vxpose.xlu0.b32.cont [5/16] 0.0, 128
          %919 = vxpose.xlu0.b32.cont [6/16] 0.0, 128
          %920 = vxpose.xlu0.b32.cont [7/16] 0.0, 128
          %921 = vxpose.xlu0.b32.cont [8/16] 0.0, 128
          %922 = vxpose.xlu0.b32.cont [9/16] 0.0, 128
          %923 = vxpose.xlu0.b32.cont [10/16] 0.0, 128
          %924 = vxpose.xlu0.b32.cont [11/16] 0.0, 128
          %925 = vxpose.xlu0.b32.cont [12/16] 0.0, 128
          %926 = vxpose.xlu0.b32.cont [13/16] 0.0, 128
          %927 = vxpose.xlu0.b32.cont [14/16] 0.0, 128
          %928 = vxpose.xlu0.b32.cont [15/16] 0.0, 128
          %929 = vxpose.xlu0.b32.end [16/16] 0.0, 128
          %v930 = vpop.trf.xlu0
          %v931 = vpop.trf.xlu0
          %v932 = vpop.trf.xlu0
          %v933 = vpop.trf.xlu0
          %v934 = vpop.trf.xlu0
          %v935 = vpop.trf.xlu0
          %v936 = vpop.trf.xlu0
          %v937 = vpop.trf.xlu0
          %v938 = vpop.trf.xlu0
          %v939 = vpop.trf.xlu0
          %v940 = vpop.trf.xlu0
          %v941 = vpop.trf.xlu0
          %v942 = vpop.trf.xlu0
          %v943 = vpop.trf.xlu0
          %v944 = vpop.trf.xlu0
          %v945 = vpop.trf.xlu0
          %v946 = vpack.c.bf16 %v931, %v930
          %v947 = vpack.c.bf16 %v933, %v932
          %v948 = vpack.c.bf16 %v935, %v934
          %v949 = vpack.c.bf16 %v937, %v936
          %v954 = vunpack.c.l.b16 %v946
          %v955 = vunpack.c.h.b16 %v946
          %v956 = vunpack.c.l.b16 %v947
          %v957 = vunpack.c.h.b16 %v947
          %v958 = vunpack.c.l.b16 %v948
          %v959 = vunpack.c.h.b16 %v948
          %v960 = vunpack.c.l.b16 %v949
          %v961 = vunpack.c.h.b16 %v949
          %v962 = vpack.c.b16 %v954, %v954
          %v963 = vpack.c.b16 %v955, %v955
          %v964 = vpack.c.b16 %v956, %v956
          %v965 = vpack.c.b16 %v957, %v957
          %v966 = vpack.c.b16 %v958, %v958
          %v967 = vpack.c.b16 %v959, %v959
          %v968 = vpack.c.b16 %v960, %v960
          %v969 = vpack.c.b16 %v961, %v961
          %vm978 = vcmask 257024
          %979 = vst.msk [vmem:[#allocation2] sm:$0xf] %vm978, %v962
          %980 = vst.msk [vmem:[#allocation2 + $0x4] sm:$0xf] %vm978, %v963
          %981 = vst.msk [vmem:[#allocation2 + $0x8] sm:$0xf] %vm978, %v964
          %982 = vst.msk [vmem:[#allocation2 + $0xc] sm:$0xf] %vm978, %v965
          %983 = vst.msk [vmem:[#allocation2 + $0x10] sm:$0xf] %vm978, %v966
          %984 = vst.msk [vmem:[#allocation2 + $0x14] sm:$0xf] %vm978, %v967
          %985 = vst.msk [vmem:[#allocation2 + $0x18] sm:$0xf] %vm978, %v968
          %986 = vst.msk [vmem:[#allocation2 + $0x1c] sm:$0xf] %vm978, %v969
          %v987 = vpack.c.bf16 %v903, %v900
          %v988 = vpack.c.bf16 %v911, %v908
          %v991 = vunpack.c.l.b16 %v987
          %v992 = vunpack.c.h.b16 %v987
          %v993 = vunpack.c.l.b16 %v988
          %v994 = vunpack.c.h.b16 %v988
          %v995 = vpack.c.b16 %v991, %v991
          %v996 = vpack.c.b16 %v992, %v992
          %v997 = vpack.c.b16 %v993, %v993
          %v998 = vpack.c.b16 %v994, %v994
          %vm1003 = vcmask 519168
          %1004 = vst.msk [vmem:[#allocation3] sm:$0xf] %vm1003, %v995
          %1005 = vst.msk [vmem:[#allocation3 + $0x4] sm:$0xf] %vm1003, %v996
          %1006 = vst.msk [vmem:[#allocation3 + $0x8] sm:$0xf] %vm1003, %v997
          %1007 = vst.msk [vmem:[#allocation3 + $0xc] sm:$0xf] %vm1003, %v998
        $region108: #{tpu_custom_call.1} parent=79 // pred_fallthru
          _
        %s1008 = smul.u32 %s40, 16
        %s1009 = scalar_lea.vmem %s618, %s1008
        %v1010 = vld [vmem:[%s1009] sm:$0xff]
        %v1011 = vld [vmem:[%s1009 + $0x8] sm:$0xff]
        %vm1012 = vcmask 523264
        %v1013 = vsel %vm1012, %v1010, 0.0
        %1014 = vadd.xlane.f32.xlu0 %v1013
        %v1015 = vpop.xlane.xlu0 %1014
        %v1016 = vsel %vm1012, %v1011, 0.0
        %1017 = vadd.xlane.f32.xlu0 %v1016
        %v1018 = vpop.xlane.xlu0 %1017
        %v1019 = vrcp.pop 64.0
        %v1020 = vmul.f32 %v1015, %v1019
        %v1021 = vmul.f32 %v1018, %v1019
        %v1022 = vsub.f32 %v1010, %v1020
        %v1023 = vsub.f32 %v1011, %v1021
        %v1024 = vmul.f32 %v1022, %v1022
        %v1025 = vmul.f32 %v1023, %v1023
        %v1026 = vsel %vm1012, %v1024, 0.0
        %1027 = vadd.xlane.f32.xlu0 %v1026
        %v1028 = vpop.xlane.xlu0 %1027
        %v1029 = vsel %vm1012, %v1025, 0.0
        %1030 = vadd.xlane.f32.xlu0 %v1029
        %v1031 = vpop.xlane.xlu0 %1030
        %v1032 = vmul.f32 %v1028, 0.015873017
        %v1033 = vmul.f32 %v1031, 0.015873017
        %v1034 = vrsqrt.pop %v1032
        %v1035 = vmul.f32 %v1032, %v1034
        %vm1036 = vcmp.eq.f32.partialorder %v1032, inf
        %v1037 = vsel %vm1036, %v1032, %v1035
        %vm1038 = vcmp.eq.f32.partialorder %v1032, 0.0
        %v1039 = vand.u32 %v1032, 2147483648
        %v1040 = vsel %vm1038, %v1039, %v1037
        %v1041 = vrsqrt.pop %v1033
        %v1042 = vmul.f32 %v1033, %v1041
        %vm1043 = vcmp.eq.f32.partialorder %v1033, inf
        %v1044 = vsel %vm1043, %v1033, %v1042
        %vm1045 = vcmp.eq.f32.partialorder %v1033, 0.0
        %v1046 = vand.u32 %v1033, 2147483648
        %v1047 = vsel %vm1045, %v1046, %v1044
        %v1048 = vadd.f32 %v1040, 1e-06
        %v1049 = vadd.f32 %v1047, 1e-06
        %v1050 = vrcp.pop %v1048
        %v1051 = vmul.f32 1.0, %v1050
        %v1052 = vrcp.pop %v1049
        %v1053 = vmul.f32 1.0, %v1052
        %v1054 = vstv %s622
        %v1055 = vmul.f32 %v1054, %v1022
        %v1056 = vmul.f32 %v1054, %v1023
        %v1057 = vmul.f32 %v1055, %v1051
        %v1058 = vmul.f32 %v1056, %v1053
        %v1059 = vstv %s623
        %v1060 = vadd.f32 %v1057, %v1059
        %v1061 = vadd.f32 %v1058, %v1059
        %v1062 = vpack.c.bf16 %v1061, %v1060
        %v1063 = vld [vmem:[%s3] sm:$0xf]
        %v1064 = vld [vmem:[%s3 + $0x4] sm:$0xf]
        %v1065 = vld [vmem:[%s3 + $0x8] sm:$0xf]
        %v1066 = vld [vmem:[%s3 + $0xc] sm:$0xf]
        %v1067 = vld [vmem:[%s3 + $0x10] sm:$0xf]
        %v1068 = vld [vmem:[%s3 + $0x14] sm:$0xf]
        %v1069 = vld [vmem:[%s3 + $0x18] sm:$0xf]
        %v1070 = vld [vmem:[%s3 + $0x1c] sm:$0xf]
        %v1071 = vld [vmem:[%s4] sm:$0x1]
        %v1073 = vlaneseq
        %v1074 = vshrl.u32 %v1073, 7
        %v1075 = vsub.s32 0, %v1074
        %v1076 = vrot.slane %v1071, %v1075
        %v1086 = vunpack.c.l.b16 %v1063
        %v1087 = vunpack.c.l.b16 %v1064
        %v1088 = vunpack.c.l.b16 %v1065
        %v1089 = vunpack.c.l.b16 %v1066
        %v1090 = vunpack.c.l.b16 %v1067
        %v1091 = vunpack.c.l.b16 %v1068
        %v1092 = vunpack.c.l.b16 %v1069
        %v1093 = vunpack.c.l.b16 %v1070
        %v1094 = vpack.c.b16 %v1087, %v1086
        %v1095 = vpack.c.b16 %v1089, %v1088
        %v1096 = vpack.c.b16 %v1091, %v1090
        %v1097 = vpack.c.b16 %v1093, %v1092
        %v1103 = vsel %vm1012, %v1062, 0
        %1105 = vmatprep.subr.bf16.mxu0 0
        %1106 = vmatpush1.bf16.msra.mxu0 0
        %1107 = vmatprep.subr.bf16.mxu0 0
        %1108 = vmatpush1.bf16.msra.mxu0 0
        %1109 = vmatprep.subr.bf16.mxu0 0
        %1110 = vmatpush1.bf16.msra.mxu0 0
        %1111 = vmatprep.subr.bf16.mxu0 0
        %1112 = vmatpush1.bf16.msra.mxu0 0
        %1113 = vmatprep.subr.bf16.mxu0 0
        %1114 = vmatpush1.bf16.msra.mxu0 %v1097
        %1115 = vmatprep.subr.bf16.mxu0 0
        %1116 = vmatpush1.bf16.msra.mxu0 %v1096
        %1117 = vmatprep.subr.bf16.mxu0 0
        %1118 = vmatpush1.bf16.msra.mxu0 %v1095
        %1119 = vmatprep.subr.bf16.mxu0 0
        %1120 = vmatpush1.bf16.msra.mxu0 %v1094
        %1121 = vmatprep.subr.bf16.mxu0 0
        %1122 = vmatpush2.bf16.msra.mxu0 0
        %1123 = vmatprep.subr.bf16.mxu0 0
        %1124 = vmatpush2.bf16.msra.mxu0 0
        %1125 = vmatprep.subr.bf16.mxu0 0
        %1126 = vmatpush2.bf16.msra.mxu0 0
        %1127 = vmatprep.subr.bf16.mxu0 0
        %1128 = vmatpush2.bf16.msra.mxu0 0
        %1129 = vmatprep.subr.bf16.mxu0 0
        %1130 = vmatpush2.bf16.msra.mxu0 0
        %1131 = vmatprep.subr.bf16.mxu0 0
        %1132 = vmatpush2.bf16.msra.mxu0 0
        %1133 = vmatprep.subr.bf16.mxu0 0
        %1134 = vmatpush2.bf16.msra.mxu0 0
        %1135 = vmatprep.subr.bf16.mxu0 0
        %1136 = vmatpush2.bf16.msra.mxu0 0
        %1137 = vmatprep.mubr.bf16.mxu0 0
        %1138 = vmatmul.mubr.bf16.gmra.mxu0 %v1103
        %v1139 = vpop.f32.mrf.mxu0
        %v1140 = vadd.f32 %v1076, %v1139
        %v1141 = vpop.f32.mrf.mxu0
        %v1142 = vpop.f32.mrf.mxu0
        %v1143 = vadd.f32 %v1076, %v1142
        %v1144 = vpop.f32.mrf.mxu0
        %1145 = vdwg.mxu0
        %v1146 = vpack.c.bf16 %v1143, %v1140
        %v1147 = vld [vmem:[%s545] sm:$0xf]
        %v1148 = vld [vmem:[%s545 + $0x4] sm:$0xf]
        %v1149 = vunpack.c.l.bf16 %v1147
        %v1150 = vunpack.c.l.bf16 %v1148
        %v1151 = vld [vmem:[#allocation2] sm:$0xf]
        %v1152 = vld [vmem:[#allocation2 + $0x4] sm:$0xf]
        %v1155 = vunpack.c.l.b16 %v1151
        %v1156 = vunpack.c.l.b16 %v1152
        %v1157 = vpack.c.b16 %v1156, %v1155
        %vm1159 = vcmask 130048
        %v1161 = vsel %vm1159, %v1146, 0
        %1163 = vmatprep.subr.bf16.mxu0 0
        %1164 = vmatpush1.bf16.msra.mxu0 0
        %1165 = vmatprep.subr.bf16.mxu0 0
        %1166 = vmatpush1.bf16.msra.mxu0 0
        %1167 = vmatprep.subr.bf16.mxu0 0
        %1168 = vmatpush1.bf16.msra.mxu0 0
        %1169 = vmatprep.subr.bf16.mxu0 0
        %1170 = vmatpush1.bf16.msra.mxu0 0
        %1171 = vmatprep.subr.bf16.mxu0 0
        %1172 = vmatpush1.bf16.msra.mxu0 0
        %1173 = vmatprep.subr.bf16.mxu0 0
        %1174 = vmatpush1.bf16.msra.mxu0 0
        %1175 = vmatprep.subr.bf16.mxu0 0
        %1176 = vmatpush1.bf16.msra.mxu0 0
        %1177 = vmatprep.subr.bf16.mxu0 0
        %1178 = vmatpush1.bf16.msra.mxu0 %v1157
        %1179 = vmatprep.subr.bf16.mxu0 0
        %1180 = vmatpush2.bf16.msra.mxu0 0
        %1181 = vmatprep.subr.bf16.mxu0 0
        %1182 = vmatpush2.bf16.msra.mxu0 0
        %1183 = vmatprep.subr.bf16.mxu0 0
        %1184 = vmatpush2.bf16.msra.mxu0 0
        %1185 = vmatprep.subr.bf16.mxu0 0
        %1186 = vmatpush2.bf16.msra.mxu0 0
        %1187 = vmatprep.subr.bf16.mxu0 0
        %1188 = vmatpush2.bf16.msra.mxu0 0
        %1189 = vmatprep.subr.bf16.mxu0 0
        %1190 = vmatpush2.bf16.msra.mxu0 0
        %1191 = vmatprep.subr.bf16.mxu0 0
        %1192 = vmatpush2.bf16.msra.mxu0 0
        %1193 = vmatprep.subr.bf16.mxu0 0
        %1194 = vmatpush2.bf16.msra.mxu0 0
        %1195 = vmatprep.mubr.bf16.mxu0 0
        %1196 = vmatmul.mubr.bf16.gmra.mxu0 %v1161
        %v1197 = vpop.f32.mrf.mxu0
        %v1198 = vadd.f32 %v1149, %v1197
        %v1199 = vpop.f32.mrf.mxu0
        %v1200 = vpop.f32.mrf.mxu0
        %v1201 = vadd.f32 %v1150, %v1200
        %v1202 = vpop.f32.mrf.mxu0
        %1203 = vdwg.mxu0
        %vm1204 = vcmask 261120
        %v1205 = vsel %vm1204, %v1198, -inf
        %1206 = vmax.xlane.f32.xlu0 %v1205
        %v1207 = vpop.xlane.xlu0 %1206
        %v1208 = vsel %vm1204, %v1201, -inf
        %1209 = vmax.xlane.f32.xlu0 %v1208
        %v1210 = vpop.xlane.xlu0 %1209
        %v1211 = vsub.f32 %v1198, %v1207
        %v1212 = vsub.f32 %v1201, %v1210
        %v1213 = vmul.f32 %v1211, 1.442695
        %v1214 = vpow.pop %v1213
        %v1215 = vmul.f32 %v1212, 1.442695
        %v1216 = vpow.pop %v1215
        %v1217 = vsel %vm1204, %v1214, 0.0
        %1218 = vadd.xlane.f32.xlu0 %v1217
        %v1219 = vpop.xlane.xlu0 %1218
        %v1220 = vsel %vm1204, %v1216, 0.0
        %1221 = vadd.xlane.f32.xlu0 %v1220
        %v1222 = vpop.xlane.xlu0 %1221
        %v1223 = vrcp.pop %v1219
        %v1224 = vrcp.pop %v1222
        %v1225 = vmul.f32 %v1214, %v1223
        %v1226 = vmul.f32 %v1216, %v1224
        %v1227 = vpack.c.bf16 %v1226, %v1225
        %v1228 = vld [vmem:[#allocation3] sm:$0xf]
        %v1229 = vld [vmem:[#allocation3 + $0x4] sm:$0xf]
        %v1230 = vld [vmem:[#allocation3 + $0x8] sm:$0xf]
        %v1231 = vld [vmem:[#allocation3 + $0xc] sm:$0xf]
        %v1236 = vunpack.c.l.b16 %v1228
        %v1237 = vunpack.c.l.b16 %v1229
        %v1238 = vunpack.c.l.b16 %v1230
        %v1239 = vunpack.c.l.b16 %v1231
        %v1240 = vpack.c.b16 %v1237, %v1236
        %v1241 = vpack.c.b16 %v1239, %v1238
        %v1245 = vsel %vm1204, %v1227, 0
        %1247 = vmatprep.subr.bf16.mxu0 0
        %1248 = vmatpush1.bf16.msra.mxu0 0
        %1249 = vmatprep.subr.bf16.mxu0 0
        %1250 = vmatpush1.bf16.msra.mxu0 0
        %1251 = vmatprep.subr.bf16.mxu0 0
        %1252 = vmatpush1.bf16.msra.mxu0 0
        %1253 = vmatprep.subr.bf16.mxu0 0
        %1254 = vmatpush1.bf16.msra.mxu0 0
        %1255 = vmatprep.subr.bf16.mxu0 0
        %1256 = vmatpush1.bf16.msra.mxu0 0
        %1257 = vmatprep.subr.bf16.mxu0 0
        %1258 = vmatpush1.bf16.msra.mxu0 0
        %1259 = vmatprep.subr.bf16.mxu0 0
        %1260 = vmatpush1.bf16.msra.mxu0 %v1241
        %1261 = vmatprep.subr.bf16.mxu0 0
        %1262 = vmatpush1.bf16.msra.mxu0 %v1240
        %1263 = vmatprep.subr.bf16.mxu0 0
        %1264 = vmatpush2.bf16.msra.mxu0 0
        %1265 = vmatprep.subr.bf16.mxu0 0
        %1266 = vmatpush2.bf16.msra.mxu0 0
        %1267 = vmatprep.subr.bf16.mxu0 0
        %1268 = vmatpush2.bf16.msra.mxu0 0
        %1269 = vmatprep.subr.bf16.mxu0 0
        %1270 = vmatpush2.bf16.msra.mxu0 0
        %1271 = vmatprep.subr.bf16.mxu0 0
        %1272 = vmatpush2.bf16.msra.mxu0 0
        %1273 = vmatprep.subr.bf16.mxu0 0
        %1274 = vmatpush2.bf16.msra.mxu0 0
        %1275 = vmatprep.subr.bf16.mxu0 0
        %1276 = vmatpush2.bf16.msra.mxu0 0
        %1277 = vmatprep.subr.bf16.mxu0 0
        %1278 = vmatpush2.bf16.msra.mxu0 0
        %1279 = vmatprep.mubr.bf16.mxu0 0
        %1280 = vmatmul.mubr.bf16.gmra.mxu0 %v1245
        %v1281 = vpop.f32.mrf.mxu0
        %v1282 = vadd.f32 0.0, %v1281
        %v1283 = vpop.f32.mrf.mxu0
        %v1284 = vpop.f32.mrf.mxu0
        %v1285 = vadd.f32 0.0, %v1284
        %v1286 = vpop.f32.mrf.mxu0
        %1287 = vdwg.mxu0
        %v1288 = vpack.c.bf16 %v1285, %v1282
        %v1290 = vunpack.c.l.b16 %v1288
        %v1291 = vunpack.c.h.b16 %v1288
        %v1292 = vpack.c.b16 %v1290, %v1290
        %v1293 = vpack.c.b16 %v1291, %v1291
        %vm1296 = vcmask 125952
        %1297 = vst.msk [vmem:[#allocation4] sm:$0xf] %vm1296, %v1292
        %1298 = vst.msk [vmem:[#allocation4 + $0x4] sm:$0xf] %vm1296, %v1293
        %v1299 = vld [vmem:[#allocation2 + $0x8] sm:$0xf]
        %v1300 = vld [vmem:[#allocation2 + $0xc] sm:$0xf]
        %1302 = vrot.lane.b32.xlu0 %v1146, 112
        %v1303 = vpop.permute.xlu0 %1302
        %v1306 = vunpack.c.l.b16 %v1299
        %v1307 = vunpack.c.l.b16 %v1300
        %v1308 = vpack.c.b16 %v1307, %v1306
        %v1311 = vsel %vm1159, %v1303, 0
        %1313 = vmatprep.subr.bf16.mxu0 0
        %1314 = vmatpush1.bf16.msra.mxu0 0
        %1315 = vmatprep.subr.bf16.mxu0 0
        %1316 = vmatpush1.bf16.msra.mxu0 0
        %1317 = vmatprep.subr.bf16.mxu0 0
        %1318 = vmatpush1.bf16.msra.mxu0 0
        %1319 = vmatprep.subr.bf16.mxu0 0
        %1320 = vmatpush1.bf16.msra.mxu0 0
        %1321 = vmatprep.subr.bf16.mxu0 0
        %1322 = vmatpush1.bf16.msra.mxu0 0
        %1323 = vmatprep.subr.bf16.mxu0 0
        %1324 = vmatpush1.bf16.msra.mxu0 0
        %1325 = vmatprep.subr.bf16.mxu0 0
        %1326 = vmatpush1.bf16.msra.mxu0 0
        %1327 = vmatprep.subr.bf16.mxu0 0
        %1328 = vmatpush1.bf16.msra.mxu0 %v1308
        %1329 = vmatprep.subr.bf16.mxu0 0
        %1330 = vmatpush2.bf16.msra.mxu0 0
        %1331 = vmatprep.subr.bf16.mxu0 0
        %1332 = vmatpush2.bf16.msra.mxu0 0
        %1333 = vmatprep.subr.bf16.mxu0 0
        %1334 = vmatpush2.bf16.msra.mxu0 0
        %1335 = vmatprep.subr.bf16.mxu0 0
        %1336 = vmatpush2.bf16.msra.mxu0 0
        %1337 = vmatprep.subr.bf16.mxu0 0
        %1338 = vmatpush2.bf16.msra.mxu0 0
        %1339 = vmatprep.subr.bf16.mxu0 0
        %1340 = vmatpush2.bf16.msra.mxu0 0
        %1341 = vmatprep.subr.bf16.mxu0 0
        %1342 = vmatpush2.bf16.msra.mxu0 0
        %1343 = vmatprep.subr.bf16.mxu0 0
        %1344 = vmatpush2.bf16.msra.mxu0 0
        %1345 = vmatprep.mubr.bf16.mxu0 0
        %1346 = vmatmul.mubr.bf16.gmra.mxu0 %v1311
        %v1347 = vpop.f32.mrf.mxu0
        %v1348 = vadd.f32 %v1149, %v1347
        %v1349 = vpop.f32.mrf.mxu0
        %v1350 = vpop.f32.mrf.mxu0
        %v1351 = vadd.f32 %v1150, %v1350
        %v1352 = vpop.f32.mrf.mxu0
        %1353 = vdwg.mxu0
        %v1354 = vsel %vm1204, %v1348, -inf
        %1355 = vmax.xlane.f32.xlu0 %v1354
        %v1356 = vpop.xlane.xlu0 %1355
        %v1357 = vsel %vm1204, %v1351, -inf
        %1358 = vmax.xlane.f32.xlu0 %v1357
        %v1359 = vpop.xlane.xlu0 %1358
        %v1360 = vsub.f32 %v1348, %v1356
        %v1361 = vsub.f32 %v1351, %v1359
        %v1362 = vmul.f32 %v1360, 1.442695
        %v1363 = vpow.pop %v1362
        %v1364 = vmul.f32 %v1361, 1.442695
        %v1365 = vpow.pop %v1364
        %v1366 = vsel %vm1204, %v1363, 0.0
        %1367 = vadd.xlane.f32.xlu0 %v1366
        %v1368 = vpop.xlane.xlu0 %1367
        %v1369 = vsel %vm1204, %v1365, 0.0
        %1370 = vadd.xlane.f32.xlu0 %v1369
        %v1371 = vpop.xlane.xlu0 %1370
        %v1372 = vrcp.pop %v1368
        %v1373 = vrcp.pop %v1371
        %v1374 = vmul.f32 %v1363, %v1372
        %v1375 = vmul.f32 %v1365, %v1373
        %v1376 = vpack.c.bf16 %v1375, %v1374
        %v1377 = vld [vmem:[#allocation3] sm:$0xf]
        %v1378 = vld [vmem:[#allocation3 + $0x4] sm:$0xf]
        %v1379 = vld [vmem:[#allocation3 + $0x8] sm:$0xf]
        %v1380 = vld [vmem:[#allocation3 + $0xc] sm:$0xf]
        %v1385 = vunpack.c.l.b16 %v1377
        %v1386 = vunpack.c.l.b16 %v1378
        %v1387 = vunpack.c.l.b16 %v1379
        %v1388 = vunpack.c.l.b16 %v1380
        %v1389 = vpack.c.b16 %v1386, %v1385
        %v1390 = vpack.c.b16 %v1388, %v1387
        %1391 = vrot.lane.b32.xlu0 %v1389, 112
        %v1392 = vpop.permute.xlu0 %1391
        %1393 = vrot.lane.b32.xlu0 %v1390, 112
        %v1394 = vpop.permute.xlu0 %1393
        %v1398 = vsel %vm1204, %v1376, 0
        %1400 = vmatprep.subr.bf16.mxu0 0
        %1401 = vmatpush1.bf16.msra.mxu0 0
        %1402 = vmatprep.subr.bf16.mxu0 0
        %1403 = vmatpush1.bf16.msra.mxu0 0
        %1404 = vmatprep.subr.bf16.mxu0 0
        %1405 = vmatpush1.bf16.msra.mxu0 0
        %1406 = vmatprep.subr.bf16.mxu0 0
        %1407 = vmatpush1.bf16.msra.mxu0 0
        %1408 = vmatprep.subr.bf16.mxu0 0
        %1409 = vmatpush1.bf16.msra.mxu0 0
        %1410 = vmatprep.subr.bf16.mxu0 0
        %1411 = vmatpush1.bf16.msra.mxu0 0
        %1412 = vmatprep.subr.bf16.mxu0 0
        %1413 = vmatpush1.bf16.msra.mxu0 %v1394
        %1414 = vmatprep.subr.bf16.mxu0 0
        %1415 = vmatpush1.bf16.msra.mxu0 %v1392
        %1416 = vmatprep.subr.bf16.mxu0 0
        %1417 = vmatpush2.bf16.msra.mxu0 0
        %1418 = vmatprep.subr.bf16.mxu0 0
        %1419 = vmatpush2.bf16.msra.mxu0 0
        %1420 = vmatprep.subr.bf16.mxu0 0
        %1421 = vmatpush2.bf16.msra.mxu0 0
        %1422 = vmatprep.subr.bf16.mxu0 0
        %1423 = vmatpush2.bf16.msra.mxu0 0
        %1424 = vmatprep.subr.bf16.mxu0 0
        %1425 = vmatpush2.bf16.msra.mxu0 0
        %1426 = vmatprep.subr.bf16.mxu0 0
        %1427 = vmatpush2.bf16.msra.mxu0 0
        %1428 = vmatprep.subr.bf16.mxu0 0
        %1429 = vmatpush2.bf16.msra.mxu0 0
        %1430 = vmatprep.subr.bf16.mxu0 0
        %1431 = vmatpush2.bf16.msra.mxu0 0
        %1432 = vmatprep.mubr.bf16.mxu0 0
        %1433 = vmatmul.mubr.bf16.gmra.mxu0 %v1398
        %v1434 = vpop.f32.mrf.mxu0
        %v1435 = vadd.f32 0.0, %v1434
        %v1436 = vpop.f32.mrf.mxu0
        %v1437 = vpop.f32.mrf.mxu0
        %v1438 = vadd.f32 0.0, %v1437
        %v1439 = vpop.f32.mrf.mxu0
        %1440 = vdwg.mxu0
        %v1441 = vpack.c.bf16 %v1438, %v1435
        %v1443 = vunpack.c.l.b16 %v1441
        %v1444 = vunpack.c.h.b16 %v1441
        %v1445 = vpack.c.b16 %v1443, %v1443
        %v1446 = vpack.c.b16 %v1444, %v1444
        %1447 = vrot.lane.b32.xlu0 %v1445, 16
        %v1448 = vpop.permute.xlu0 %1447
        %1449 = vrot.lane.b32.xlu0 %v1446, 16
        %v1450 = vpop.permute.xlu0 %1449
        %vm1453 = vcmask 257152
        %1454 = vst.msk [vmem:[#allocation4] sm:$0xf] %vm1453, %v1448
        %1455 = vst.msk [vmem:[#allocation4 + $0x4] sm:$0xf] %vm1453, %v1450
        %v1456 = vld [vmem:[#allocation2 + $0x10] sm:$0xf]
        %v1457 = vld [vmem:[#allocation2 + $0x14] sm:$0xf]
        %1458 = vrot.lane.b32.xlu0 %v1146, 96
        %v1459 = vpop.permute.xlu0 %1458
        %v1462 = vunpack.c.l.b16 %v1456
        %v1463 = vunpack.c.l.b16 %v1457
        %v1464 = vpack.c.b16 %v1463, %v1462
        %v1467 = vsel %vm1159, %v1459, 0
        %1469 = vmatprep.subr.bf16.mxu0 0
        %1470 = vmatpush1.bf16.msra.mxu0 0
        %1471 = vmatprep.subr.bf16.mxu0 0
        %1472 = vmatpush1.bf16.msra.mxu0 0
        %1473 = vmatprep.subr.bf16.mxu0 0
        %1474 = vmatpush1.bf16.msra.mxu0 0
        %1475 = vmatprep.subr.bf16.mxu0 0
        %1476 = vmatpush1.bf16.msra.mxu0 0
        %1477 = vmatprep.subr.bf16.mxu0 0
        %1478 = vmatpush1.bf16.msra.mxu0 0
        %1479 = vmatprep.subr.bf16.mxu0 0
        %1480 = vmatpush1.bf16.msra.mxu0 0
        %1481 = vmatprep.subr.bf16.mxu0 0
        %1482 = vmatpush1.bf16.msra.mxu0 0
        %1483 = vmatprep.subr.bf16.mxu0 0
        %1484 = vmatpush1.bf16.msra.mxu0 %v1464
        %1485 = vmatprep.subr.bf16.mxu0 0
        %1486 = vmatpush2.bf16.msra.mxu0 0
        %1487 = vmatprep.subr.bf16.mxu0 0
        %1488 = vmatpush2.bf16.msra.mxu0 0
        %1489 = vmatprep.subr.bf16.mxu0 0
        %1490 = vmatpush2.bf16.msra.mxu0 0
        %1491 = vmatprep.subr.bf16.mxu0 0
        %1492 = vmatpush2.bf16.msra.mxu0 0
        %1493 = vmatprep.subr.bf16.mxu0 0
        %1494 = vmatpush2.bf16.msra.mxu0 0
        %1495 = vmatprep.subr.bf16.mxu0 0
        %1496 = vmatpush2.bf16.msra.mxu0 0
        %1497 = vmatprep.subr.bf16.mxu0 0
        %1498 = vmatpush2.bf16.msra.mxu0 0
        %1499 = vmatprep.subr.bf16.mxu0 0
        %1500 = vmatpush2.bf16.msra.mxu0 0
        %1501 = vmatprep.mubr.bf16.mxu0 0
        %1502 = vmatmul.mubr.bf16.gmra.mxu0 %v1467
        %v1503 = vpop.f32.mrf.mxu0
        %v1504 = vadd.f32 %v1149, %v1503
        %v1505 = vpop.f32.mrf.mxu0
        %v1506 = vpop.f32.mrf.mxu0
        %v1507 = vadd.f32 %v1150, %v1506
        %v1508 = vpop.f32.mrf.mxu0
        %1509 = vdwg.mxu0
        %v1510 = vsel %vm1204, %v1504, -inf
        %1511 = vmax.xlane.f32.xlu0 %v1510
        %v1512 = vpop.xlane.xlu0 %1511
        %v1513 = vsel %vm1204, %v1507, -inf
        %1514 = vmax.xlane.f32.xlu0 %v1513
        %v1515 = vpop.xlane.xlu0 %1514
        %v1516 = vsub.f32 %v1504, %v1512
        %v1517 = vsub.f32 %v1507, %v1515
        %v1518 = vmul.f32 %v1516, 1.442695
        %v1519 = vpow.pop %v1518
        %v1520 = vmul.f32 %v1517, 1.442695
        %v1521 = vpow.pop %v1520
        %v1522 = vsel %vm1204, %v1519, 0.0
        %1523 = vadd.xlane.f32.xlu0 %v1522
        %v1524 = vpop.xlane.xlu0 %1523
        %v1525 = vsel %vm1204, %v1521, 0.0
        %1526 = vadd.xlane.f32.xlu0 %v1525
        %v1527 = vpop.xlane.xlu0 %1526
        %v1528 = vrcp.pop %v1524
        %v1529 = vrcp.pop %v1527
        %v1530 = vmul.f32 %v1519, %v1528
        %v1531 = vmul.f32 %v1521, %v1529
        %v1532 = vpack.c.bf16 %v1531, %v1530
        %v1533 = vld [vmem:[#allocation3] sm:$0xf]
        %v1534 = vld [vmem:[#allocation3 + $0x4] sm:$0xf]
        %v1535 = vld [vmem:[#allocation3 + $0x8] sm:$0xf]
        %v1536 = vld [vmem:[#allocation3 + $0xc] sm:$0xf]
        %v1541 = vunpack.c.l.b16 %v1533
        %v1542 = vunpack.c.l.b16 %v1534
        %v1543 = vunpack.c.l.b16 %v1535
        %v1544 = vunpack.c.l.b16 %v1536
        %v1545 = vpack.c.b16 %v1542, %v1541
        %v1546 = vpack.c.b16 %v1544, %v1543
        %1547 = vrot.lane.b32.xlu0 %v1545, 96
        %v1548 = vpop.permute.xlu0 %1547
        %1549 = vrot.lane.b32.xlu0 %v1546, 96
        %v1550 = vpop.permute.xlu0 %1549
        %v1554 = vsel %vm1204, %v1532, 0
        %1556 = vmatprep.subr.bf16.mxu0 0
        %1557 = vmatpush1.bf16.msra.mxu0 0
        %1558 = vmatprep.subr.bf16.mxu0 0
        %1559 = vmatpush1.bf16.msra.mxu0 0
        %1560 = vmatprep.subr.bf16.mxu0 0
        %1561 = vmatpush1.bf16.msra.mxu0 0
        %1562 = vmatprep.subr.bf16.mxu0 0
        %1563 = vmatpush1.bf16.msra.mxu0 0
        %1564 = vmatprep.subr.bf16.mxu0 0
        %1565 = vmatpush1.bf16.msra.mxu0 0
        %1566 = vmatprep.subr.bf16.mxu0 0
        %1567 = vmatpush1.bf16.msra.mxu0 0
        %1568 = vmatprep.subr.bf16.mxu0 0
        %1569 = vmatpush1.bf16.msra.mxu0 %v1550
        %1570 = vmatprep.subr.bf16.mxu0 0
        %1571 = vmatpush1.bf16.msra.mxu0 %v1548
        %1572 = vmatprep.subr.bf16.mxu0 0
        %1573 = vmatpush2.bf16.msra.mxu0 0
        %1574 = vmatprep.subr.bf16.mxu0 0
        %1575 = vmatpush2.bf16.msra.mxu0 0
        %1576 = vmatprep.subr.bf16.mxu0 0
        %1577 = vmatpush2.bf16.msra.mxu0 0
        %1578 = vmatprep.subr.bf16.mxu0 0
        %1579 = vmatpush2.bf16.msra.mxu0 0
        %1580 = vmatprep.subr.bf16.mxu0 0
        %1581 = vmatpush2.bf16.msra.mxu0 0
        %1582 = vmatprep.subr.bf16.mxu0 0
        %1583 = vmatpush2.bf16.msra.mxu0 0
        %1584 = vmatprep.subr.bf16.mxu0 0
        %1585 = vmatpush2.bf16.msra.mxu0 0
        %1586 = vmatprep.subr.bf16.mxu0 0
        %1587 = vmatpush2.bf16.msra.mxu0 0
        %1588 = vmatprep.mubr.bf16.mxu0 0
        %1589 = vmatmul.mubr.bf16.gmra.mxu0 %v1554
        %v1590 = vpop.f32.mrf.mxu0
        %v1591 = vadd.f32 0.0, %v1590
        %v1592 = vpop.f32.mrf.mxu0
        %v1593 = vpop.f32.mrf.mxu0
        %v1594 = vadd.f32 0.0, %v1593
        %v1595 = vpop.f32.mrf.mxu0
        %1596 = vdwg.mxu0
        %v1597 = vpack.c.bf16 %v1594, %v1591
        %v1599 = vunpack.c.l.b16 %v1597
        %v1600 = vunpack.c.h.b16 %v1597
        %v1601 = vpack.c.b16 %v1599, %v1599
        %v1602 = vpack.c.b16 %v1600, %v1600
        %1603 = vrot.lane.b32.xlu0 %v1601, 32
        %v1604 = vpop.permute.xlu0 %1603
        %1605 = vrot.lane.b32.xlu0 %v1602, 32
        %v1606 = vpop.permute.xlu0 %1605
        %vm1609 = vcmask 388352
        %1610 = vst.msk [vmem:[#allocation4] sm:$0xf] %vm1609, %v1604
        %1611 = vst.msk [vmem:[#allocation4 + $0x4] sm:$0xf] %vm1609, %v1606
        %v1612 = vld [vmem:[#allocation2 + $0x18] sm:$0xf]
        %v1613 = vld [vmem:[#allocation2 + $0x1c] sm:$0xf]
        %1614 = vrot.lane.b32.xlu0 %v1146, 80
        %v1615 = vpop.permute.xlu0 %1614
        %v1618 = vunpack.c.l.b16 %v1612
        %v1619 = vunpack.c.l.b16 %v1613
        %v1620 = vpack.c.b16 %v1619, %v1618
        %v1623 = vsel %vm1159, %v1615, 0
        %1625 = vmatprep.subr.bf16.mxu0 0
        %1626 = vmatpush1.bf16.msra.mxu0 0
        %1627 = vmatprep.subr.bf16.mxu0 0
        %1628 = vmatpush1.bf16.msra.mxu0 0
        %1629 = vmatprep.subr.bf16.mxu0 0
        %1630 = vmatpush1.bf16.msra.mxu0 0
        %1631 = vmatprep.subr.bf16.mxu0 0
        %1632 = vmatpush1.bf16.msra.mxu0 0
        %1633 = vmatprep.subr.bf16.mxu0 0
        %1634 = vmatpush1.bf16.msra.mxu0 0
        %1635 = vmatprep.subr.bf16.mxu0 0
        %1636 = vmatpush1.bf16.msra.mxu0 0
        %1637 = vmatprep.subr.bf16.mxu0 0
        %1638 = vmatpush1.bf16.msra.mxu0 0
        %1639 = vmatprep.subr.bf16.mxu0 0
        %1640 = vmatpush1.bf16.msra.mxu0 %v1620
        %1641 = vmatprep.subr.bf16.mxu0 0
        %1642 = vmatpush2.bf16.msra.mxu0 0
        %1643 = vmatprep.subr.bf16.mxu0 0
        %1644 = vmatpush2.bf16.msra.mxu0 0
        %1645 = vmatprep.subr.bf16.mxu0 0
        %1646 = vmatpush2.bf16.msra.mxu0 0
        %1647 = vmatprep.subr.bf16.mxu0 0
        %1648 = vmatpush2.bf16.msra.mxu0 0
        %1649 = vmatprep.subr.bf16.mxu0 0
        %1650 = vmatpush2.bf16.msra.mxu0 0
        %1651 = vmatprep.subr.bf16.mxu0 0
        %1652 = vmatpush2.bf16.msra.mxu0 0
        %1653 = vmatprep.subr.bf16.mxu0 0
        %1654 = vmatpush2.bf16.msra.mxu0 0
        %1655 = vmatprep.subr.bf16.mxu0 0
        %1656 = vmatpush2.bf16.msra.mxu0 0
        %1657 = vmatprep.mubr.bf16.mxu0 0
        %1658 = vmatmul.mubr.bf16.gmra.mxu0 %v1623
        %v1659 = vpop.f32.mrf.mxu0
        %v1660 = vadd.f32 %v1149, %v1659
        %v1661 = vpop.f32.mrf.mxu0
        %v1662 = vpop.f32.mrf.mxu0
        %v1663 = vadd.f32 %v1150, %v1662
        %v1664 = vpop.f32.mrf.mxu0
        %1665 = vdwg.mxu0
        %v1666 = vsel %vm1204, %v1660, -inf
        %1667 = vmax.xlane.f32.xlu0 %v1666
        %v1668 = vpop.xlane.xlu0 %1667
        %v1669 = vsel %vm1204, %v1663, -inf
        %1670 = vmax.xlane.f32.xlu0 %v1669
        %v1671 = vpop.xlane.xlu0 %1670
        %v1672 = vsub.f32 %v1660, %v1668
        %v1673 = vsub.f32 %v1663, %v1671
        %v1674 = vmul.f32 %v1672, 1.442695
        %v1675 = vpow.pop %v1674
        %v1676 = vmul.f32 %v1673, 1.442695
        %v1677 = vpow.pop %v1676
        %v1678 = vsel %vm1204, %v1675, 0.0
        %1679 = vadd.xlane.f32.xlu0 %v1678
        %v1680 = vpop.xlane.xlu0 %1679
        %v1681 = vsel %vm1204, %v1677, 0.0
        %1682 = vadd.xlane.f32.xlu0 %v1681
        %v1683 = vpop.xlane.xlu0 %1682
        %v1684 = vrcp.pop %v1680
        %v1685 = vrcp.pop %v1683
        %v1686 = vmul.f32 %v1675, %v1684
        %v1687 = vmul.f32 %v1677, %v1685
        %v1688 = vpack.c.bf16 %v1687, %v1686
        %v1689 = vld [vmem:[#allocation3] sm:$0xf]
        %v1690 = vld [vmem:[#allocation3 + $0x4] sm:$0xf]
        %v1691 = vld [vmem:[#allocation3 + $0x8] sm:$0xf]
        %v1692 = vld [vmem:[#allocation3 + $0xc] sm:$0xf]
        %v1697 = vunpack.c.l.b16 %v1689
        %v1698 = vunpack.c.l.b16 %v1690
        %v1699 = vunpack.c.l.b16 %v1691
        %v1700 = vunpack.c.l.b16 %v1692
        %v1701 = vpack.c.b16 %v1698, %v1697
        %v1702 = vpack.c.b16 %v1700, %v1699
        %1703 = vrot.lane.b32.xlu0 %v1701, 80
        %v1704 = vpop.permute.xlu0 %1703
        %1705 = vrot.lane.b32.xlu0 %v1702, 80
        %v1706 = vpop.permute.xlu0 %1705
        %v1710 = vsel %vm1204, %v1688, 0
        %1712 = vmatprep.subr.bf16.mxu0 0
        %1713 = vmatpush1.bf16.msra.mxu0 0
        %1714 = vmatprep.subr.bf16.mxu0 0
        %1715 = vmatpush1.bf16.msra.mxu0 0
        %1716 = vmatprep.subr.bf16.mxu0 0
        %1717 = vmatpush1.bf16.msra.mxu0 0
        %1718 = vmatprep.subr.bf16.mxu0 0
        %1719 = vmatpush1.bf16.msra.mxu0 0
        %1720 = vmatprep.subr.bf16.mxu0 0
        %1721 = vmatpush1.bf16.msra.mxu0 0
        %1722 = vmatprep.subr.bf16.mxu0 0
        %1723 = vmatpush1.bf16.msra.mxu0 0
        %1724 = vmatprep.subr.bf16.mxu0 0
        %1725 = vmatpush1.bf16.msra.mxu0 %v1706
        %1726 = vmatprep.subr.bf16.mxu0 0
        %1727 = vmatpush1.bf16.msra.mxu0 %v1704
        %1728 = vmatprep.subr.bf16.mxu0 0
        %1729 = vmatpush2.bf16.msra.mxu0 0
        %1730 = vmatprep.subr.bf16.mxu0 0
        %1731 = vmatpush2.bf16.msra.mxu0 0
        %1732 = vmatprep.subr.bf16.mxu0 0
        %1733 = vmatpush2.bf16.msra.mxu0 0
        %1734 = vmatprep.subr.bf16.mxu0 0
        %1735 = vmatpush2.bf16.msra.mxu0 0
        %1736 = vmatprep.subr.bf16.mxu0 0
        %1737 = vmatpush2.bf16.msra.mxu0 0
        %1738 = vmatprep.subr.bf16.mxu0 0
        %1739 = vmatpush2.bf16.msra.mxu0 0
        %1740 = vmatprep.subr.bf16.mxu0 0
        %1741 = vmatpush2.bf16.msra.mxu0 0
        %1742 = vmatprep.subr.bf16.mxu0 0
        %1743 = vmatpush2.bf16.msra.mxu0 0
        %1744 = vmatprep.mubr.bf16.mxu0 0
        %1745 = vmatmul.mubr.bf16.gmra.mxu0 %v1710
        %v1746 = vpop.f32.mrf.mxu0
        %v1747 = vadd.f32 0.0, %v1746
        %v1748 = vpop.f32.mrf.mxu0
        %v1749 = vpop.f32.mrf.mxu0
        %v1750 = vadd.f32 0.0, %v1749
        %v1751 = vpop.f32.mrf.mxu0
        %1752 = vdwg.mxu0
        %v1753 = vpack.c.bf16 %v1750, %v1747
        %v1755 = vunpack.c.l.b16 %v1753
        %v1756 = vunpack.c.h.b16 %v1753
        %v1757 = vpack.c.b16 %v1755, %v1755
        %v1758 = vpack.c.b16 %v1756, %v1756
        %1759 = vrot.lane.b32.xlu0 %v1757, 48
        %v1760 = vpop.permute.xlu0 %1759
        %1761 = vrot.lane.b32.xlu0 %v1758, 48
        %v1762 = vpop.permute.xlu0 %1761
        %vm1765 = vcmask 519552
        %1766 = vst.msk [vmem:[#allocation4] sm:$0xf] %vm1765, %v1760
        %1767 = vst.msk [vmem:[#allocation4 + $0x4] sm:$0xf] %vm1765, %v1762
        %v1768 = vld [vmem:[#allocation4] sm:$0xf]
        %v1769 = vld [vmem:[#allocation4 + $0x4] sm:$0xf]
        %v1770 = vld [vmem:[#allocation13] sm:$0xf]
        %v1771 = vld [vmem:[#allocation13 + $0x4] sm:$0xf]
        %v1772 = vld [vmem:[#allocation13 + $0x8] sm:$0xf]
        %v1773 = vld [vmem:[#allocation13 + $0xc] sm:$0xf]
        %v1774 = vld [vmem:[#allocation13 + $0x10] sm:$0xf]
        %v1775 = vld [vmem:[#allocation13 + $0x14] sm:$0xf]
        %v1776 = vld [vmem:[#allocation13 + $0x18] sm:$0xf]
        %v1777 = vld [vmem:[#allocation13 + $0x1c] sm:$0xf]
        %v1778 = vld [vmem:[%s10] sm:$0x1]
        %v1780 = vlaneseq
        %v1781 = vshrl.u32 %v1780, 7
        %v1782 = vsub.s32 0, %v1781
        %v1783 = vrot.slane %v1778, %v1782
        %v1787 = vunpack.c.l.b16 %v1768
        %v1788 = vunpack.c.l.b16 %v1769
        %v1789 = vpack.c.b16 %v1788, %v1787
        %v1798 = vunpack.c.l.b16 %v1770
        %v1799 = vunpack.c.l.b16 %v1771
        %v1800 = vunpack.c.l.b16 %v1772
        %v1801 = vunpack.c.l.b16 %v1773
        %v1802 = vunpack.c.l.b16 %v1774
        %v1803 = vunpack.c.l.b16 %v1775
        %v1804 = vunpack.c.l.b16 %v1776
        %v1805 = vunpack.c.l.b16 %v1777
        %v1806 = vpack.c.b16 %v1799, %v1798
        %v1807 = vpack.c.b16 %v1801, %v1800
        %v1808 = vpack.c.b16 %v1803, %v1802
        %v1809 = vpack.c.b16 %v1805, %v1804
        %v1815 = vsel %vm1012, %v1789, 0
        %1817 = vmatprep.subr.bf16.mxu0 0
        %1818 = vmatpush1.bf16.msra.mxu0 0
        %1819 = vmatprep.subr.bf16.mxu0 0
        %1820 = vmatpush1.bf16.msra.mxu0 0
        %1821 = vmatprep.subr.bf16.mxu0 0
        %1822 = vmatpush1.bf16.msra.mxu0 0
        %1823 = vmatprep.subr.bf16.mxu0 0
        %1824 = vmatpush1.bf16.msra.mxu0 0
        %1825 = vmatprep.subr.bf16.mxu0 0
        %1826 = vmatpush1.bf16.msra.mxu0 %v1809
        %1827 = vmatprep.subr.bf16.mxu0 0
        %1828 = vmatpush1.bf16.msra.mxu0 %v1808
        %1829 = vmatprep.subr.bf16.mxu0 0
        %1830 = vmatpush1.bf16.msra.mxu0 %v1807
        %1831 = vmatprep.subr.bf16.mxu0 0
        %1832 = vmatpush1.bf16.msra.mxu0 %v1806
        %1833 = vmatprep.subr.bf16.mxu0 0
        %1834 = vmatpush2.bf16.msra.mxu0 0
        %1835 = vmatprep.subr.bf16.mxu0 0
        %1836 = vmatpush2.bf16.msra.mxu0 0
        %1837 = vmatprep.subr.bf16.mxu0 0
        %1838 = vmatpush2.bf16.msra.mxu0 0
        %1839 = vmatprep.subr.bf16.mxu0 0
        %1840 = vmatpush2.bf16.msra.mxu0 0
        %1841 = vmatprep.subr.bf16.mxu0 0
        %1842 = vmatpush2.bf16.msra.mxu0 0
        %1843 = vmatprep.subr.bf16.mxu0 0
        %1844 = vmatpush2.bf16.msra.mxu0 0
        %1845 = vmatprep.subr.bf16.mxu0 0
        %1846 = vmatpush2.bf16.msra.mxu0 0
        %1847 = vmatprep.subr.bf16.mxu0 0
        %1848 = vmatpush2.bf16.msra.mxu0 0
        %1849 = vmatprep.mubr.bf16.mxu0 0
        %1850 = vmatmul.mubr.bf16.gmra.mxu0 %v1815
        %v1851 = vpop.f32.mrf.mxu0
        %v1852 = vadd.f32 %v1783, %v1851
        %v1853 = vpop.f32.mrf.mxu0
        %v1854 = vpop.f32.mrf.mxu0
        %v1855 = vadd.f32 %v1783, %v1854
        %v1856 = vpop.f32.mrf.mxu0
        %1857 = vdwg.mxu0
        %v1858 = vadd.f32 %v1010, %v1852
        %v1859 = vadd.f32 %v1011, %v1855
        %v1860 = vsel %vm1012, %v1858, 0.0
        %1861 = vadd.xlane.f32.xlu0 %v1860
        %v1862 = vpop.xlane.xlu0 %1861
        %v1863 = vsel %vm1012, %v1859, 0.0
        %1864 = vadd.xlane.f32.xlu0 %v1863
        %v1865 = vpop.xlane.xlu0 %1864
        %v1866 = vmul.f32 %v1862, %v1019
        %v1867 = vmul.f32 %v1865, %v1019
        %v1868 = vsub.f32 %v1858, %v1866
        %v1869 = vsub.f32 %v1859, %v1867
        %v1870 = vmul.f32 %v1868, %v1868
        %v1871 = vmul.f32 %v1869, %v1869
        %v1872 = vsel %vm1012, %v1870, 0.0
        %1873 = vadd.xlane.f32.xlu0 %v1872
        %v1874 = vpop.xlane.xlu0 %1873
        %v1875 = vsel %vm1012, %v1871, 0.0
        %1876 = vadd.xlane.f32.xlu0 %v1875
        %v1877 = vpop.xlane.xlu0 %1876
        %v1878 = vmul.f32 %v1874, 0.015873017
        %v1879 = vmul.f32 %v1877, 0.015873017
        %v1880 = vrsqrt.pop %v1878
        %v1881 = vmul.f32 %v1878, %v1880
        %vm1882 = vcmp.eq.f32.partialorder %v1878, inf
        %v1883 = vsel %vm1882, %v1878, %v1881
        %vm1884 = vcmp.eq.f32.partialorder %v1878, 0.0
        %v1885 = vand.u32 %v1878, 2147483648
        %v1886 = vsel %vm1884, %v1885, %v1883
        %v1887 = vrsqrt.pop %v1879
        %v1888 = vmul.f32 %v1879, %v1887
        %vm1889 = vcmp.eq.f32.partialorder %v1879, inf
        %v1890 = vsel %vm1889, %v1879, %v1888
        %vm1891 = vcmp.eq.f32.partialorder %v1879, 0.0
        %v1892 = vand.u32 %v1879, 2147483648
        %v1893 = vsel %vm1891, %v1892, %v1890
        %v1894 = vadd.f32 %v1886, 1e-06
        %v1895 = vadd.f32 %v1893, 1e-06
        %v1896 = vrcp.pop %v1894
        %v1897 = vmul.f32 1.0, %v1896
        %v1898 = vrcp.pop %v1895
        %v1899 = vmul.f32 1.0, %v1898
        %v1900 = vstv %s624
        %v1901 = vmul.f32 %v1900, %v1868
        %v1902 = vmul.f32 %v1900, %v1869
        %v1903 = vmul.f32 %v1901, %v1897
        %v1904 = vmul.f32 %v1902, %v1899
        %v1905 = vstv %s625
        %v1906 = vadd.f32 %v1903, %v1905
        %v1907 = vadd.f32 %v1904, %v1905
        %v1908 = vpack.c.bf16 %v1907, %v1906
        %v1909 = vld [vmem:[#allocation15] sm:$0xf]
        %v1910 = vld [vmem:[#allocation15 + $0x4] sm:$0xf]
        %v1911 = vld [vmem:[#allocation15 + $0x8] sm:$0xf]
        %v1912 = vld [vmem:[#allocation15 + $0xc] sm:$0xf]
        %v1913 = vld [vmem:[#allocation15 + $0x10] sm:$0xf]
        %v1914 = vld [vmem:[#allocation15 + $0x14] sm:$0xf]
        %v1915 = vld [vmem:[#allocation15 + $0x18] sm:$0xf]
        %v1916 = vld [vmem:[#allocation15 + $0x1c] sm:$0xf]
        %v1917 = vld [vmem:[%s12] sm:$0x1]
        %v1919 = vlaneseq
        %v1920 = vshrl.u32 %v1919, 7
        %v1921 = vsub.s32 0, %v1920
        %v1922 = vrot.slane %v1917, %v1921
        %v1932 = vunpack.c.l.b16 %v1909
        %v1933 = vunpack.c.l.b16 %v1910
        %v1934 = vunpack.c.l.b16 %v1911
        %v1935 = vunpack.c.l.b16 %v1912
        %v1936 = vunpack.c.l.b16 %v1913
        %v1937 = vunpack.c.l.b16 %v1914
        %v1938 = vunpack.c.l.b16 %v1915
        %v1939 = vunpack.c.l.b16 %v1916
        %v1940 = vpack.c.b16 %v1933, %v1932
        %v1941 = vpack.c.b16 %v1935, %v1934
        %v1942 = vpack.c.b16 %v1937, %v1936
        %v1943 = vpack.c.b16 %v1939, %v1938
        %v1949 = vsel %vm1012, %v1908, 0
        %1951 = vmatprep.subr.bf16.mxu0 0
        %1952 = vmatpush1.bf16.msra.mxu0 0
        %1953 = vmatprep.subr.bf16.mxu0 0
        %1954 = vmatpush1.bf16.msra.mxu0 0
        %1955 = vmatprep.subr.bf16.mxu0 0
        %1956 = vmatpush1.bf16.msra.mxu0 0
        %1957 = vmatprep.subr.bf16.mxu0 0
        %1958 = vmatpush1.bf16.msra.mxu0 0
        %1959 = vmatprep.subr.bf16.mxu0 0
        %1960 = vmatpush1.bf16.msra.mxu0 %v1943
        %1961 = vmatprep.subr.bf16.mxu0 0
        %1962 = vmatpush1.bf16.msra.mxu0 %v1942
        %1963 = vmatprep.subr.bf16.mxu0 0
        %1964 = vmatpush1.bf16.msra.mxu0 %v1941
        %1965 = vmatprep.subr.bf16.mxu0 0
        %1966 = vmatpush1.bf16.msra.mxu0 %v1940
        %1967 = vmatprep.subr.bf16.mxu0 0
        %1968 = vmatpush2.bf16.msra.mxu0 0
        %1969 = vmatprep.subr.bf16.mxu0 0
        %1970 = vmatpush2.bf16.msra.mxu0 0
        %1971 = vmatprep.subr.bf16.mxu0 0
        %1972 = vmatpush2.bf16.msra.mxu0 0
        %1973 = vmatprep.subr.bf16.mxu0 0
        %1974 = vmatpush2.bf16.msra.mxu0 0
        %1975 = vmatprep.subr.bf16.mxu0 0
        %1976 = vmatpush2.bf16.msra.mxu0 0
        %1977 = vmatprep.subr.bf16.mxu0 0
        %1978 = vmatpush2.bf16.msra.mxu0 0
        %1979 = vmatprep.subr.bf16.mxu0 0
        %1980 = vmatpush2.bf16.msra.mxu0 0
        %1981 = vmatprep.subr.bf16.mxu0 0
        %1982 = vmatpush2.bf16.msra.mxu0 0
        %1983 = vmatprep.mubr.bf16.mxu0 0
        %1984 = vmatmul.mubr.bf16.gmra.mxu0 %v1949
        %v1985 = vpop.f32.mrf.mxu0
        %v1986 = vadd.f32 %v1922, %v1985
        %v1987 = vpop.f32.mrf.mxu0
        %v1988 = vpop.f32.mrf.mxu0
        %v1989 = vadd.f32 %v1922, %v1988
        %v1990 = vpop.f32.mrf.mxu0
        %1991 = vdwg.mxu0
        %v1992 = vmax.f32 %v1986, 0.0
        %v1993 = vmax.f32 %v1989, 0.0
        %v1994 = vpack.c.bf16 %v1993, %v1992
        %v1995 = vld [vmem:[%s13] sm:$0xf]
        %v1996 = vld [vmem:[%s13 + $0x4] sm:$0xf]
        %v1997 = vld [vmem:[%s13 + $0x8] sm:$0xf]
        %v1998 = vld [vmem:[%s13 + $0xc] sm:$0xf]
        %v1999 = vld [vmem:[%s13 + $0x10] sm:$0xf]
        %v2000 = vld [vmem:[%s13 + $0x14] sm:$0xf]
        %v2001 = vld [vmem:[%s13 + $0x18] sm:$0xf]
        %v2002 = vld [vmem:[%s13 + $0x1c] sm:$0xf]
        %v2003 = vld [vmem:[%s13 + $0x20] sm:$0xf]
        %v2004 = vld [vmem:[%s13 + $0x24] sm:$0xf]
        %v2005 = vld [vmem:[%s13 + $0x28] sm:$0xf]
        %v2006 = vld [vmem:[%s13 + $0x2c] sm:$0xf]
        %v2007 = vld [vmem:[%s13 + $0x30] sm:$0xf]
        %v2008 = vld [vmem:[%s13 + $0x34] sm:$0xf]
        %v2009 = vld [vmem:[%s13 + $0x38] sm:$0xf]
        %v2010 = vld [vmem:[%s13 + $0x3c] sm:$0xf]
        %v2011 = vld [vmem:[%s14] sm:$0x1]
        %v2013 = vlaneseq
        %v2014 = vshrl.u32 %v2013, 7
        %v2015 = vsub.s32 0, %v2014
        %v2016 = vrot.slane %v2011, %v2015
        %v2034 = vunpack.c.l.b16 %v1995
        %v2035 = vunpack.c.l.b16 %v1996
        %v2036 = vunpack.c.l.b16 %v1997
        %v2037 = vunpack.c.l.b16 %v1998
        %v2038 = vunpack.c.l.b16 %v1999
        %v2039 = vunpack.c.l.b16 %v2000
        %v2040 = vunpack.c.l.b16 %v2001
        %v2041 = vunpack.c.l.b16 %v2002
        %v2042 = vunpack.c.l.b16 %v2003
        %v2043 = vunpack.c.l.b16 %v2004
        %v2044 = vunpack.c.l.b16 %v2005
        %v2045 = vunpack.c.l.b16 %v2006
        %v2046 = vunpack.c.l.b16 %v2007
        %v2047 = vunpack.c.l.b16 %v2008
        %v2048 = vunpack.c.l.b16 %v2009
        %v2049 = vunpack.c.l.b16 %v2010
        %v2050 = vpack.c.b16 %v2035, %v2034
        %v2051 = vpack.c.b16 %v2037, %v2036
        %v2052 = vpack.c.b16 %v2039, %v2038
        %v2053 = vpack.c.b16 %v2041, %v2040
        %v2054 = vpack.c.b16 %v2043, %v2042
        %v2055 = vpack.c.b16 %v2045, %v2044
        %v2056 = vpack.c.b16 %v2047, %v2046
        %v2057 = vpack.c.b16 %v2049, %v2048
        %2066 = vmatprep.subr.bf16.mxu0 0
        %2067 = vmatpush1.bf16.msra.mxu0 %v2057
        %2068 = vmatprep.subr.bf16.mxu0 0
        %2069 = vmatpush1.bf16.msra.mxu0 %v2056
        %2070 = vmatprep.subr.bf16.mxu0 0
        %2071 = vmatpush1.bf16.msra.mxu0 %v2055
        %2072 = vmatprep.subr.bf16.mxu0 0
        %2073 = vmatpush1.bf16.msra.mxu0 %v2054
        %2074 = vmatprep.subr.bf16.mxu0 0
        %2075 = vmatpush1.bf16.msra.mxu0 %v2053
        %2076 = vmatprep.subr.bf16.mxu0 0
        %2077 = vmatpush1.bf16.msra.mxu0 %v2052
        %2078 = vmatprep.subr.bf16.mxu0 0
        %2079 = vmatpush1.bf16.msra.mxu0 %v2051
        %2080 = vmatprep.subr.bf16.mxu0 0
        %2081 = vmatpush1.bf16.msra.mxu0 %v2050
        %2082 = vmatprep.subr.bf16.mxu0 0
        %2083 = vmatpush2.bf16.msra.mxu0 0
        %2084 = vmatprep.subr.bf16.mxu0 0
        %2085 = vmatpush2.bf16.msra.mxu0 0
        %2086 = vmatprep.subr.bf16.mxu0 0
        %2087 = vmatpush2.bf16.msra.mxu0 0
        %2088 = vmatprep.subr.bf16.mxu0 0
        %2089 = vmatpush2.bf16.msra.mxu0 0
        %2090 = vmatprep.subr.bf16.mxu0 0
        %2091 = vmatpush2.bf16.msra.mxu0 0
        %2092 = vmatprep.subr.bf16.mxu0 0
        %2093 = vmatpush2.bf16.msra.mxu0 0
        %2094 = vmatprep.subr.bf16.mxu0 0
        %2095 = vmatpush2.bf16.msra.mxu0 0
        %2096 = vmatprep.subr.bf16.mxu0 0
        %2097 = vmatpush2.bf16.msra.mxu0 0
        %2098 = vmatprep.mubr.bf16.mxu0 0
        %2099 = vmatmul.mubr.bf16.gmra.mxu0 %v1994
        %v2100 = vpop.f32.mrf.mxu0
        %v2101 = vadd.f32 %v2016, %v2100
        %v2102 = vpop.f32.mrf.mxu0
        %v2103 = vpop.f32.mrf.mxu0
        %v2104 = vadd.f32 %v2016, %v2103
        %v2105 = vpop.f32.mrf.mxu0
        %2106 = vdwg.mxu0
        %v2107 = vadd.f32 %v1858, %v2101
        %v2108 = vadd.f32 %v1859, %v2104
        %2109 = vst.msk [vmem:[%s613] sm:$0xff] %vm1012, %v2107
        %2110 = vst.msk [vmem:[%s613 + $0x8] sm:$0xff] %vm1012, %v2108
        %s2111 = sand.u32 %s382, 1
        %s2112 = scalar_lea.sflag [#allocation7], %s2111
        %s2113 = sand.u32 %s382, 1
        %s2114 = smul.addr %s2113, 16
        %s2115 = scalar_lea.vmem [#allocation16], %s2114
        // Predicated region
        $region109: #{tpu_custom_call.1} parent=79 // pred_check
          %p2116 = pneg %p392
        $region110: #{tpu_custom_call.1} parent=79 // pred_check_branch
          %2118 = sbr.rel (%p2116) target = $region112
        $region111: #{tpu_custom_call.1} parent=79 // pred_region
          %s2119 = smul.u32 2, %s40
          %s2121 = ssub.s32 256, 256
          %2122 = vsyncadd %s2112, %s2121
          %s2123 = smul.addr %s39, 4
          %s2124 = sadd.s32 %s2119, %s2123
          %s2125 = smul.addr %s2124, 128
          %s2126 = scalar_lea.hbm %s15, %s2125
          %s2127 = sshll.u32 %s2115, 4
          %s2128 = int_to_ptr.vmem [resolvable:$true] %s2127
          %2133 = dma.vmem_to_hbm [thread:$0]  %s2128, 256, %s2126, %s2112, 128, 128, 8
        $region112: #{tpu_custom_call.1} parent=79 // pred_fallthru
          _
      $region80: #{tpu_custom_call.1} parent=5 // pred_fallthru
        _
      %p2134 = scmp.le.s32.totalorder 2, %s30
      // Predicated region
      $region113: #{tpu_custom_call.1} parent=5 // pred_check
        %p2135 = pneg %p2134
      $region114: #{tpu_custom_call.1} parent=5 // pred_check_branch
        %2137 = sbr.rel (%p2135) target = $region116
      $region115: #{tpu_custom_call.1} parent=5 // pred_region
        %s2138 = ssub.s32 %s30, 2
        // Predicated region
        $region117: #{tpu_custom_call.1} parent=115 // pred_check
          %p2139 = pneg %p398
        $region118: #{tpu_custom_call.1} parent=115 // pred_check_branch
          %2141 = sbr.rel (%p2139) target = $region120
        $region119: #{tpu_custom_call.1} parent=115 // pred_region
          %s2142 = sand.u32 %s383, 1
          %s2143 = scalar_lea.sflag [#allocation7], %s2142
          %s2144 = sand.u32 %s383, 1
          %s2145 = smul.addr %s2144, 16
          %s2146 = scalar_lea.vmem [#allocation16], %s2145
          %2147 = dma.done %s2143, 256
        $region120: #{tpu_custom_call.1} parent=115 // pred_fallthru
          _
      $region116: #{tpu_custom_call.1} parent=5 // pred_fallthru
        _
    $region6: #{tpu_custom_call.1} parent=1 // loop_footer
      %s34 = sadd.s32 1, %s30
    $region7: #{tpu_custom_call.1} parent=1 // loop_footer_branch
      %29 = sbr.rel target = $region3
    $region8: #{tpu_custom_call.1} parent=1 // loop_exit
      _
    %2148 = vsyncpa [#allocation6], 1
    %s2149 = scalar_lea.sflag [#allocation6], 1
    %2150 = vsyncpa %s2149, 1
    %2151 = vsyncpa [#allocation11], 1
    %2152 = vsyncpa [#allocation14], 1
    %2153 = vsyncpa [#allocation7], 1
    %s2154 = scalar_lea.sflag [#allocation7], 1
    %2155 = vsyncpa %s2154, 1
    %2156 = vsyncpa [#allocation8], 1
    %s2157 = scalar_lea.sflag [#allocation8], 1
    %2158 = vsyncpa %s2157, 1

// kernel: tpu_custom_call.1
$region0: #{tpu_custom_call.1}
  #allocation0 [shape = 'u32[]', space=smem, size = 0x4, offset = 0x4, fixed_abs, tag = 'smem constant byte address 0x4 - core index']
  #allocation1 [shape = 'u32[144,128]{1,0:T(1,128)}', space=vmem, size = 0x12000, scoped, tag = 'internal scratch']
  #allocation2 [shape = 'bf16[64,32]{1,0:T(8,128)(2,1)}', space=vmem, size = 0x4000, scoped, tag = 'scratch operand']
  #allocation3 [shape = 'bf16[32,64]{1,0:T(8,128)(2,1)}', space=vmem, size = 0x2000, scoped, tag = 'scratch operand']
  #allocation4 [shape = 'bf16[16,64]{1,0:T(8,128)(2,1)}', space=vmem, size = 0x1000, scoped, tag = 'scratch operand']
  %s0 = inlined_call_operand.vmem [shape: f32[4], index: 0, kind: input, shape index: {}]
  %s1 = inlined_call_operand.vmem [shape: f32[2,32,64], index: 1, kind: input, shape index: {}]
  %s2 = inlined_call_operand.hbm [shape: bf16[32,32], index: 2, kind: input, shape index: {}]
  %s3 = inlined_call_operand.vmem [shape: bf16[64,64], index: 3, kind: input, shape index: {}]
  %s4 = inlined_call_operand.vmem [shape: f32[1,64], index: 4, kind: input, shape index: {}]
  %s5 = inlined_call_operand.hbm [shape: bf16[64,64], index: 5, kind: input, shape index: {}]
  %s6 = inlined_call_operand.vmem [shape: f32[1,64], index: 6, kind: input, shape index: {}]
  %s7 = inlined_call_operand.hbm [shape: bf16[64,64], index: 7, kind: input, shape index: {}]
  %s8 = inlined_call_operand.vmem [shape: f32[1,64], index: 8, kind: input, shape index: {}]
  %s9 = inlined_call_operand.hbm [shape: bf16[64,64], index: 9, kind: input, shape index: {}]
  %s10 = inlined_call_operand.vmem [shape: f32[1,64], index: 10, kind: input, shape index: {}]
  %s11 = inlined_call_operand.hbm [shape: bf16[64,128], index: 11, kind: input, shape index: {}]
  %s12 = inlined_call_operand.vmem [shape: f32[1,128], index: 12, kind: input, shape index: {}]
  %s13 = inlined_call_operand.vmem [shape: bf16[128,64], index: 13, kind: input, shape index: {}]
  %s14 = inlined_call_operand.vmem [shape: f32[1,64], index: 14, kind: input, shape index: {}]
  %s15 = inlined_call_operand.hbm [shape: f32[2,32,64], index: 15, kind: output, shape index: {}]
  %s16 = sld [smem:[#allocation0]]
  $region121: #{tpu_custom_call.1} parent=0
    _
  %s18 = ssub.s32 1, %s16
  %s19 = scalar_select 0, %s18, %s16
  $region1: #{tpu_custom_call.1} parent=0
    #allocation5 [shape = 'u8[512]{0}', space=smem, size = 0x200, scoped, tag = 'input window, operand 0, single buffered']
    #allocation6 [shape = 's32[2]{0}', space=sflag, size = 0x8, scoped, tag = 'scoped memory for tpu_custom_call.1']
    #allocation7 [shape = 's32[2]{0}', space=sflag, size = 0x8, scoped, tag = 'scoped memory for tpu_custom_call.1']
    #allocation8 [shape = 's32[2]{0}', space=sflag, size = 0x8, scoped, tag = 'scoped memory for tpu_custom_call.1']
    #allocation9 [shape = 'u8[8192]{0}', space=vmem, size = 0x2000, scoped, tag = 'input window, operand 2']
    #allocation10 [shape = 'u8[16384]{0}', space=vmem, size = 0x4000, scoped, tag = 'input window, operand 5, single buffered']
    #allocation11 [shape = 's32[1]{0}', space=sflag, size = 0x4, scoped, tag = 'scoped memory for tpu_custom_call.1']
    #allocation12 [shape = 'u8[16384]{0}', space=vmem, size = 0x4000, scoped, tag = 'input window, operand 7, single buffered']
    #allocation13 [shape = 'u8[16384]{0}', space=vmem, size = 0x4000, scoped, tag = 'input window, operand 9, single buffered']
    #allocation14 [shape = 's32[1]{0}', space=sflag, size = 0x4, scoped, tag = 'scoped memory for tpu_custom_call.1']
    #allocation15 [shape = 'u8[16384]{0}', space=vmem, size = 0x4000, scoped, tag = 'input window, operand 11, single buffered']
    #allocation16 [shape = 'u8[16384]{0}', space=vmem, size = 0x4000, scoped, tag = 'output window, operand 0']
    %20 = vsyncpa [#allocation8], 0
    %21 = vsyncpa [#allocation6], 0
    %s22 = scalar_lea.sflag [#allocation6], 1
    %23 = vsyncpa %s22, 0
    %24 = vsyncpa [#allocation11], 0
    %25 = vsyncpa [#allocation14], 0
    %26 = vsyncpa [#allocation7], 0
    %s27 = scalar_lea.sflag [#allocation7], 1
    %28 = vsyncpa %s27, 0
    loop: start=0, step=1, limit=6
    $region2: #{tpu_custom_call.1} parent=1 // loop_pre_header
      _
    $region3: #{tpu_custom_call.1} parent=1 // loop_header
      %s30 = sphi 0, %s34
      %p31 = scmp.ge.s32.totalorder %s30, 6
      %s37 = sphi 0, %s49
      %s38 = sphi 0, %s45
      %s39 = sphi 0, %s37
      %s40 = sphi 0, %s38
      %s41 = sphi 0, %s39
      %s42 = sphi 0, %s40
      %s50 = sphi 0, %s50
      %s52 = sphi 0, %s50
      %s53 = sphi 0, %s52
      %s67 = sphi 0, %s53
      %s73 = sphi 0, %s75
      %s76 = sphi 0, %s73
      %s77 = sphi 0, %s76
      %s93 = sphi 0, %s77
      %s99 = sphi 0, %s101
      %s102 = sphi 0, %s99
      %s103 = sphi 0, %s102
      %s119 = sphi 0, %s103
      %s123 = sphi 0, %s123
      %s125 = sphi 0, %s123
      %s126 = sphi 0, %s125
      %s140 = sphi 0, %s126
      %s144 = sphi 0, %s144
      %s146 = sphi 0, %s144
      %s147 = sphi 0, %s146
      %s161 = sphi 0, %s147
      %s165 = sphi 0, %s165
      %s167 = sphi 0, %s165
      %s168 = sphi 0, %s167
      %s182 = sphi 0, %s168
      %s186 = sphi 0, %s186
      %s188 = sphi 0, %s186
      %s189 = sphi 0, %s188
      %s203 = sphi 0, %s189
      %s207 = sphi 0, %s207
      %s209 = sphi 0, %s207
      %s210 = sphi 0, %s209
      %s224 = sphi 0, %s210
      %s228 = sphi 0, %s228
      %s230 = sphi 0, %s228
      %s231 = sphi 0, %s230
      %s245 = sphi 0, %s231
      %s249 = sphi 0, %s249
      %s251 = sphi 0, %s249
      %s252 = sphi 0, %s251
      %s266 = sphi 0, %s252
      %s270 = sphi 0, %s270
      %s272 = sphi 0, %s270
      %s273 = sphi 0, %s272
      %s287 = sphi 0, %s273
      %s291 = sphi 0, %s291
      %s293 = sphi 0, %s291
      %s294 = sphi 0, %s293
      %s308 = sphi 0, %s294
      %s312 = sphi 0, %s312
      %s314 = sphi 0, %s312
      %s315 = sphi 0, %s314
      %s329 = sphi 0, %s315
      %s333 = sphi 0, %s333
      %s335 = sphi 0, %s333
      %s336 = sphi 0, %s335
      %s350 = sphi 0, %s336
      %s354 = sphi 0, %s354
      %s356 = sphi 0, %s354
      %s357 = sphi 0, %s356
      %s371 = sphi 0, %s357
      %s379 = sphi 0, %s381
      %s382 = sphi 0, %s379
      %s383 = sphi 0, %s382
      %s399 = sphi 0, %s383
    $region4: #{tpu_custom_call.1} parent=1 // loop_header_branch
      %33 = sbr.rel (%p31) target = $region8
    $region5: #{tpu_custom_call.1} parent=1 // loop_body
      %s35 = ssub.s32 %s30, 1
      %s36 = ssub.s32 %s30, 2
      %s43 = sadd.s32 1, %s38
      %p44 = scmp.ge.s32.totalorder %s43, 2
      %s45 = scalar_select %p44, 0, %s43
      %s46 = sadd.s32 1, %s37
      %s47 = scalar_select %p44, %s46, %s37
      %p48 = scmp.ge.s32.totalorder %s47, 2
      %s49 = scalar_select %p48, 0, %s47
      %s51 = sadd.s32 %s50, 1
      %p54 = scmp.eq.s32.totalorder %s30, 3
      %p55 = scmp.ne.s32.totalorder %s50, %s52
      %p56 = scmp.eq.s32.totalorder %s30, 0
      %p57 = por %p55, %p56
      %p58 = scmp.ne.s32.totalorder %s50, %s52
      %p59 = scmp.eq.s32.totalorder %s35, 3
      %p60 = por %p58, %p59
      %p61 = scmp.ne.s32.totalorder %s52, %s53
      %p62 = scmp.eq.s32.totalorder %s35, 0
      %p63 = por %p61, %p62
      %p64 = scmp.ne.s32.totalorder %s52, %s53
      %p65 = scmp.eq.s32.totalorder %s36, 3
      %p66 = por %p64, %p65
      %p68 = scmp.ne.s32.totalorder %s53, %s67
      %p69 = scmp.eq.s32.totalorder %s36, 0
      %p70 = por %p68, %p69
      %s71 = ssub.s32 %s37, %s49
      %p72 = scmp.eq.s32.totalorder %s71, 0
      %s74 = sadd.s32 %s73, 1
      %s75 = scalar_select %p72, %s73, %s74
      %p78 = pneg %p72
      %p79 = scmp.eq.s32.totalorder %s30, 3
      %p80 = por %p78, %p79
      %p81 = scmp.ne.s32.totalorder %s73, %s76
      %p82 = scmp.eq.s32.totalorder %s30, 0
      %p83 = por %p81, %p82
      %p84 = scmp.ne.s32.totalorder %s73, %s76
      %p85 = scmp.eq.s32.totalorder %s35, 3
      %p86 = por %p84, %p85
      %p87 = scmp.ne.s32.totalorder %s76, %s77
      %p88 = scmp.eq.s32.totalorder %s35, 0
      %p89 = por %p87, %p88
      %p90 = scmp.ne.s32.totalorder %s76, %s77
      %p91 = scmp.eq.s32.totalorder %s36, 3
      %p92 = por %p90, %p91
      %p94 = scmp.ne.s32.totalorder %s77, %s93
      %p95 = scmp.eq.s32.totalorder %s36, 0
      %p96 = por %p94, %p95
      %s97 = ssub.s32 %s38, %s45
      %p98 = scmp.eq.s32.totalorder %s97, 0
      %s100 = sadd.s32 %s99, 1
      %s101 = scalar_select %p98, %s99, %s100
      %p104 = pneg %p98
      %p105 = scmp.eq.s32.totalorder %s30, 3
      %p106 = por %p104, %p105
      %p107 = scmp.ne.s32.totalorder %s99, %s102
      %p108 = scmp.eq.s32.totalorder %s30, 0
      %p109 = por %p107, %p108
      %p110 = scmp.ne.s32.totalorder %s99, %s102
      %p111 = scmp.eq.s32.totalorder %s35, 3
      %p112 = por %p110, %p111
      %p113 = scmp.ne.s32.totalorder %s102, %s103
      %p114 = scmp.eq.s32.totalorder %s35, 0
      %p115 = por %p113, %p114
      %p116 = scmp.ne.s32.totalorder %s102, %s103
      %p117 = scmp.eq.s32.totalorder %s36, 3
      %p118 = por %p116, %p117
      %p120 = scmp.ne.s32.totalorder %s103, %s119
      %p121 = scmp.eq.s32.totalorder %s36, 0
      %p122 = por %p120, %p121
      %s124 = sadd.s32 %s123, 1
      %p127 = scmp.eq.s32.totalorder %s30, 3
      %p128 = scmp.ne.s32.totalorder %s123, %s125
      %p129 = scmp.eq.s32.totalorder %s30, 0
      %p130 = por %p128, %p129
      %p131 = scmp.ne.s32.totalorder %s123, %s125
      %p132 = scmp.eq.s32.totalorder %s35, 3
      %p133 = por %p131, %p132
      %p134 = scmp.ne.s32.totalorder %s125, %s126
      %p135 = scmp.eq.s32.totalorder %s35, 0
      %p136 = por %p134, %p135
      %p137 = scmp.ne.s32.totalorder %s125, %s126
      %p138 = scmp.eq.s32.totalorder %s36, 3
      %p139 = por %p137, %p138
      %p141 = scmp.ne.s32.totalorder %s126, %s140
      %p142 = scmp.eq.s32.totalorder %s36, 0
      %p143 = por %p141, %p142
      %s145 = sadd.s32 %s144, 1
      %p148 = scmp.eq.s32.totalorder %s30, 3
      %p149 = scmp.ne.s32.totalorder %s144, %s146
      %p150 = scmp.eq.s32.totalorder %s30, 0
      %p151 = por %p149, %p150
      %p152 = scmp.ne.s32.totalorder %s144, %s146
      %p153 = scmp.eq.s32.totalorder %s35, 3
      %p154 = por %p152, %p153
      %p155 = scmp.ne.s32.totalorder %s146, %s147
      %p156 = scmp.eq.s32.totalorder %s35, 0
      %p157 = por %p155, %p156
      %p158 = scmp.ne.s32.totalorder %s146, %s147
      %p159 = scmp.eq.s32.totalorder %s36, 3
      %p160 = por %p158, %p159
      %p162 = scmp.ne.s32.totalorder %s147, %s161
      %p163 = scmp.eq.s32.totalorder %s36, 0
      %p164 = por %p162, %p163
      %s166 = sadd.s32 %s165, 1
      %p169 = scmp.eq.s32.totalorder %s30, 3
      %p170 = scmp.ne.s32.totalorder %s165, %s167
      %p171 = scmp.eq.s32.totalorder %s30, 0
      %p172 = por %p170, %p171
      %p173 = scmp.ne.s32.totalorder %s165, %s167
      %p174 = scmp.eq.s32.totalorder %s35, 3
      %p175 = por %p173, %p174
      %p176 = scmp.ne.s32.totalorder %s167, %s168
      %p177 = scmp.eq.s32.totalorder %s35, 0
      %p178 = por %p176, %p177
      %p179 = scmp.ne.s32.totalorder %s167, %s168
      %p180 = scmp.eq.s32.totalorder %s36, 3
      %p181 = por %p179, %p180
      %p183 = scmp.ne.s32.totalorder %s168, %s182
      %p184 = scmp.eq.s32.totalorder %s36, 0
      %p185 = por %p183, %p184
      %s187 = sadd.s32 %s186, 1
      %p190 = scmp.eq.s32.totalorder %s30, 3
      %p191 = scmp.ne.s32.totalorder %s186, %s188
      %p192 = scmp.eq.s32.totalorder %s30, 0
      %p193 = por %p191, %p192
      %p194 = scmp.ne.s32.totalorder %s186, %s188
      %p195 = scmp.eq.s32.totalorder %s35, 3
      %p196 = por %p194, %p195
      %p197 = scmp.ne.s32.totalorder %s188, %s189
      %p198 = scmp.eq.s32.totalorder %s35, 0
      %p199 = por %p197, %p198
      %p200 = scmp.ne.s32.totalorder %s188, %s189
      %p201 = scmp.eq.s32.totalorder %s36, 3
      %p202 = por %p200, %p201
      %p204 = scmp.ne.s32.totalorder %s189, %s203
      %p205 = scmp.eq.s32.totalorder %s36, 0
      %p206 = por %p204, %p205
      %s208 = sadd.s32 %s207, 1
      %p211 = scmp.eq.s32.totalorder %s30, 3
      %p212 = scmp.ne.s32.totalorder %s207, %s209
      %p213 = scmp.eq.s32.totalorder %s30, 0
      %p214 = por %p212, %p213
      %p215 = scmp.ne.s32.totalorder %s207, %s209
      %p216 = scmp.eq.s32.totalorder %s35, 3
      %p217 = por %p215, %p216
      %p218 = scmp.ne.s32.totalorder %s209, %s210
      %p219 = scmp.eq.s32.totalorder %s35, 0
      %p220 = por %p218, %p219
      %p221 = scmp.ne.s32.totalorder %s209, %s210
      %p222 = scmp.eq.s32.totalorder %s36, 3
      %p223 = por %p221, %p222
      %p225 = scmp.ne.s32.totalorder %s210, %s224
      %p226 = scmp.eq.s32.totalorder %s36, 0
      %p227 = por %p225, %p226
      %s229 = sadd.s32 %s228, 1
      %p232 = scmp.eq.s32.totalorder %s30, 3
      %p233 = scmp.ne.s32.totalorder %s228, %s230
      %p234 = scmp.eq.s32.totalorder %s30, 0
      %p235 = por %p233, %p234
      %p236 = scmp.ne.s32.totalorder %s228, %s230
      %p237 = scmp.eq.s32.totalorder %s35, 3
      %p238 = por %p236, %p237
      %p239 = scmp.ne.s32.totalorder %s230, %s231
      %p240 = scmp.eq.s32.totalorder %s35, 0
      %p241 = por %p239, %p240
      %p242 = scmp.ne.s32.totalorder %s230, %s231
      %p243 = scmp.eq.s32.totalorder %s36, 3
      %p244 = por %p242, %p243
      %p246 = scmp.ne.s32.totalorder %s231, %s245
      %p247 = scmp.eq.s32.totalorder %s36, 0
      %p248 = por %p246, %p247
      %s250 = sadd.s32 %s249, 1
      %p253 = scmp.eq.s32.totalorder %s30, 3
      %p254 = scmp.ne.s32.totalorder %s249, %s251
      %p255 = scmp.eq.s32.totalorder %s30, 0
      %p256 = por %p254, %p255
      %p257 = scmp.ne.s32.totalorder %s249, %s251
      %p258 = scmp.eq.s32.totalorder %s35, 3
      %p259 = por %p257, %p258
      %p260 = scmp.ne.s32.totalorder %s251, %s252
      %p261 = scmp.eq.s32.totalorder %s35, 0
      %p262 = por %p260, %p261
      %p263 = scmp.ne.s32.totalorder %s251, %s252
      %p264 = scmp.eq.s32.totalorder %s36, 3
      %p265 = por %p263, %p264
      %p267 = scmp.ne.s32.totalorder %s252, %s266
      %p268 = scmp.eq.s32.totalorder %s36, 0
      %p269 = por %p267, %p268
      %s271 = sadd.s32 %s270, 1
      %p274 = scmp.eq.s32.totalorder %s30, 3
      %p275 = scmp.ne.s32.totalorder %s270, %s272
      %p276 = scmp.eq.s32.totalorder %s30, 0
      %p277 = por %p275, %p276
      %p278 = scmp.ne.s32.totalorder %s270, %s272
      %p279 = scmp.eq.s32.totalorder %s35, 3
      %p280 = por %p278, %p279
      %p281 = scmp.ne.s32.totalorder %s272, %s273
      %p282 = scmp.eq.s32.totalorder %s35, 0
      %p283 = por %p281, %p282
      %p284 = scmp.ne.s32.totalorder %s272, %s273
      %p285 = scmp.eq.s32.totalorder %s36, 3
      %p286 = por %p284, %p285
      %p288 = scmp.ne.s32.totalorder %s273, %s287
      %p289 = scmp.eq.s32.totalorder %s36, 0
      %p290 = por %p288, %p289
      %s292 = sadd.s32 %s291, 1
      %p295 = scmp.eq.s32.totalorder %s30, 3
      %p296 = scmp.ne.s32.totalorder %s291, %s293
      %p297 = scmp.eq.s32.totalorder %s30, 0
      %p298 = por %p296, %p297
      %p299 = scmp.ne.s32.totalorder %s291, %s293
      %p300 = scmp.eq.s32.totalorder %s35, 3
      %p301 = por %p299, %p300
      %p302 = scmp.ne.s32.totalorder %s293, %s294
      %p303 = scmp.eq.s32.totalorder %s35, 0
      %p304 = por %p302, %p303
      %p305 = scmp.ne.s32.totalorder %s293, %s294
      %p306 = scmp.eq.s32.totalorder %s36, 3
      %p307 = por %p305, %p306
      %p309 = scmp.ne.s32.totalorder %s294, %s308
      %p310 = scmp.eq.s32.totalorder %s36, 0
      %p311 = por %p309, %p310
      %s313 = sadd.s32 %s312, 1
      %p316 = scmp.eq.s32.totalorder %s30, 3
      %p317 = scmp.ne.s32.totalorder %s312, %s314
      %p318 = scmp.eq.s32.totalorder %s30, 0
      %p319 = por %p317, %p318
      %p320 = scmp.ne.s32.totalorder %s312, %s314
      %p321 = scmp.eq.s32.totalorder %s35, 3
      %p322 = por %p320, %p321
      %p323 = scmp.ne.s32.totalorder %s314, %s315
      %p324 = scmp.eq.s32.totalorder %s35, 0
      %p325 = por %p323, %p324
      %p326 = scmp.ne.s32.totalorder %s314, %s315
      %p327 = scmp.eq.s32.totalorder %s36, 3
      %p328 = por %p326, %p327
      %p330 = scmp.ne.s32.totalorder %s315, %s329
      %p331 = scmp.eq.s32.totalorder %s36, 0
      %p332 = por %p330, %p331
      %s334 = sadd.s32 %s333, 1
      %p337 = scmp.eq.s32.totalorder %s30, 3
      %p338 = scmp.ne.s32.totalorder %s333, %s335
      %p339 = scmp.eq.s32.totalorder %s30, 0
      %p340 = por %p338, %p339
      %p341 = scmp.ne.s32.totalorder %s333, %s335
      %p342 = scmp.eq.s32.totalorder %s35, 3
      %p343 = por %p341, %p342
      %p344 = scmp.ne.s32.totalorder %s335, %s336
      %p345 = scmp.eq.s32.totalorder %s35, 0
      %p346 = por %p344, %p345
      %p347 = scmp.ne.s32.totalorder %s335, %s336
      %p348 = scmp.eq.s32.totalorder %s36, 3
      %p349 = por %p347, %p348
      %p351 = scmp.ne.s32.totalorder %s336, %s350
      %p352 = scmp.eq.s32.totalorder %s36, 0
      %p353 = por %p351, %p352
      %s355 = sadd.s32 %s354, 1
      %p358 = scmp.eq.s32.totalorder %s30, 3
      %p359 = scmp.ne.s32.totalorder %s354, %s356
      %p360 = scmp.eq.s32.totalorder %s30, 0
      %p361 = por %p359, %p360
      %p362 = scmp.ne.s32.totalorder %s354, %s356
      %p363 = scmp.eq.s32.totalorder %s35, 3
      %p364 = por %p362, %p363
      %p365 = scmp.ne.s32.totalorder %s356, %s357
      %p366 = scmp.eq.s32.totalorder %s35, 0
      %p367 = por %p365, %p366
      %p368 = scmp.ne.s32.totalorder %s356, %s357
      %p369 = scmp.eq.s32.totalorder %s36, 3
      %p370 = por %p368, %p369
      %p372 = scmp.ne.s32.totalorder %s357, %s371
      %p373 = scmp.eq.s32.totalorder %s36, 0
      %p374 = por %p372, %p373
      %s375 = ssub.s32 %s37, %s49
      %s376 = ssub.s32 %s38, %s45
      %s377 = sor.u32 %s375, %s376
      %p378 = scmp.eq.s32.totalorder %s377, 0
      %s380 = sadd.s32 %s379, 1
      %s381 = scalar_select %p378, %s379, %s380
      %p384 = pneg %p378
      %p385 = scmp.eq.s32.totalorder %s30, 3
      %p386 = por %p384, %p385
      %p387 = scmp.ne.s32.totalorder %s379, %s382
      %p388 = scmp.eq.s32.totalorder %s30, 0
      %p389 = por %p387, %p388
      %p390 = scmp.ne.s32.totalorder %s379, %s382
      %p391 = scmp.eq.s32.totalorder %s35, 3
      %p392 = por %p390, %p391
      %p393 = scmp.ne.s32.totalorder %s382, %s383
      %p394 = scmp.eq.s32.totalorder %s35, 0
      %p395 = por %p393, %p394
      %p396 = scmp.ne.s32.totalorder %s382, %s383
      %p397 = scmp.eq.s32.totalorder %s36, 3
      %p398 = por %p396, %p397
      %p400 = scmp.ne.s32.totalorder %s383, %s399
      %p401 = scmp.eq.s32.totalorder %s36, 0
      %p402 = por %p400, %p401
      %p403 = scmp.le.s32.totalorder 1, %s30
      %p404 = scmp.lt.s32.totalorder %s30, 5
      %p405 = pnand %p403, %p404
      %p406 = pneg %p405
      // Predicated region
      $region9: #{tpu_custom_call.1} parent=5 // pred_check
        _
      $region10: #{tpu_custom_call.1} parent=5 // pred_check_branch
        %408 = sbr.rel (%p405) target = $region12
      $region11: #{tpu_custom_call.1} parent=5 // pred_region
        %s409 = ssub.s32 %s30, 1
        // Predicated region
        $region13: #{tpu_custom_call.1} parent=11 // pred_check
          %p410 = pneg %p63
        $region14: #{tpu_custom_call.1} parent=11 // pred_check_branch
          %412 = sbr.rel (%p410) target = $region16
        $region15: #{tpu_custom_call.1} parent=11 // pred_region
          %s414 = ssub.s32 16, 16
          %415 = vsyncadd [#allocation8], %s414
          %s417 = sshll.u32 %s0, 4
          %s418 = int_to_ptr.vmem [resolvable:$true] %s417
          %420 = dma.vmem_to_smem %s418, 16, [#allocation5], [#allocation8]
        $region16: #{tpu_custom_call.1} parent=11 // pred_fallthru
          _
        // Predicated region
        $region17: #{tpu_custom_call.1} parent=11 // pred_check
          %p421 = pneg %p136
        $region18: #{tpu_custom_call.1} parent=11 // pred_check_branch
          %423 = sbr.rel (%p421) target = $region20
        $region19: #{tpu_custom_call.1} parent=11 // pred_region
          _
        $region20: #{tpu_custom_call.1} parent=11 // pred_fallthru
          _
        // Predicated region
        $region21: #{tpu_custom_call.1} parent=11 // pred_check
          %p424 = pneg %p157
        $region22: #{tpu_custom_call.1} parent=11 // pred_check_branch
          %426 = sbr.rel (%p424) target = $region24
        $region23: #{tpu_custom_call.1} parent=11 // pred_region
          _
        $region24: #{tpu_custom_call.1} parent=11 // pred_fallthru
          _
        // Predicated region
        $region25: #{tpu_custom_call.1} parent=11 // pred_check
          %p427 = pneg %p178
        $region26: #{tpu_custom_call.1} parent=11 // pred_check_branch
          %429 = sbr.rel (%p427) target = $region28
        $region27: #{tpu_custom_call.1} parent=11 // pred_region
          %s431 = ssub.s32 512, 512
          %432 = vsyncadd [#allocation11], %s431
          %s433 = sshll.u32 [#allocation10], 4
          %s434 = int_to_ptr.vmem [resolvable:$true] %s433
          %439 = dma.hbm_to_vmem [thread:$0]  %s5, 512, %s434, [#allocation11], 64, 64, 4
        $region28: #{tpu_custom_call.1} parent=11 // pred_fallthru
          _
        // Predicated region
        $region29: #{tpu_custom_call.1} parent=11 // pred_check
          %p440 = pneg %p199
        $region30: #{tpu_custom_call.1} parent=11 // pred_check_branch
          %442 = sbr.rel (%p440) target = $region32
        $region31: #{tpu_custom_call.1} parent=11 // pred_region
          _
        $region32: #{tpu_custom_call.1} parent=11 // pred_fallthru
          _
        // Predicated region
        $region33: #{tpu_custom_call.1} parent=11 // pred_check
          %p443 = pneg %p220
        $region34: #{tpu_custom_call.1} parent=11 // pred_check_branch
          %445 = sbr.rel (%p443) target = $region36
        $region35: #{tpu_custom_call.1} parent=11 // pred_region
          %s447 = ssub.s32 512, 512
          %448 = vsyncadd [#allocation11], %s447
          %s449 = sshll.u32 [#allocation12], 4
          %s450 = int_to_ptr.vmem [resolvable:$true] %s449
          %455 = dma.hbm_to_vmem [thread:$0]  %s7, 512, %s450, [#allocation11], 64, 64, 4
        $region36: #{tpu_custom_call.1} parent=11 // pred_fallthru
          _
        // Predicated region
        $region37: #{tpu_custom_call.1} parent=11 // pred_check
          %p456 = pneg %p241
        $region38: #{tpu_custom_call.1} parent=11 // pred_check_branch
          %458 = sbr.rel (%p456) target = $region40
        $region39: #{tpu_custom_call.1} parent=11 // pred_region
          _
        $region40: #{tpu_custom_call.1} parent=11 // pred_fallthru
          _
        // Predicated region
        $region41: #{tpu_custom_call.1} parent=11 // pred_check
          %p459 = pneg %p262
        $region42: #{tpu_custom_call.1} parent=11 // pred_check_branch
          %461 = sbr.rel (%p459) target = $region44
        $region43: #{tpu_custom_call.1} parent=11 // pred_region
          %s463 = ssub.s32 512, 512
          %464 = vsyncadd [#allocation14], %s463
          %s465 = sshll.u32 [#allocation13], 4
          %s466 = int_to_ptr.vmem [resolvable:$true] %s465
          %471 = dma.hbm_to_vmem [thread:$0]  %s9, 512, %s466, [#allocation14], 64, 64, 4
        $region44: #{tpu_custom_call.1} parent=11 // pred_fallthru
          _
        // Predicated region
        $region45: #{tpu_custom_call.1} parent=11 // pred_check
          %p472 = pneg %p283
        $region46: #{tpu_custom_call.1} parent=11 // pred_check_branch
          %474 = sbr.rel (%p472) target = $region48
        $region47: #{tpu_custom_call.1} parent=11 // pred_region
          _
        $region48: #{tpu_custom_call.1} parent=11 // pred_fallthru
          _
        // Predicated region
        $region49: #{tpu_custom_call.1} parent=11 // pred_check
          %p475 = pneg %p304
        $region50: #{tpu_custom_call.1} parent=11 // pred_check_branch
          %477 = sbr.rel (%p475) target = $region52
        $region51: #{tpu_custom_call.1} parent=11 // pred_region
          %s479 = ssub.s32 512, 512
          %480 = vsyncadd [#allocation14], %s479
          %s481 = sshll.u32 [#allocation15], 4
          %s482 = int_to_ptr.vmem [resolvable:$true] %s481
          %487 = dma.hbm_to_vmem [thread:$0]  %s11, 512, %s482, [#allocation14], 64, 64, 4
        $region52: #{tpu_custom_call.1} parent=11 // pred_fallthru
          _
        // Predicated region
        $region53: #{tpu_custom_call.1} parent=11 // pred_check
          %p488 = pneg %p325
        $region54: #{tpu_custom_call.1} parent=11 // pred_check_branch
          %490 = sbr.rel (%p488) target = $region56
        $region55: #{tpu_custom_call.1} parent=11 // pred_region
          _
        $region56: #{tpu_custom_call.1} parent=11 // pred_fallthru
          _
        // Predicated region
        $region57: #{tpu_custom_call.1} parent=11 // pred_check
          %p491 = pneg %p346
        $region58: #{tpu_custom_call.1} parent=11 // pred_check_branch
          %493 = sbr.rel (%p491) target = $region60
        $region59: #{tpu_custom_call.1} parent=11 // pred_region
          _
        $region60: #{tpu_custom_call.1} parent=11 // pred_fallthru
          _
        // Predicated region
        $region61: #{tpu_custom_call.1} parent=11 // pred_check
          %p494 = pneg %p367
        $region62: #{tpu_custom_call.1} parent=11 // pred_check_branch
          %496 = sbr.rel (%p494) target = $region64
        $region63: #{tpu_custom_call.1} parent=11 // pred_region
          _
        $region64: #{tpu_custom_call.1} parent=11 // pred_fallthru
          _
      $region12: #{tpu_custom_call.1} parent=5 // pred_fallthru
        _
      %p497 = scmp.lt.s32.totalorder %s30, 4
      // Predicated region
      $region65: #{tpu_custom_call.1} parent=5 // pred_check
        %p498 = pneg %p497
      $region66: #{tpu_custom_call.1} parent=5 // pred_check_branch
        %500 = sbr.rel (%p498) target = $region68
      $region67: #{tpu_custom_call.1} parent=5 // pred_region
        // Predicated region
        $region69: #{tpu_custom_call.1} parent=67 // pred_check
          %p501 = pneg %p83
        $region70: #{tpu_custom_call.1} parent=67 // pred_check_branch
          %503 = sbr.rel (%p501) target = $region72
        $region71: #{tpu_custom_call.1} parent=67 // pred_region
          %p504 = scmp.lt.s32.totalorder %s37, 1
          %s505 = scalar_select %p504, %s37, 1
          %s506 = smul.addr %s505, 4
          %s507 = smul.addr %s506, 8
          %s508 = scalar_lea.vmem %s1, %s507
        $region72: #{tpu_custom_call.1} parent=67 // pred_fallthru
          _
        // Predicated region
        $region73: #{tpu_custom_call.1} parent=67 // pred_check
          %p509 = pneg %p109
        $region74: #{tpu_custom_call.1} parent=67 // pred_check_branch
          %511 = sbr.rel (%p509) target = $region76
        $region75: #{tpu_custom_call.1} parent=67 // pred_region
          %s512 = sand.u32 %s99, 1
          %s513 = scalar_lea.sflag [#allocation6], %s512
          %s514 = sand.u32 %s99, 1
          %s515 = smul.addr %s514, 8
          %s516 = scalar_lea.vmem [#allocation9], %s515
          %s517 = smul.u32 2, %s38
          %s519 = ssub.s32 128, 128
          %520 = vsyncadd %s513, %s519
          %s521 = smul.addr %s517, 64
          %s522 = scalar_lea.hbm %s2, %s521
          %s523 = sshll.u32 %s516, 4
          %s524 = int_to_ptr.vmem [resolvable:$true] %s523
          %529 = dma.hbm_to_vmem [thread:$0]  %s522, 128, %s524, %s513, 64, 64, 4
        $region76: #{tpu_custom_call.1} parent=67 // pred_fallthru
          _
      $region68: #{tpu_custom_call.1} parent=5 // pred_fallthru
        _
      %p530 = scmp.le.s32.totalorder 1, %s30
      %p531 = scmp.lt.s32.totalorder %s30, 5
      %p532 = pnand %p530, %p531
      %p533 = pneg %p532
      // Predicated region
      $region77: #{tpu_custom_call.1} parent=5 // pred_check
        _
      $region78: #{tpu_custom_call.1} parent=5 // pred_check_branch
        %535 = sbr.rel (%p532) target = $region80
      $region79: #{tpu_custom_call.1} parent=5 // pred_region
        %s536 = ssub.s32 %s30, 1
        // Predicated region
        $region81: #{tpu_custom_call.1} parent=79 // pred_check
          %p537 = pneg %p63
        $region82: #{tpu_custom_call.1} parent=79 // pred_check_branch
          %539 = sbr.rel (%p537) target = $region84
        $region83: #{tpu_custom_call.1} parent=79 // pred_region
          %540 = dma.done [#allocation8], 16
        $region84: #{tpu_custom_call.1} parent=79 // pred_fallthru
          _
        %s541 = sand.u32 %s102, 1
        %s542 = scalar_lea.sflag [#allocation6], %s541
        %s543 = sand.u32 %s102, 1
        %s544 = smul.addr %s543, 8
        %s545 = scalar_lea.vmem [#allocation9], %s544
        // Predicated region
        $region85: #{tpu_custom_call.1} parent=79 // pred_check
          %p546 = pneg %p115
        $region86: #{tpu_custom_call.1} parent=79 // pred_check_branch
          %548 = sbr.rel (%p546) target = $region88
        $region87: #{tpu_custom_call.1} parent=79 // pred_region
          %549 = dma.done %s542, 128
        $region88: #{tpu_custom_call.1} parent=79 // pred_fallthru
          _
        // Predicated region
        $region89: #{tpu_custom_call.1} parent=79 // pred_check
          %p550 = pneg %p178
        $region90: #{tpu_custom_call.1} parent=79 // pred_check_branch
          %552 = sbr.rel (%p550) target = $region92
        $region91: #{tpu_custom_call.1} parent=79 // pred_region
          %553 = dma.done [#allocation11], 512
        $region92: #{tpu_custom_call.1} parent=79 // pred_fallthru
          _
        // Predicated region
        $region93: #{tpu_custom_call.1} parent=79 // pred_check
          %p554 = pneg %p220
        $region94: #{tpu_custom_call.1} parent=79 // pred_check_branch
          %556 = sbr.rel (%p554) target = $region96
        $region95: #{tpu_custom_call.1} parent=79 // pred_region
          %557 = dma.done [#allocation11], 512
        $region96: #{tpu_custom_call.1} parent=79 // pred_fallthru
          _
        // Predicated region
        $region97: #{tpu_custom_call.1} parent=79 // pred_check
          %p558 = pneg %p262
        $region98: #{tpu_custom_call.1} parent=79 // pred_check_branch
          %560 = sbr.rel (%p558) target = $region100
        $region99: #{tpu_custom_call.1} parent=79 // pred_region
          %561 = dma.done [#allocation14], 512
        $region100: #{tpu_custom_call.1} parent=79 // pred_fallthru
          _
        // Predicated region
        $region101: #{tpu_custom_call.1} parent=79 // pred_check
          %p562 = pneg %p304
        $region102: #{tpu_custom_call.1} parent=79 // pred_check_branch
          %564 = sbr.rel (%p562) target = $region104
        $region103: #{tpu_custom_call.1} parent=79 // pred_region
          %565 = dma.done [#allocation14], 512
        $region104: #{tpu_custom_call.1} parent=79 // pred_fallthru
          _
        %566 = sfence
        %p567 = pneg %p63
        %p568 = pneg %p60
        %p569 = scmp.lt.s32.totalorder %s39, 1
        %s570 = scalar_select %p569, %s39, 1
        %s571 = smul.addr %s570, 4
        %s572 = smul.addr %s571, 8
        %s573 = scalar_lea.vmem %s1, %s572
        %p574 = pneg %p89
        %p575 = pneg %p86
        %s576 = sand.u32 %s102, 1
        %s577 = scalar_lea.sflag [#allocation6], %s576
        %s578 = sand.u32 %s102, 1
        %s579 = smul.addr %s578, 8
        %s580 = scalar_lea.vmem [#allocation9], %s579
        %p581 = pneg %p115
        %p582 = pneg %p112
        %p583 = pneg %p136
        %p584 = pneg %p133
        %p585 = pneg %p157
        %p586 = pneg %p154
        %p587 = pneg %p178
        %p588 = pneg %p175
        %p589 = pneg %p199
        %p590 = pneg %p196
        %p591 = pneg %p220
        %p592 = pneg %p217
        %p593 = pneg %p241
        %p594 = pneg %p238
        %p595 = pneg %p262
        %p596 = pneg %p259
        %p597 = pneg %p283
        %p598 = pneg %p280
        %p599 = pneg %p304
        %p600 = pneg %p301
        %p601 = pneg %p325
        %p602 = pneg %p322
        %p603 = pneg %p346
        %p604 = pneg %p343
        %p605 = pneg %p367
        %p606 = pneg %p364
        %p607 = pneg %p395
        %p608 = pneg %p392
        %s609 = sand.u32 %s382, 1
        %s610 = scalar_lea.sflag [#allocation7], %s609
        %s611 = sand.u32 %s382, 1
        %s612 = smul.addr %s611, 16
        %s613 = scalar_lea.vmem [#allocation16], %s612
        %p614 = scmp.lt.s32.totalorder %s39, 1
        %s615 = scalar_select %p614, %s39, 1
        %s616 = smul.addr %s615, 4
        %s617 = smul.addr %s616, 8
        %s618 = scalar_lea.vmem %s1, %s617
        %s619 = smul.u32 2, %s40
        %s620 = smul.u32 2, %s40
        %s622 = sld [smem:[#allocation5]]
        %s623 = sld [smem:[#allocation5 + $0x1]]
        %s624 = sld [smem:[#allocation5 + $0x2]]
        %s625 = sld [smem:[#allocation5 + $0x3]]
        %p626 = scmp.eq.s32.totalorder %s40, 0
        // Predicated region
        $region105: #{tpu_custom_call.1} parent=79 // pred_check
          %p627 = pneg %p626
        $region106: #{tpu_custom_call.1} parent=79 // pred_check_branch
          %629 = sbr.rel (%p627) target = $region108
        $region107: #{tpu_custom_call.1} parent=79 // pred_region
          %v630 = vld [vmem:[%s618] sm:$0xff]
          %v631 = vld [vmem:[%s618 + $0x8] sm:$0xff]
          %v632 = vld [vmem:[%s618 + $0x10] sm:$0xff]
          %v633 = vld [vmem:[%s618 + $0x18] sm:$0xff]
          %vm634 = vcmask 523264
          %v635 = vsel %vm634, %v630, 0.0
          %636 = vadd.xlane.f32.xlu0 %v635
          %v637 = vpop.xlane.xlu0 %636
          %v638 = vsel %vm634, %v631, 0.0
          %639 = vadd.xlane.f32.xlu0 %v638
          %v640 = vpop.xlane.xlu0 %639
          %v641 = vsel %vm634, %v632, 0.0
          %642 = vadd.xlane.f32.xlu0 %v641
          %v643 = vpop.xlane.xlu0 %642
          %v644 = vsel %vm634, %v633, 0.0
          %645 = vadd.xlane.f32.xlu0 %v644
          %v646 = vpop.xlane.xlu0 %645
          %v647 = vrcp.pop 64.0
          %v648 = vmul.f32 %v637, %v647
          %v649 = vmul.f32 %v640, %v647
          %v650 = vmul.f32 %v643, %v647
          %v651 = vmul.f32 %v646, %v647
          %v652 = vsub.f32 %v630, %v648
          %v653 = vsub.f32 %v631, %v649
          %v654 = vsub.f32 %v632, %v650
          %v655 = vsub.f32 %v633, %v651
          %v656 = vmul.f32 %v652, %v652
          %v657 = vmul.f32 %v653, %v653
          %v658 = vmul.f32 %v654, %v654
          %v659 = vmul.f32 %v655, %v655
          %v660 = vsel %vm634, %v656, 0.0
          %661 = vadd.xlane.f32.xlu0 %v660
          %v662 = vpop.xlane.xlu0 %661
          %v663 = vsel %vm634, %v657, 0.0
          %664 = vadd.xlane.f32.xlu0 %v663
          %v665 = vpop.xlane.xlu0 %664
          %v666 = vsel %vm634, %v658, 0.0
          %667 = vadd.xlane.f32.xlu0 %v666
          %v668 = vpop.xlane.xlu0 %667
          %v669 = vsel %vm634, %v659, 0.0
          %670 = vadd.xlane.f32.xlu0 %v669
          %v671 = vpop.xlane.xlu0 %670
          %v672 = vmul.f32 %v662, 0.015873017
          %v673 = vmul.f32 %v665, 0.015873017
          %v674 = vmul.f32 %v668, 0.015873017
          %v675 = vmul.f32 %v671, 0.015873017
          %v676 = vrsqrt.pop %v672
          %v677 = vmul.f32 %v672, %v676
          %vm678 = vcmp.eq.f32.partialorder %v672, inf
          %v679 = vsel %vm678, %v672, %v677
          %vm680 = vcmp.eq.f32.partialorder %v672, 0.0
          %v681 = vand.u32 %v672, 2147483648
          %v682 = vsel %vm680, %v681, %v679
          %v683 = vrsqrt.pop %v673
          %v684 = vmul.f32 %v673, %v683
          %vm685 = vcmp.eq.f32.partialorder %v673, inf
          %v686 = vsel %vm685, %v673, %v684
          %vm687 = vcmp.eq.f32.partialorder %v673, 0.0
          %v688 = vand.u32 %v673, 2147483648
          %v689 = vsel %vm687, %v688, %v686
          %v690 = vrsqrt.pop %v674
          %v691 = vmul.f32 %v674, %v690
          %vm692 = vcmp.eq.f32.partialorder %v674, inf
          %v693 = vsel %vm692, %v674, %v691
          %vm694 = vcmp.eq.f32.partialorder %v674, 0.0
          %v695 = vand.u32 %v674, 2147483648
          %v696 = vsel %vm694, %v695, %v693
          %v697 = vrsqrt.pop %v675
          %v698 = vmul.f32 %v675, %v697
          %vm699 = vcmp.eq.f32.partialorder %v675, inf
          %v700 = vsel %vm699, %v675, %v698
          %vm701 = vcmp.eq.f32.partialorder %v675, 0.0
          %v702 = vand.u32 %v675, 2147483648
          %v703 = vsel %vm701, %v702, %v700
          %v704 = vadd.f32 %v682, 1e-06
          %v705 = vadd.f32 %v689, 1e-06
          %v706 = vadd.f32 %v696, 1e-06
          %v707 = vadd.f32 %v703, 1e-06
          %v708 = vrcp.pop %v704
          %v709 = vmul.f32 1.0, %v708
          %v710 = vrcp.pop %v705
          %v711 = vmul.f32 1.0, %v710
          %v712 = vrcp.pop %v706
          %v713 = vmul.f32 1.0, %v712
          %v714 = vrcp.pop %v707
          %v715 = vmul.f32 1.0, %v714
          %v716 = vstv %s622
          %v717 = vmul.f32 %v716, %v652
          %v718 = vmul.f32 %v716, %v653
          %v719 = vmul.f32 %v716, %v654
          %v720 = vmul.f32 %v716, %v655
          %v721 = vmul.f32 %v717, %v709
          %v722 = vmul.f32 %v718, %v711
          %v723 = vmul.f32 %v719, %v713
          %v724 = vmul.f32 %v720, %v715
          %v725 = vstv %s623
          %v726 = vadd.f32 %v721, %v725
          %v727 = vadd.f32 %v722, %v725
          %v728 = vadd.f32 %v723, %v725
          %v729 = vadd.f32 %v724, %v725
          %v730 = vpack.c.bf16 %v727, %v726
          %v731 = vpack.c.bf16 %v729, %v728
          %v732 = vld [vmem:[#allocation10] sm:$0xf]
          %v733 = vld [vmem:[#allocation10 + $0x4] sm:$0xf]
          %v734 = vld [vmem:[#allocation10 + $0x8] sm:$0xf]
          %v735 = vld [vmem:[#allocation10 + $0xc] sm:$0xf]
          %v736 = vld [vmem:[#allocation10 + $0x10] sm:$0xf]
          %v737 = vld [vmem:[#allocation10 + $0x14] sm:$0xf]
          %v738 = vld [vmem:[#allocation10 + $0x18] sm:$0xf]
          %v739 = vld [vmem:[#allocation10 + $0x1c] sm:$0xf]
          %v740 = vld [vmem:[%s6] sm:$0x1]
          %v742 = vlaneseq
          %v743 = vshrl.u32 %v742, 7
          %v744 = vsub.s32 0, %v743
          %v745 = vrot.slane %v740, %v744
          %v755 = vunpack.c.l.b16 %v732
          %v756 = vunpack.c.l.b16 %v733
          %v757 = vunpack.c.l.b16 %v734
          %v758 = vunpack.c.l.b16 %v735
          %v759 = vunpack.c.l.b16 %v736
          %v760 = vunpack.c.l.b16 %v737
          %v761 = vunpack.c.l.b16 %v738
          %v762 = vunpack.c.l.b16 %v739
          %v763 = vpack.c.b16 %v756, %v755
          %v764 = vpack.c.b16 %v758, %v757
          %v765 = vpack.c.b16 %v760, %v759
          %v766 = vpack.c.b16 %v762, %v761
          %v772 = vsel %vm634, %v730, 0
          %v775 = vsel %vm634, %v731, 0
          %777 = vmatprep.subr.bf16.mxu0 0
          %778 = vmatpush1.bf16.msra.mxu0 0
          %779 = vmatprep.subr.bf16.mxu0 0
          %780 = vmatpush1.bf16.msra.mxu0 0
          %781 = vmatprep.subr.bf16.mxu0 0
          %782 = vmatpush1.bf16.msra.mxu0 0
          %783 = vmatprep.subr.bf16.mxu0 0
          %784 = vmatpush1.bf16.msra.mxu0 0
          %785 = vmatprep.subr.bf16.mxu0 0
          %786 = vmatpush1.bf16.msra.mxu0 %v766
          %787 = vmatprep.subr.bf16.mxu0 0
          %788 = vmatpush1.bf16.msra.mxu0 %v765
          %789 = vmatprep.subr.bf16.mxu0 0
          %790 = vmatpush1.bf16.msra.mxu0 %v764
          %791 = vmatprep.subr.bf16.mxu0 0
          %792 = vmatpush1.bf16.msra.mxu0 %v763
          %793 = vmatprep.subr.bf16.mxu0 0
          %794 = vmatpush2.bf16.msra.mxu0 0
          %795 = vmatprep.subr.bf16.mxu0 0
          %796 = vmatpush2.bf16.msra.mxu0 0
          %797 = vmatprep.subr.bf16.mxu0 0
          %798 = vmatpush2.bf16.msra.mxu0 0
          %799 = vmatprep.subr.bf16.mxu0 0
          %800 = vmatpush2.bf16.msra.mxu0 0
          %801 = vmatprep.subr.bf16.mxu0 0
          %802 = vmatpush2.bf16.msra.mxu0 0
          %803 = vmatprep.subr.bf16.mxu0 0
          %804 = vmatpush2.bf16.msra.mxu0 0
          %805 = vmatprep.subr.bf16.mxu0 0
          %806 = vmatpush2.bf16.msra.mxu0 0
          %807 = vmatprep.subr.bf16.mxu0 0
          %808 = vmatpush2.bf16.msra.mxu0 0
          %809 = vmatprep.mubr.bf16.mxu0 0
          %810 = vmatmul.mubr.bf16.gmra.mxu0 %v772
          %v811 = vpop.f32.mrf.mxu0
          %v812 = vadd.f32 %v745, %v811
          %v813 = vpop.f32.mrf.mxu0
          %v814 = vpop.f32.mrf.mxu0
          %v815 = vadd.f32 %v745, %v814
          %v816 = vpop.f32.mrf.mxu0
          %817 = vmatprep.mubr.bf16.mxu0 0
          %818 = vmatmul.mubr.bf16.gmra.mxu0 %v775
          %v819 = vpop.f32.mrf.mxu0
          %v820 = vadd.f32 %v745, %v819
          %v821 = vpop.f32.mrf.mxu0
          %v822 = vpop.f32.mrf.mxu0
          %v823 = vadd.f32 %v745, %v822
          %v824 = vpop.f32.mrf.mxu0
          %825 = vdwg.mxu0
          %v826 = vld [vmem:[#allocation12] sm:$0xf]
          %v827 = vld [vmem:[#allocation12 + $0x4] sm:$0xf]
          %v828 = vld [vmem:[#allocation12 + $0x8] sm:$0xf]
          %v829 = vld [vmem:[#allocation12 + $0xc] sm:$0xf]
          %v830 = vld [vmem:[#allocation12 + $0x10] sm:$0xf]
          %v831 = vld [vmem:[#allocation12 + $0x14] sm:$0xf]
          %v832 = vld [vmem:[#allocation12 + $0x18] sm:$0xf]
          %v833 = vld [vmem:[#allocation12 + $0x1c] sm:$0xf]
          %v834 = vld [vmem:[%s8] sm:$0x1]
          %v836 = vlaneseq
          %v837 = vshrl.u32 %v836, 7
          %v838 = vsub.s32 0, %v837
          %v839 = vrot.slane %v834, %v838
          %v849 = vunpack.c.l.b16 %v826
          %v850 = vunpack.c.l.b16 %v827
          %v851 = vunpack.c.l.b16 %v828
          %v852 = vunpack.c.l.b16 %v829
          %v853 = vunpack.c.l.b16 %v830
          %v854 = vunpack.c.l.b16 %v831
          %v855 = vunpack.c.l.b16 %v832
          %v856 = vunpack.c.l.b16 %v833
          %v857 = vpack.c.b16 %v850, %v849
          %v858 = vpack.c.b16 %v852, %v851
          %v859 = vpack.c.b16 %v854, %v853
          %v860 = vpack.c.b16 %v856, %v855
          %865 = vmatprep.subr.bf16.mxu0 0
          %866 = vmatpush1.bf16.msra.mxu0 0
          %867 = vmatprep.subr.bf16.mxu0 0
          %868 = vmatpush1.bf16.msra.mxu0 0
          %869 = vmatprep.subr.bf16.mxu0 0
          %870 = vmatpush1.bf16.msra.mxu0 0
          %871 = vmatprep.subr.bf16.mxu0 0
          %872 = vmatpush1.bf16.msra.mxu0 0
          %873 = vmatprep.subr.bf16.mxu0 0
          %874 = vmatpush1.bf16.msra.mxu0 %v860
          %875 = vmatprep.subr.bf16.mxu0 0
          %876 = vmatpush1.bf16.msra.mxu0 %v859
          %877 = vmatprep.subr.bf16.mxu0 0
          %878 = vmatpush1.bf16.msra.mxu0 %v858
          %879 = vmatprep.subr.bf16.mxu0 0
          %880 = vmatpush1.bf16.msra.mxu0 %v857
          %881 = vmatprep.subr.bf16.mxu0 0
          %882 = vmatpush2.bf16.msra.mxu0 0
          %883 = vmatprep.subr.bf16.mxu0 0
          %884 = vmatpush2.bf16.msra.mxu0 0
          %885 = vmatprep.subr.bf16.mxu0 0
          %886 = vmatpush2.bf16.msra.mxu0 0
          %887 = vmatprep.subr.bf16.mxu0 0
          %888 = vmatpush2.bf16.msra.mxu0 0
          %889 = vmatprep.subr.bf16.mxu0 0
          %890 = vmatpush2.bf16.msra.mxu0 0
          %891 = vmatprep.subr.bf16.mxu0 0
          %892 = vmatpush2.bf16.msra.mxu0 0
          %893 = vmatprep.subr.bf16.mxu0 0
          %894 = vmatpush2.bf16.msra.mxu0 0
          %895 = vmatprep.subr.bf16.mxu0 0
          %896 = vmatpush2.bf16.msra.mxu0 0
          %897 = vmatprep.mubr.bf16.mxu0 0
          %898 = vmatmul.mubr.bf16.gmra.mxu0 %v772
          %v899 = vpop.f32.mrf.mxu0
          %v900 = vadd.f32 %v839, %v899
          %v901 = vpop.f32.mrf.mxu0
          %v902 = vpop.f32.mrf.mxu0
          %v903 = vadd.f32 %v839, %v902
          %v904 = vpop.f32.mrf.mxu0
          %905 = vmatprep.mubr.bf16.mxu0 0
          %906 = vmatmul.mubr.bf16.gmra.mxu0 %v775
          %v907 = vpop.f32.mrf.mxu0
          %v908 = vadd.f32 %v839, %v907
          %v909 = vpop.f32.mrf.mxu0
          %v910 = vpop.f32.mrf.mxu0
          %v911 = vadd.f32 %v839, %v910
          %v912 = vpop.f32.mrf.mxu0
          %913 = vdwg.mxu0
          %914 = vxpose.xlu0.b32.start [1/16] %v812, 128
          %915 = vxpose.xlu0.b32.cont [2/16] %v815, 128
          %916 = vxpose.xlu0.b32.cont [3/16] %v820, 128
          %917 = vxpose.xlu0.b32.cont [4/16] %v823, 128
          %918 = vxpose.xlu0.b32.cont [5/16] 0.0, 128
          %919 = vxpose.xlu0.b32.cont [6/16] 0.0, 128
          %920 = vxpose.xlu0.b32.cont [7/16] 0.0, 128
          %921 = vxpose.xlu0.b32.cont [8/16] 0.0, 128
          %922 = vxpose.xlu0.b32.cont [9/16] 0.0, 128
          %923 = vxpose.xlu0.b32.cont [10/16] 0.0, 128
          %924 = vxpose.xlu0.b32.cont [11/16] 0.0, 128
          %925 = vxpose.xlu0.b32.cont [12/16] 0.0, 128
          %926 = vxpose.xlu0.b32.cont [13/16] 0.0, 128
          %927 = vxpose.xlu0.b32.cont [14/16] 0.0, 128
          %928 = vxpose.xlu0.b32.cont [15/16] 0.0, 128
          %929 = vxpose.xlu0.b32.end [16/16] 0.0, 128
          %v930 = vpop.trf.xlu0
          %v931 = vpop.trf.xlu0
          %v932 = vpop.trf.xlu0
          %v933 = vpop.trf.xlu0
          %v934 = vpop.trf.xlu0
          %v935 = vpop.trf.xlu0
          %v936 = vpop.trf.xlu0
          %v937 = vpop.trf.xlu0
          %v938 = vpop.trf.xlu0
          %v939 = vpop.trf.xlu0
          %v940 = vpop.trf.xlu0
          %v941 = vpop.trf.xlu0
          %v942 = vpop.trf.xlu0
          %v943 = vpop.trf.xlu0
          %v944 = vpop.trf.xlu0
          %v945 = vpop.trf.xlu0
          %v946 = vpack.c.bf16 %v931, %v930
          %v947 = vpack.c.bf16 %v933, %v932
          %v948 = vpack.c.bf16 %v935, %v934
          %v949 = vpack.c.bf16 %v937, %v936
          %v954 = vunpack.c.l.b16 %v946
          %v955 = vunpack.c.h.b16 %v946
          %v956 = vunpack.c.l.b16 %v947
          %v957 = vunpack.c.h.b16 %v947
          %v958 = vunpack.c.l.b16 %v948
          %v959 = vunpack.c.h.b16 %v948
          %v960 = vunpack.c.l.b16 %v949
          %v961 = vunpack.c.h.b16 %v949
          %v962 = vpack.c.b16 %v954, %v954
          %v963 = vpack.c.b16 %v955, %v955
          %v964 = vpack.c.b16 %v956, %v956
          %v965 = vpack.c.b16 %v957, %v957
          %v966 = vpack.c.b16 %v958, %v958
          %v967 = vpack.c.b16 %v959, %v959
          %v968 = vpack.c.b16 %v960, %v960
          %v969 = vpack.c.b16 %v961, %v961
          %vm978 = vcmask 257024
          %979 = vst.msk [vmem:[#allocation2] sm:$0xf] %vm978, %v962
          %980 = vst.msk [vmem:[#allocation2 + $0x4] sm:$0xf] %vm978, %v963
          %981 = vst.msk [vmem:[#allocation2 + $0x8] sm:$0xf] %vm978, %v964
          %982 = vst.msk [vmem:[#allocation2 + $0xc] sm:$0xf] %vm978, %v965
          %983 = vst.msk [vmem:[#allocation2 + $0x10] sm:$0xf] %vm978, %v966
          %984 = vst.msk [vmem:[#allocation2 + $0x14] sm:$0xf] %vm978, %v967
          %985 = vst.msk [vmem:[#allocation2 + $0x18] sm:$0xf] %vm978, %v968
          %986 = vst.msk [vmem:[#allocation2 + $0x1c] sm:$0xf] %vm978, %v969
          %v987 = vpack.c.bf16 %v903, %v900
          %v988 = vpack.c.bf16 %v911, %v908
          %v991 = vunpack.c.l.b16 %v987
          %v992 = vunpack.c.h.b16 %v987
          %v993 = vunpack.c.l.b16 %v988
          %v994 = vunpack.c.h.b16 %v988
          %v995 = vpack.c.b16 %v991, %v991
          %v996 = vpack.c.b16 %v992, %v992
          %v997 = vpack.c.b16 %v993, %v993
          %v998 = vpack.c.b16 %v994, %v994
          %vm1003 = vcmask 519168
          %1004 = vst.msk [vmem:[#allocation3] sm:$0xf] %vm1003, %v995
          %1005 = vst.msk [vmem:[#allocation3 + $0x4] sm:$0xf] %vm1003, %v996
          %1006 = vst.msk [vmem:[#allocation3 + $0x8] sm:$0xf] %vm1003, %v997
          %1007 = vst.msk [vmem:[#allocation3 + $0xc] sm:$0xf] %vm1003, %v998
        $region108: #{tpu_custom_call.1} parent=79 // pred_fallthru
          _
        %s1008 = smul.u32 %s40, 16
        %s1009 = scalar_lea.vmem %s618, %s1008
        %v1010 = vld [vmem:[%s1009] sm:$0xff]
        %v1011 = vld [vmem:[%s1009 + $0x8] sm:$0xff]
        %vm1012 = vcmask 523264
        %v1013 = vsel %vm1012, %v1010, 0.0
        %1014 = vadd.xlane.f32.xlu0 %v1013
        %v1015 = vpop.xlane.xlu0 %1014
        %v1016 = vsel %vm1012, %v1011, 0.0
        %1017 = vadd.xlane.f32.xlu0 %v1016
        %v1018 = vpop.xlane.xlu0 %1017
        %v1019 = vrcp.pop 64.0
        %v1020 = vmul.f32 %v1015, %v1019
        %v1021 = vmul.f32 %v1018, %v1019
        %v1022 = vsub.f32 %v1010, %v1020
        %v1023 = vsub.f32 %v1011, %v1021
        %v1024 = vmul.f32 %v1022, %v1022
        %v1025 = vmul.f32 %v1023, %v1023
        %v1026 = vsel %vm1012, %v1024, 0.0
        %1027 = vadd.xlane.f32.xlu0 %v1026
        %v1028 = vpop.xlane.xlu0 %1027
        %v1029 = vsel %vm1012, %v1025, 0.0
        %1030 = vadd.xlane.f32.xlu0 %v1029
        %v1031 = vpop.xlane.xlu0 %1030
        %v1032 = vmul.f32 %v1028, 0.015873017
        %v1033 = vmul.f32 %v1031, 0.015873017
        %v1034 = vrsqrt.pop %v1032
        %v1035 = vmul.f32 %v1032, %v1034
        %vm1036 = vcmp.eq.f32.partialorder %v1032, inf
        %v1037 = vsel %vm1036, %v1032, %v1035
        %vm1038 = vcmp.eq.f32.partialorder %v1032, 0.0
        %v1039 = vand.u32 %v1032, 2147483648
        %v1040 = vsel %vm1038, %v1039, %v1037
        %v1041 = vrsqrt.pop %v1033
        %v1042 = vmul.f32 %v1033, %v1041
        %vm1043 = vcmp.eq.f32.partialorder %v1033, inf
        %v1044 = vsel %vm1043, %v1033, %v1042
        %vm1045 = vcmp.eq.f32.partialorder %v1033, 0.0
        %v1046 = vand.u32 %v1033, 2147483648
        %v1047 = vsel %vm1045, %v1046, %v1044
        %v1048 = vadd.f32 %v1040, 1e-06
        %v1049 = vadd.f32 %v1047, 1e-06
        %v1050 = vrcp.pop %v1048
        %v1051 = vmul.f32 1.0, %v1050
        %v1052 = vrcp.pop %v1049
        %v1053 = vmul.f32 1.0, %v1052
        %v1054 = vstv %s622
        %v1055 = vmul.f32 %v1054, %v1022
        %v1056 = vmul.f32 %v1054, %v1023
        %v1057 = vmul.f32 %v1055, %v1051
        %v1058 = vmul.f32 %v1056, %v1053
        %v1059 = vstv %s623
        %v1060 = vadd.f32 %v1057, %v1059
        %v1061 = vadd.f32 %v1058, %v1059
        %v1062 = vpack.c.bf16 %v1061, %v1060
        %v1063 = vld [vmem:[%s3] sm:$0xf]
        %v1064 = vld [vmem:[%s3 + $0x4] sm:$0xf]
        %v1065 = vld [vmem:[%s3 + $0x8] sm:$0xf]
        %v1066 = vld [vmem:[%s3 + $0xc] sm:$0xf]
        %v1067 = vld [vmem:[%s3 + $0x10] sm:$0xf]
        %v1068 = vld [vmem:[%s3 + $0x14] sm:$0xf]
        %v1069 = vld [vmem:[%s3 + $0x18] sm:$0xf]
        %v1070 = vld [vmem:[%s3 + $0x1c] sm:$0xf]
        %v1071 = vld [vmem:[%s4] sm:$0x1]
        %v1073 = vlaneseq
        %v1074 = vshrl.u32 %v1073, 7
        %v1075 = vsub.s32 0, %v1074
        %v1076 = vrot.slane %v1071, %v1075
        %v1086 = vunpack.c.l.b16 %v1063
        %v1087 = vunpack.c.l.b16 %v1064
        %v1088 = vunpack.c.l.b16 %v1065
        %v1089 = vunpack.c.l.b16 %v1066
        %v1090 = vunpack.c.l.b16 %v1067
        %v1091 = vunpack.c.l.b16 %v1068
        %v1092 = vunpack.c.l.b16 %v1069
        %v1093 = vunpack.c.l.b16 %v1070
        %v1094 = vpack.c.b16 %v1087, %v1086
        %v1095 = vpack.c.b16 %v1089, %v1088
        %v1096 = vpack.c.b16 %v1091, %v1090
        %v1097 = vpack.c.b16 %v1093, %v1092
        %v1103 = vsel %vm1012, %v1062, 0
        %1105 = vmatprep.subr.bf16.mxu0 0
        %1106 = vmatpush1.bf16.msra.mxu0 0
        %1107 = vmatprep.subr.bf16.mxu0 0
        %1108 = vmatpush1.bf16.msra.mxu0 0
        %1109 = vmatprep.subr.bf16.mxu0 0
        %1110 = vmatpush1.bf16.msra.mxu0 0
        %1111 = vmatprep.subr.bf16.mxu0 0
        %1112 = vmatpush1.bf16.msra.mxu0 0
        %1113 = vmatprep.subr.bf16.mxu0 0
        %1114 = vmatpush1.bf16.msra.mxu0 %v1097
        %1115 = vmatprep.subr.bf16.mxu0 0
        %1116 = vmatpush1.bf16.msra.mxu0 %v1096
        %1117 = vmatprep.subr.bf16.mxu0 0
        %1118 = vmatpush1.bf16.msra.mxu0 %v1095
        %1119 = vmatprep.subr.bf16.mxu0 0
        %1120 = vmatpush1.bf16.msra.mxu0 %v1094
        %1121 = vmatprep.subr.bf16.mxu0 0
        %1122 = vmatpush2.bf16.msra.mxu0 0
        %1123 = vmatprep.subr.bf16.mxu0 0
        %1124 = vmatpush2.bf16.msra.mxu0 0
        %1125 = vmatprep.subr.bf16.mxu0 0
        %1126 = vmatpush2.bf16.msra.mxu0 0
        %1127 = vmatprep.subr.bf16.mxu0 0
        %1128 = vmatpush2.bf16.msra.mxu0 0
        %1129 = vmatprep.subr.bf16.mxu0 0
        %1130 = vmatpush2.bf16.msra.mxu0 0
        %1131 = vmatprep.subr.bf16.mxu0 0
        %1132 = vmatpush2.bf16.msra.mxu0 0
        %1133 = vmatprep.subr.bf16.mxu0 0
        %1134 = vmatpush2.bf16.msra.mxu0 0
        %1135 = vmatprep.subr.bf16.mxu0 0
        %1136 = vmatpush2.bf16.msra.mxu0 0
        %1137 = vmatprep.mubr.bf16.mxu0 0
        %1138 = vmatmul.mubr.bf16.gmra.mxu0 %v1103
        %v1139 = vpop.f32.mrf.mxu0
        %v1140 = vadd.f32 %v1076, %v1139
        %v1141 = vpop.f32.mrf.mxu0
        %v1142 = vpop.f32.mrf.mxu0
        %v1143 = vadd.f32 %v1076, %v1142
        %v1144 = vpop.f32.mrf.mxu0
        %1145 = vdwg.mxu0
        %v1146 = vpack.c.bf16 %v1143, %v1140
        %v1147 = vld [vmem:[%s545] sm:$0xf]
        %v1148 = vld [vmem:[%s545 + $0x4] sm:$0xf]
        %v1149 = vunpack.c.l.bf16 %v1147
        %v1150 = vunpack.c.l.bf16 %v1148
        %v1151 = vld [vmem:[#allocation2] sm:$0xf]
        %v1152 = vld [vmem:[#allocation2 + $0x4] sm:$0xf]
        %v1155 = vunpack.c.l.b16 %v1151
        %v1156 = vunpack.c.l.b16 %v1152
        %v1157 = vpack.c.b16 %v1156, %v1155
        %vm1159 = vcmask 130048
        %v1161 = vsel %vm1159, %v1146, 0
        %1163 = vmatprep.subr.bf16.mxu0 0
        %1164 = vmatpush1.bf16.msra.mxu0 0
        %1165 = vmatprep.subr.bf16.mxu0 0
        %1166 = vmatpush1.bf16.msra.mxu0 0
        %1167 = vmatprep.subr.bf16.mxu0 0
        %1168 = vmatpush1.bf16.msra.mxu0 0
        %1169 = vmatprep.subr.bf16.mxu0 0
        %1170 = vmatpush1.bf16.msra.mxu0 0
        %1171 = vmatprep.subr.bf16.mxu0 0
        %1172 = vmatpush1.bf16.msra.mxu0 0
        %1173 = vmatprep.subr.bf16.mxu0 0
        %1174 = vmatpush1.bf16.msra.mxu0 0
        %1175 = vmatprep.subr.bf16.mxu0 0
        %1176 = vmatpush1.bf16.msra.mxu0 0
        %1177 = vmatprep.subr.bf16.mxu0 0
        %1178 = vmatpush1.bf16.msra.mxu0 %v1157
        %1179 = vmatprep.subr.bf16.mxu0 0
        %1180 = vmatpush2.bf16.msra.mxu0 0
        %1181 = vmatprep.subr.bf16.mxu0 0
        %1182 = vmatpush2.bf16.msra.mxu0 0
        %1183 = vmatprep.subr.bf16.mxu0 0
        %1184 = vmatpush2.bf16.msra.mxu0 0
        %1185 = vmatprep.subr.bf16.mxu0 0
        %1186 = vmatpush2.bf16.msra.mxu0 0
        %1187 = vmatprep.subr.bf16.mxu0 0
        %1188 = vmatpush2.bf16.msra.mxu0 0
        %1189 = vmatprep.subr.bf16.mxu0 0
        %1190 = vmatpush2.bf16.msra.mxu0 0
        %1191 = vmatprep.subr.bf16.mxu0 0
        %1192 = vmatpush2.bf16.msra.mxu0 0
        %1193 = vmatprep.subr.bf16.mxu0 0
        %1194 = vmatpush2.bf16.msra.mxu0 0
        %1195 = vmatprep.mubr.bf16.mxu0 0
        %1196 = vmatmul.mubr.bf16.gmra.mxu0 %v1161
        %v1197 = vpop.f32.mrf.mxu0
        %v1198 = vadd.f32 %v1149, %v1197
        %v1199 = vpop.f32.mrf.mxu0
        %v1200 = vpop.f32.mrf.mxu0
        %v1201 = vadd.f32 %v1150, %v1200
        %v1202 = vpop.f32.mrf.mxu0
        %1203 = vdwg.mxu0
        %vm1204 = vcmask 261120
        %v1205 = vsel %vm1204, %v1198, -inf
        %1206 = vmax.xlane.f32.xlu0 %v1205
        %v1207 = vpop.xlane.xlu0 %1206
        %v1208 = vsel %vm1204, %v1201, -inf
        %1209 = vmax.xlane.f32.xlu0 %v1208
        %v1210 = vpop.xlane.xlu0 %1209
        %v1211 = vsub.f32 %v1198, %v1207
        %v1212 = vsub.f32 %v1201, %v1210
        %v1213 = vmul.f32 %v1211, 1.442695
        %v1214 = vpow.pop %v1213
        %v1215 = vmul.f32 %v1212, 1.442695
        %v1216 = vpow.pop %v1215
        %v1217 = vsel %vm1204, %v1214, 0.0
        %1218 = vadd.xlane.f32.xlu0 %v1217
        %v1219 = vpop.xlane.xlu0 %1218
        %v1220 = vsel %vm1204, %v1216, 0.0
        %1221 = vadd.xlane.f32.xlu0 %v1220
        %v1222 = vpop.xlane.xlu0 %1221
        %v1223 = vrcp.pop %v1219
        %v1224 = vrcp.pop %v1222
        %v1225 = vmul.f32 %v1214, %v1223
        %v1226 = vmul.f32 %v1216, %v1224
        %v1227 = vpack.c.bf16 %v1226, %v1225
        %v1228 = vld [vmem:[#allocation3] sm:$0xf]
        %v1229 = vld [vmem:[#allocation3 + $0x4] sm:$0xf]
        %v1230 = vld [vmem:[#allocation3 + $0x8] sm:$0xf]
        %v1231 = vld [vmem:[#allocation3 + $0xc] sm:$0xf]
        %v1236 = vunpack.c.l.b16 %v1228
        %v1237 = vunpack.c.l.b16 %v1229
        %v1238 = vunpack.c.l.b16 %v1230
        %v1239 = vunpack.c.l.b16 %v1231
        %v1240 = vpack.c.b16 %v1237, %v1236
        %v1241 = vpack.c.b16 %v1239, %v1238
        %v1245 = vsel %vm1204, %v1227, 0
        %1247 = vmatprep.subr.bf16.mxu0 0
        %1248 = vmatpush1.bf16.msra.mxu0 0
        %1249 = vmatprep.subr.bf16.mxu0 0
        %1250 = vmatpush1.bf16.msra.mxu0 0
        %1251 = vmatprep.subr.bf16.mxu0 0
        %1252 = vmatpush1.bf16.msra.mxu0 0
        %1253 = vmatprep.subr.bf16.mxu0 0
        %1254 = vmatpush1.bf16.msra.mxu0 0
        %1255 = vmatprep.subr.bf16.mxu0 0
        %1256 = vmatpush1.bf16.msra.mxu0 0
        %1257 = vmatprep.subr.bf16.mxu0 0
        %1258 = vmatpush1.bf16.msra.mxu0 0
        %1259 = vmatprep.subr.bf16.mxu0 0
        %1260 = vmatpush1.bf16.msra.mxu0 %v1241
        %1261 = vmatprep.subr.bf16.mxu0 0
        %1262 = vmatpush1.bf16.msra.mxu0 %v1240
        %1263 = vmatprep.subr.bf16.mxu0 0
        %1264 = vmatpush2.bf16.msra.mxu0 0
        %1265 = vmatprep.subr.bf16.mxu0 0
        %1266 = vmatpush2.bf16.msra.mxu0 0
        %1267 = vmatprep.subr.bf16.mxu0 0
        %1268 = vmatpush2.bf16.msra.mxu0 0
        %1269 = vmatprep.subr.bf16.mxu0 0
        %1270 = vmatpush2.bf16.msra.mxu0 0
        %1271 = vmatprep.subr.bf16.mxu0 0
        %1272 = vmatpush2.bf16.msra.mxu0 0
        %1273 = vmatprep.subr.bf16.mxu0 0
        %1274 = vmatpush2.bf16.msra.mxu0 0
        %1275 = vmatprep.subr.bf16.mxu0 0
        %1276 = vmatpush2.bf16.msra.mxu0 0
        %1277 = vmatprep.subr.bf16.mxu0 0
        %1278 = vmatpush2.bf16.msra.mxu0 0
        %1279 = vmatprep.mubr.bf16.mxu0 0
        %1280 = vmatmul.mubr.bf16.gmra.mxu0 %v1245
        %v1281 = vpop.f32.mrf.mxu0
        %v1282 = vadd.f32 0.0, %v1281
        %v1283 = vpop.f32.mrf.mxu0
        %v1284 = vpop.f32.mrf.mxu0
        %v1285 = vadd.f32 0.0, %v1284
        %v1286 = vpop.f32.mrf.mxu0
        %1287 = vdwg.mxu0
        %v1288 = vpack.c.bf16 %v1285, %v1282
        %v1290 = vunpack.c.l.b16 %v1288
        %v1291 = vunpack.c.h.b16 %v1288
        %v1292 = vpack.c.b16 %v1290, %v1290
        %v1293 = vpack.c.b16 %v1291, %v1291
        %vm1296 = vcmask 125952
        %1297 = vst.msk [vmem:[#allocation4] sm:$0xf] %vm1296, %v1292
        %1298 = vst.msk [vmem:[#allocation4 + $0x4] sm:$0xf] %vm1296, %v1293
        %v1299 = vld [vmem:[#allocation2 + $0x8] sm:$0xf]
        %v1300 = vld [vmem:[#allocation2 + $0xc] sm:$0xf]
        %1302 = vrot.lane.b32.xlu0 %v1146, 112
        %v1303 = vpop.permute.xlu0 %1302
        %v1306 = vunpack.c.l.b16 %v1299
        %v1307 = vunpack.c.l.b16 %v1300
        %v1308 = vpack.c.b16 %v1307, %v1306
        %v1311 = vsel %vm1159, %v1303, 0
        %1313 = vmatprep.subr.bf16.mxu0 0
        %1314 = vmatpush1.bf16.msra.mxu0 0
        %1315 = vmatprep.subr.bf16.mxu0 0
        %1316 = vmatpush1.bf16.msra.mxu0 0
        %1317 = vmatprep.subr.bf16.mxu0 0
        %1318 = vmatpush1.bf16.msra.mxu0 0
        %1319 = vmatprep.subr.bf16.mxu0 0
        %1320 = vmatpush1.bf16.msra.mxu0 0
        %1321 = vmatprep.subr.bf16.mxu0 0
        %1322 = vmatpush1.bf16.msra.mxu0 0
        %1323 = vmatprep.subr.bf16.mxu0 0
        %1324 = vmatpush1.bf16.msra.mxu0 0
        %1325 = vmatprep.subr.bf16.mxu0 0
        %1326 = vmatpush1.bf16.msra.mxu0 0
        %1327 = vmatprep.subr.bf16.mxu0 0
        %1328 = vmatpush1.bf16.msra.mxu0 %v1308
        %1329 = vmatprep.subr.bf16.mxu0 0
        %1330 = vmatpush2.bf16.msra.mxu0 0
        %1331 = vmatprep.subr.bf16.mxu0 0
        %1332 = vmatpush2.bf16.msra.mxu0 0
        %1333 = vmatprep.subr.bf16.mxu0 0
        %1334 = vmatpush2.bf16.msra.mxu0 0
        %1335 = vmatprep.subr.bf16.mxu0 0
        %1336 = vmatpush2.bf16.msra.mxu0 0
        %1337 = vmatprep.subr.bf16.mxu0 0
        %1338 = vmatpush2.bf16.msra.mxu0 0
        %1339 = vmatprep.subr.bf16.mxu0 0
        %1340 = vmatpush2.bf16.msra.mxu0 0
        %1341 = vmatprep.subr.bf16.mxu0 0
        %1342 = vmatpush2.bf16.msra.mxu0 0
        %1343 = vmatprep.subr.bf16.mxu0 0
        %1344 = vmatpush2.bf16.msra.mxu0 0
        %1345 = vmatprep.mubr.bf16.mxu0 0
        %1346 = vmatmul.mubr.bf16.gmra.mxu0 %v1311
        %v1347 = vpop.f32.mrf.mxu0
        %v1348 = vadd.f32 %v1149, %v1347
        %v1349 = vpop.f32.mrf.mxu0
        %v1350 = vpop.f32.mrf.mxu0
        %v1351 = vadd.f32 %v1150, %v1350
        %v1352 = vpop.f32.mrf.mxu0
        %1353 = vdwg.mxu0
        %v1354 = vsel %vm1204, %v1348, -inf
        %1355 = vmax.xlane.f32.xlu0 %v1354
        %v1356 = vpop.xlane.xlu0 %1355
        %v1357 = vsel %vm1204, %v1351, -inf
        %1358 = vmax.xlane.f32.xlu0 %v1357
        %v1359 = vpop.xlane.xlu0 %1358
        %v1360 = vsub.f32 %v1348, %v1356
        %v1361 = vsub.f32 %v1351, %v1359
        %v1362 = vmul.f32 %v1360, 1.442695
        %v1363 = vpow.pop %v1362
        %v1364 = vmul.f32 %v1361, 1.442695
        %v1365 = vpow.pop %v1364
        %v1366 = vsel %vm1204, %v1363, 0.0
        %1367 = vadd.xlane.f32.xlu0 %v1366
        %v1368 = vpop.xlane.xlu0 %1367
        %v1369 = vsel %vm1204, %v1365, 0.0
        %1370 = vadd.xlane.f32.xlu0 %v1369
        %v1371 = vpop.xlane.xlu0 %1370
        %v1372 = vrcp.pop %v1368
        %v1373 = vrcp.pop %v1371
        %v1374 = vmul.f32 %v1363, %v1372
        %v1375 = vmul.f32 %v1365, %v1373
        %v1376 = vpack.c.bf16 %v1375, %v1374
        %v1377 = vld [vmem:[#allocation3] sm:$0xf]
        %v1378 = vld [vmem:[#allocation3 + $0x4] sm:$0xf]
        %v1379 = vld [vmem:[#allocation3 + $0x8] sm:$0xf]
        %v1380 = vld [vmem:[#allocation3 + $0xc] sm:$0xf]
        %v1385 = vunpack.c.l.b16 %v1377
        %v1386 = vunpack.c.l.b16 %v1378
        %v1387 = vunpack.c.l.b16 %v1379
        %v1388 = vunpack.c.l.b16 %v1380
        %v1389 = vpack.c.b16 %v1386, %v1385
        %v1390 = vpack.c.b16 %v1388, %v1387
        %1391 = vrot.lane.b32.xlu0 %v1389, 112
        %v1392 = vpop.permute.xlu0 %1391
        %1393 = vrot.lane.b32.xlu0 %v1390, 112
        %v1394 = vpop.permute.xlu0 %1393
        %v1398 = vsel %vm1204, %v1376, 0
        %1400 = vmatprep.subr.bf16.mxu0 0
        %1401 = vmatpush1.bf16.msra.mxu0 0
        %1402 = vmatprep.subr.bf16.mxu0 0
        %1403 = vmatpush1.bf16.msra.mxu0 0
        %1404 = vmatprep.subr.bf16.mxu0 0
        %1405 = vmatpush1.bf16.msra.mxu0 0
        %1406 = vmatprep.subr.bf16.mxu0 0
        %1407 = vmatpush1.bf16.msra.mxu0 0
        %1408 = vmatprep.subr.bf16.mxu0 0
        %1409 = vmatpush1.bf16.msra.mxu0 0
        %1410 = vmatprep.subr.bf16.mxu0 0
        %1411 = vmatpush1.bf16.msra.mxu0 0
        %1412 = vmatprep.subr.bf16.mxu0 0
        %1413 = vmatpush1.bf16.msra.mxu0 %v1394
        %1414 = vmatprep.subr.bf16.mxu0 0
        %1415 = vmatpush1.bf16.msra.mxu0 %v1392
        %1416 = vmatprep.subr.bf16.mxu0 0
        %1417 = vmatpush2.bf16.msra.mxu0 0
        %1418 = vmatprep.subr.bf16.mxu0 0
        %1419 = vmatpush2.bf16.msra.mxu0 0
        %1420 = vmatprep.subr.bf16.mxu0 0
        %1421 = vmatpush2.bf16.msra.mxu0 0
        %1422 = vmatprep.subr.bf16.mxu0 0
        %1423 = vmatpush2.bf16.msra.mxu0 0
        %1424 = vmatprep.subr.bf16.mxu0 0
        %1425 = vmatpush2.bf16.msra.mxu0 0
        %1426 = vmatprep.subr.bf16.mxu0 0
        %1427 = vmatpush2.bf16.msra.mxu0 0
        %1428 = vmatprep.subr.bf16.mxu0 0
        %1429 = vmatpush2.bf16.msra.mxu0 0
        %1430 = vmatprep.subr.bf16.mxu0 0
        %1431 = vmatpush2.bf16.msra.mxu0 0
        %1432 = vmatprep.mubr.bf16.mxu0 0
        %1433 = vmatmul.mubr.bf16.gmra.mxu0 %v1398
        %v1434 = vpop.f32.mrf.mxu0
        %v1435 = vadd.f32 0.0, %v1434
        %v1436 = vpop.f32.mrf.mxu0
        %v1437 = vpop.f32.mrf.mxu0
        %v1438 = vadd.f32 0.0, %v1437
        %v1439 = vpop.f32.mrf.mxu0
        %1440 = vdwg.mxu0
        %v1441 = vpack.c.bf16 %v1438, %v1435
        %v1443 = vunpack.c.l.b16 %v1441
        %v1444 = vunpack.c.h.b16 %v1441
        %v1445 = vpack.c.b16 %v1443, %v1443
        %v1446 = vpack.c.b16 %v1444, %v1444
        %1447 = vrot.lane.b32.xlu0 %v1445, 16
        %v1448 = vpop.permute.xlu0 %1447
        %1449 = vrot.lane.b32.xlu0 %v1446, 16
        %v1450 = vpop.permute.xlu0 %1449
        %vm1453 = vcmask 257152
        %1454 = vst.msk [vmem:[#allocation4] sm:$0xf] %vm1453, %v1448
        %1455 = vst.msk [vmem:[#allocation4 + $0x4] sm:$0xf] %vm1453, %v1450
        %v1456 = vld [vmem:[#allocation2 + $0x10] sm:$0xf]
        %v1457 = vld [vmem:[#allocation2 + $0x14] sm:$0xf]
        %1458 = vrot.lane.b32.xlu0 %v1146, 96
        %v1459 = vpop.permute.xlu0 %1458
        %v1462 = vunpack.c.l.b16 %v1456
        %v1463 = vunpack.c.l.b16 %v1457
        %v1464 = vpack.c.b16 %v1463, %v1462
        %v1467 = vsel %vm1159, %v1459, 0
        %1469 = vmatprep.subr.bf16.mxu0 0
        %1470 = vmatpush1.bf16.msra.mxu0 0
        %1471 = vmatprep.subr.bf16.mxu0 0
        %1472 = vmatpush1.bf16.msra.mxu0 0
        %1473 = vmatprep.subr.bf16.mxu0 0
        %1474 = vmatpush1.bf16.msra.mxu0 0
        %1475 = vmatprep.subr.bf16.mxu0 0
        %1476 = vmatpush1.bf16.msra.mxu0 0
        %1477 = vmatprep.subr.bf16.mxu0 0
        %1478 = vmatpush1.bf16.msra.mxu0 0
        %1479 = vmatprep.subr.bf16.mxu0 0
        %1480 = vmatpush1.bf16.msra.mxu0 0
        %1481 = vmatprep.subr.bf16.mxu0 0
        %1482 = vmatpush1.bf16.msra.mxu0 0
        %1483 = vmatprep.subr.bf16.mxu0 0
        %1484 = vmatpush1.bf16.msra.mxu0 %v1464
        %1485 = vmatprep.subr.bf16.mxu0 0
        %1486 = vmatpush2.bf16.msra.mxu0 0
        %1487 = vmatprep.subr.bf16.mxu0 0
        %1488 = vmatpush2.bf16.msra.mxu0 0
        %1489 = vmatprep.subr.bf16.mxu0 0
        %1490 = vmatpush2.bf16.msra.mxu0 0
        %1491 = vmatprep.subr.bf16.mxu0 0
        %1492 = vmatpush2.bf16.msra.mxu0 0
        %1493 = vmatprep.subr.bf16.mxu0 0
        %1494 = vmatpush2.bf16.msra.mxu0 0
        %1495 = vmatprep.subr.bf16.mxu0 0
        %1496 = vmatpush2.bf16.msra.mxu0 0
        %1497 = vmatprep.subr.bf16.mxu0 0
        %1498 = vmatpush2.bf16.msra.mxu0 0
        %1499 = vmatprep.subr.bf16.mxu0 0
        %1500 = vmatpush2.bf16.msra.mxu0 0
        %1501 = vmatprep.mubr.bf16.mxu0 0
        %1502 = vmatmul.mubr.bf16.gmra.mxu0 %v1467
        %v1503 = vpop.f32.mrf.mxu0
        %v1504 = vadd.f32 %v1149, %v1503
        %v1505 = vpop.f32.mrf.mxu0
        %v1506 = vpop.f32.mrf.mxu0
        %v1507 = vadd.f32 %v1150, %v1506
        %v1508 = vpop.f32.mrf.mxu0
        %1509 = vdwg.mxu0
        %v1510 = vsel %vm1204, %v1504, -inf
        %1511 = vmax.xlane.f32.xlu0 %v1510
        %v1512 = vpop.xlane.xlu0 %1511
        %v1513 = vsel %vm1204, %v1507, -inf
        %1514 = vmax.xlane.f32.xlu0 %v1513
        %v1515 = vpop.xlane.xlu0 %1514
        %v1516 = vsub.f32 %v1504, %v1512
        %v1517 = vsub.f32 %v1507, %v1515
        %v1518 = vmul.f32 %v1516, 1.442695
        %v1519 = vpow.pop %v1518
        %v1520 = vmul.f32 %v1517, 1.442695
        %v1521 = vpow.pop %v1520
        %v1522 = vsel %vm1204, %v1519, 0.0
        %1523 = vadd.xlane.f32.xlu0 %v1522
        %v1524 = vpop.xlane.xlu0 %1523
        %v1525 = vsel %vm1204, %v1521, 0.0
        %1526 = vadd.xlane.f32.xlu0 %v1525
        %v1527 = vpop.xlane.xlu0 %1526
        %v1528 = vrcp.pop %v1524
        %v1529 = vrcp.pop %v1527
        %v1530 = vmul.f32 %v1519, %v1528
        %v1531 = vmul.f32 %v1521, %v1529
        %v1532 = vpack.c.bf16 %v1531, %v1530
        %v1533 = vld [vmem:[#allocation3] sm:$0xf]
        %v1534 = vld [vmem:[#allocation3 + $0x4] sm:$0xf]
        %v1535 = vld [vmem:[#allocation3 + $0x8] sm:$0xf]
        %v1536 = vld [vmem:[#allocation3 + $0xc] sm:$0xf]
        %v1541 = vunpack.c.l.b16 %v1533
        %v1542 = vunpack.c.l.b16 %v1534
        %v1543 = vunpack.c.l.b16 %v1535
        %v1544 = vunpack.c.l.b16 %v1536
        %v1545 = vpack.c.b16 %v1542, %v1541
        %v1546 = vpack.c.b16 %v1544, %v1543
        %1547 = vrot.lane.b32.xlu0 %v1545, 96
        %v1548 = vpop.permute.xlu0 %1547
        %1549 = vrot.lane.b32.xlu0 %v1546, 96
        %v1550 = vpop.permute.xlu0 %1549
        %v1554 = vsel %vm1204, %v1532, 0
        %1556 = vmatprep.subr.bf16.mxu0 0
        %1557 = vmatpush1.bf16.msra.mxu0 0
        %1558 = vmatprep.subr.bf16.mxu0 0
        %1559 = vmatpush1.bf16.msra.mxu0 0
        %1560 = vmatprep.subr.bf16.mxu0 0
        %1561 = vmatpush1.bf16.msra.mxu0 0
        %1562 = vmatprep.subr.bf16.mxu0 0
        %1563 = vmatpush1.bf16.msra.mxu0 0
        %1564 = vmatprep.subr.bf16.mxu0 0
        %1565 = vmatpush1.bf16.msra.mxu0 0
        %1566 = vmatprep.subr.bf16.mxu0 0
        %1567 = vmatpush1.bf16.msra.mxu0 0
        %1568 = vmatprep.subr.bf16.mxu0 0
        %1569 = vmatpush1.bf16.msra.mxu0 %v1550
        %1570 = vmatprep.subr.bf16.mxu0 0
        %1571 = vmatpush1.bf16.msra.mxu0 %v1548
        %1572 = vmatprep.subr.bf16.mxu0 0
        %1573 = vmatpush2.bf16.msra.mxu0 0
        %1574 = vmatprep.subr.bf16.mxu0 0
        %1575 = vmatpush2.bf16.msra.mxu0 0
        %1576 = vmatprep.subr.bf16.mxu0 0
        %1577 = vmatpush2.bf16.msra.mxu0 0
        %1578 = vmatprep.subr.bf16.mxu0 0
        %1579 = vmatpush2.bf16.msra.mxu0 0
        %1580 = vmatprep.subr.bf16.mxu0 0
        %1581 = vmatpush2.bf16.msra.mxu0 0
        %1582 = vmatprep.subr.bf16.mxu0 0
        %1583 = vmatpush2.bf16.msra.mxu0 0
        %1584 = vmatprep.subr.bf16.mxu0 0
        %1585 = vmatpush2.bf16.msra.mxu0 0
        %1586 = vmatprep.subr.bf16.mxu0 0
        %1587 = vmatpush2.bf16.msra.mxu0 0
        %1588 = vmatprep.mubr.bf16.mxu0 0
        %1589 = vmatmul.mubr.bf16.gmra.mxu0 %v1554
        %v1590 = vpop.f32.mrf.mxu0
        %v1591 = vadd.f32 0.0, %v1590
        %v1592 = vpop.f32.mrf.mxu0
        %v1593 = vpop.f32.mrf.mxu0
        %v1594 = vadd.f32 0.0, %v1593
        %v1595 = vpop.f32.mrf.mxu0
        %1596 = vdwg.mxu0
        %v1597 = vpack.c.bf16 %v1594, %v1591
        %v1599 = vunpack.c.l.b16 %v1597
        %v1600 = vunpack.c.h.b16 %v1597
        %v1601 = vpack.c.b16 %v1599, %v1599
        %v1602 = vpack.c.b16 %v1600, %v1600
        %1603 = vrot.lane.b32.xlu0 %v1601, 32
        %v1604 = vpop.permute.xlu0 %1603
        %1605 = vrot.lane.b32.xlu0 %v1602, 32
        %v1606 = vpop.permute.xlu0 %1605
        %vm1609 = vcmask 388352
        %1610 = vst.msk [vmem:[#allocation4] sm:$0xf] %vm1609, %v1604
        %1611 = vst.msk [vmem:[#allocation4 + $0x4] sm:$0xf] %vm1609, %v1606
        %v1612 = vld [vmem:[#allocation2 + $0x18] sm:$0xf]
        %v1613 = vld [vmem:[#allocation2 + $0x1c] sm:$0xf]
        %1614 = vrot.lane.b32.xlu0 %v1146, 80
        %v1615 = vpop.permute.xlu0 %1614
        %v1618 = vunpack.c.l.b16 %v1612
        %v1619 = vunpack.c.l.b16 %v1613
        %v1620 = vpack.c.b16 %v1619, %v1618
        %v1623 = vsel %vm1159, %v1615, 0
        %1625 = vmatprep.subr.bf16.mxu0 0
        %1626 = vmatpush1.bf16.msra.mxu0 0
        %1627 = vmatprep.subr.bf16.mxu0 0
        %1628 = vmatpush1.bf16.msra.mxu0 0
        %1629 = vmatprep.subr.bf16.mxu0 0
        %1630 = vmatpush1.bf16.msra.mxu0 0
        %1631 = vmatprep.subr.bf16.mxu0 0
        %1632 = vmatpush1.bf16.msra.mxu0 0
        %1633 = vmatprep.subr.bf16.mxu0 0
        %1634 = vmatpush1.bf16.msra.mxu0 0
        %1635 = vmatprep.subr.bf16.mxu0 0
        %1636 = vmatpush1.bf16.msra.mxu0 0
        %1637 = vmatprep.subr.bf16.mxu0 0
        %1638 = vmatpush1.bf16.msra.mxu0 0
        %1639 = vmatprep.subr.bf16.mxu0 0
        %1640 = vmatpush1.bf16.msra.mxu0 %v1620
        %1641 = vmatprep.subr.bf16.mxu0 0
        %1642 = vmatpush2.bf16.msra.mxu0 0
        %1643 = vmatprep.subr.bf16.mxu0 0
        %1644 = vmatpush2.bf16.msra.mxu0 0
        %1645 = vmatprep.subr.bf16.mxu0 0
        %1646 = vmatpush2.bf16.msra.mxu0 0
        %1647 = vmatprep.subr.bf16.mxu0 0
        %1648 = vmatpush2.bf16.msra.mxu0 0
        %1649 = vmatprep.subr.bf16.mxu0 0
        %1650 = vmatpush2.bf16.msra.mxu0 0
        %1651 = vmatprep.subr.bf16.mxu0 0
        %1652 = vmatpush2.bf16.msra.mxu0 0
        %1653 = vmatprep.subr.bf16.mxu0 0
        %1654 = vmatpush2.bf16.msra.mxu0 0
        %1655 = vmatprep.subr.bf16.mxu0 0
        %1656 = vmatpush2.bf16.msra.mxu0 0
        %1657 = vmatprep.mubr.bf16.mxu0 0
        %1658 = vmatmul.mubr.bf16.gmra.mxu0 %v1623
        %v1659 = vpop.f32.mrf.mxu0
        %v1660 = vadd.f32 %v1149, %v1659
        %v1661 = vpop.f32.mrf.mxu0
        %v1662 = vpop.f32.mrf.mxu0
        %v1663 = vadd.f32 %v1150, %v1662
        %v1664 = vpop.f32.mrf.mxu0
        %1665 = vdwg.mxu0
        %v1666 = vsel %vm1204, %v1660, -inf
        %1667 = vmax.xlane.f32.xlu0 %v1666
        %v1668 = vpop.xlane.xlu0 %1667
        %v1669 = vsel %vm1204, %v1663, -inf
        %1670 = vmax.xlane.f32.xlu0 %v1669
        %v1671 = vpop.xlane.xlu0 %1670
        %v1672 = vsub.f32 %v1660, %v1668
        %v1673 = vsub.f32 %v1663, %v1671
        %v1674 = vmul.f32 %v1672, 1.442695
        %v1675 = vpow.pop %v1674
        %v1676 = vmul.f32 %v1673, 1.442695
        %v1677 = vpow.pop %v1676
        %v1678 = vsel %vm1204, %v1675, 0.0
        %1679 = vadd.xlane.f32.xlu0 %v1678
        %v1680 = vpop.xlane.xlu0 %1679
        %v1681 = vsel %vm1204, %v1677, 0.0
        %1682 = vadd.xlane.f32.xlu0 %v1681
        %v1683 = vpop.xlane.xlu0 %1682
        %v1684 = vrcp.pop %v1680
        %v1685 = vrcp.pop %v1683
        %v1686 = vmul.f32 %v1675, %v1684
        %v1687 = vmul.f32 %v1677, %v1685
        %v1688 = vpack.c.bf16 %v1687, %v1686
        %v1689 = vld [vmem:[#allocation3] sm:$0xf]
        %v1690 = vld [vmem:[#allocation3 + $0x4] sm:$0xf]
        %v1691 = vld [vmem:[#allocation3 + $0x8] sm:$0xf]
        %v1692 = vld [vmem:[#allocation3 + $0xc] sm:$0xf]
        %v1697 = vunpack.c.l.b16 %v1689
        %v1698 = vunpack.c.l.b16 %v1690
        %v1699 = vunpack.c.l.b16 %v1691
        %v1700 = vunpack.c.l.b16 %v1692
        %v1701 = vpack.c.b16 %v1698, %v1697
        %v1702 = vpack.c.b16 %v1700, %v1699
        %1703 = vrot.lane.b32.xlu0 %v1701, 80
        %v1704 = vpop.permute.xlu0 %1703
        %1705 = vrot.lane.b32.xlu0 %v1702, 80
        %v1706 = vpop.permute.xlu0 %1705
        %v1710 = vsel %vm1204, %v1688, 0
        %1712 = vmatprep.subr.bf16.mxu0 0
        %1713 = vmatpush1.bf16.msra.mxu0 0
        %1714 = vmatprep.subr.bf16.mxu0 0
        %1715 = vmatpush1.bf16.msra.mxu0 0
        %1716 = vmatprep.subr.bf16.mxu0 0
        %1717 = vmatpush1.bf16.msra.mxu0 0
        %1718 = vmatprep.subr.bf16.mxu0 0
        %1719 = vmatpush1.bf16.msra.mxu0 0
        %1720 = vmatprep.subr.bf16.mxu0 0
        %1721 = vmatpush1.bf16.msra.mxu0 0
        %1722 = vmatprep.subr.bf16.mxu0 0
        %1723 = vmatpush1.bf16.msra.mxu0 0
        %1724 = vmatprep.subr.bf16.mxu0 0
        %1725 = vmatpush1.bf16.msra.mxu0 %v1706
        %1726 = vmatprep.subr.bf16.mxu0 0
        %1727 = vmatpush1.bf16.msra.mxu0 %v1704
        %1728 = vmatprep.subr.bf16.mxu0 0
        %1729 = vmatpush2.bf16.msra.mxu0 0
        %1730 = vmatprep.subr.bf16.mxu0 0
        %1731 = vmatpush2.bf16.msra.mxu0 0
        %1732 = vmatprep.subr.bf16.mxu0 0
        %1733 = vmatpush2.bf16.msra.mxu0 0
        %1734 = vmatprep.subr.bf16.mxu0 0
        %1735 = vmatpush2.bf16.msra.mxu0 0
        %1736 = vmatprep.subr.bf16.mxu0 0
        %1737 = vmatpush2.bf16.msra.mxu0 0
        %1738 = vmatprep.subr.bf16.mxu0 0
        %1739 = vmatpush2.bf16.msra.mxu0 0
        %1740 = vmatprep.subr.bf16.mxu0 0
        %1741 = vmatpush2.bf16.msra.mxu0 0
        %1742 = vmatprep.subr.bf16.mxu0 0
        %1743 = vmatpush2.bf16.msra.mxu0 0
        %1744 = vmatprep.mubr.bf16.mxu0 0
        %1745 = vmatmul.mubr.bf16.gmra.mxu0 %v1710
        %v1746 = vpop.f32.mrf.mxu0
        %v1747 = vadd.f32 0.0, %v1746
        %v1748 = vpop.f32.mrf.mxu0
        %v1749 = vpop.f32.mrf.mxu0
        %v1750 = vadd.f32 0.0, %v1749
        %v1751 = vpop.f32.mrf.mxu0
        %1752 = vdwg.mxu0
        %v1753 = vpack.c.bf16 %v1750, %v1747
        %v1755 = vunpack.c.l.b16 %v1753
        %v1756 = vunpack.c.h.b16 %v1753
        %v1757 = vpack.c.b16 %v1755, %v1755
        %v1758 = vpack.c.b16 %v1756, %v1756
        %1759 = vrot.lane.b32.xlu0 %v1757, 48
        %v1760 = vpop.permute.xlu0 %1759
        %1761 = vrot.lane.b32.xlu0 %v1758, 48
        %v1762 = vpop.permute.xlu0 %1761
        %vm1765 = vcmask 519552
        %1766 = vst.msk [vmem:[#allocation4] sm:$0xf] %vm1765, %v1760
        %1767 = vst.msk [vmem:[#allocation4 + $0x4] sm:$0xf] %vm1765, %v1762
        %v1768 = vld [vmem:[#allocation4] sm:$0xf]
        %v1769 = vld [vmem:[#allocation4 + $0x4] sm:$0xf]
        %v1770 = vld [vmem:[#allocation13] sm:$0xf]
        %v1771 = vld [vmem:[#allocation13 + $0x4] sm:$0xf]
        %v1772 = vld [vmem:[#allocation13 + $0x8] sm:$0xf]
        %v1773 = vld [vmem:[#allocation13 + $0xc] sm:$0xf]
        %v1774 = vld [vmem:[#allocation13 + $0x10] sm:$0xf]
        %v1775 = vld [vmem:[#allocation13 + $0x14] sm:$0xf]
        %v1776 = vld [vmem:[#allocation13 + $0x18] sm:$0xf]
        %v1777 = vld [vmem:[#allocation13 + $0x1c] sm:$0xf]
        %v1778 = vld [vmem:[%s10] sm:$0x1]
        %v1780 = vlaneseq
        %v1781 = vshrl.u32 %v1780, 7
        %v1782 = vsub.s32 0, %v1781
        %v1783 = vrot.slane %v1778, %v1782
        %v1787 = vunpack.c.l.b16 %v1768
        %v1788 = vunpack.c.l.b16 %v1769
        %v1789 = vpack.c.b16 %v1788, %v1787
        %v1798 = vunpack.c.l.b16 %v1770
        %v1799 = vunpack.c.l.b16 %v1771
        %v1800 = vunpack.c.l.b16 %v1772
        %v1801 = vunpack.c.l.b16 %v1773
        %v1802 = vunpack.c.l.b16 %v1774
        %v1803 = vunpack.c.l.b16 %v1775
        %v1804 = vunpack.c.l.b16 %v1776
        %v1805 = vunpack.c.l.b16 %v1777
        %v1806 = vpack.c.b16 %v1799, %v1798
        %v1807 = vpack.c.b16 %v1801, %v1800
        %v1808 = vpack.c.b16 %v1803, %v1802
        %v1809 = vpack.c.b16 %v1805, %v1804
        %v1815 = vsel %vm1012, %v1789, 0
        %1817 = vmatprep.subr.bf16.mxu0 0
        %1818 = vmatpush1.bf16.msra.mxu0 0
        %1819 = vmatprep.subr.bf16.mxu0 0
        %1820 = vmatpush1.bf16.msra.mxu0 0
        %1821 = vmatprep.subr.bf16.mxu0 0
        %1822 = vmatpush1.bf16.msra.mxu0 0
        %1823 = vmatprep.subr.bf16.mxu0 0
        %1824 = vmatpush1.bf16.msra.mxu0 0
        %1825 = vmatprep.subr.bf16.mxu0 0
        %1826 = vmatpush1.bf16.msra.mxu0 %v1809
        %1827 = vmatprep.subr.bf16.mxu0 0
        %1828 = vmatpush1.bf16.msra.mxu0 %v1808
        %1829 = vmatprep.subr.bf16.mxu0 0
        %1830 = vmatpush1.bf16.msra.mxu0 %v1807
        %1831 = vmatprep.subr.bf16.mxu0 0
        %1832 = vmatpush1.bf16.msra.mxu0 %v1806
        %1833 = vmatprep.subr.bf16.mxu0 0
        %1834 = vmatpush2.bf16.msra.mxu0 0
        %1835 = vmatprep.subr.bf16.mxu0 0
        %1836 = vmatpush2.bf16.msra.mxu0 0
        %1837 = vmatprep.subr.bf16.mxu0 0
        %1838 = vmatpush2.bf16.msra.mxu0 0
        %1839 = vmatprep.subr.bf16.mxu0 0
        %1840 = vmatpush2.bf16.msra.mxu0 0
        %1841 = vmatprep.subr.bf16.mxu0 0
        %1842 = vmatpush2.bf16.msra.mxu0 0
        %1843 = vmatprep.subr.bf16.mxu0 0
        %1844 = vmatpush2.bf16.msra.mxu0 0
        %1845 = vmatprep.subr.bf16.mxu0 0
        %1846 = vmatpush2.bf16.msra.mxu0 0
        %1847 = vmatprep.subr.bf16.mxu0 0
        %1848 = vmatpush2.bf16.msra.mxu0 0
        %1849 = vmatprep.mubr.bf16.mxu0 0
        %1850 = vmatmul.mubr.bf16.gmra.mxu0 %v1815
        %v1851 = vpop.f32.mrf.mxu0
        %v1852 = vadd.f32 %v1783, %v1851
        %v1853 = vpop.f32.mrf.mxu0
        %v1854 = vpop.f32.mrf.mxu0
        %v1855 = vadd.f32 %v1783, %v1854
        %v1856 = vpop.f32.mrf.mxu0
        %1857 = vdwg.mxu0
        %v1858 = vadd.f32 %v1010, %v1852
        %v1859 = vadd.f32 %v1011, %v1855
        %v1860 = vsel %vm1012, %v1858, 0.0
        %1861 = vadd.xlane.f32.xlu0 %v1860
        %v1862 = vpop.xlane.xlu0 %1861
        %v1863 = vsel %vm1012, %v1859, 0.0
        %1864 = vadd.xlane.f32.xlu0 %v1863
        %v1865 = vpop.xlane.xlu0 %1864
        %v1866 = vmul.f32 %v1862, %v1019
        %v1867 = vmul.f32 %v1865, %v1019
        %v1868 = vsub.f32 %v1858, %v1866
        %v1869 = vsub.f32 %v1859, %v1867
        %v1870 = vmul.f32 %v1868, %v1868
        %v1871 = vmul.f32 %v1869, %v1869
        %v1872 = vsel %vm1012, %v1870, 0.0
        %1873 = vadd.xlane.f32.xlu0 %v1872
        %v1874 = vpop.xlane.xlu0 %1873
        %v1875 = vsel %vm1012, %v1871, 0.0
        %1876 = vadd.xlane.f32.xlu0 %v1875
        %v1877 = vpop.xlane.xlu0 %1876
        %v1878 = vmul.f32 %v1874, 0.015873017
        %v1879 = vmul.f32 %v1877, 0.015873017
        %v1880 = vrsqrt.pop %v1878
        %v1881 = vmul.f32 %v1878, %v1880
        %vm1882 = vcmp.eq.f32.partialorder %v1878, inf
        %v1883 = vsel %vm1882, %v1878, %v1881
        %vm1884 = vcmp.eq.f32.partialorder %v1878, 0.0
        %v1885 = vand.u32 %v1878, 2147483648
        %v1886 = vsel %vm1884, %v1885, %v1883
        %v1887 = vrsqrt.pop %v1879
        %v1888 = vmul.f32 %v1879, %v1887
        %vm1889 = vcmp.eq.f32.partialorder %v1879, inf
        %v1890 = vsel %vm1889, %v1879, %v1888
        %vm1891 = vcmp.eq.f32.partialorder %v1879, 0.0
        %v1892 = vand.u32 %v1879, 2147483648
        %v1893 = vsel %vm1891, %v1892, %v1890
        %v1894 = vadd.f32 %v1886, 1e-06
        %v1895 = vadd.f32 %v1893, 1e-06
        %v1896 = vrcp.pop %v1894
        %v1897 = vmul.f32 1.0, %v1896
        %v1898 = vrcp.pop %v1895
        %v1899 = vmul.f32 1.0, %v1898
        %v1900 = vstv %s624
        %v1901 = vmul.f32 %v1900, %v1868
        %v1902 = vmul.f32 %v1900, %v1869
        %v1903 = vmul.f32 %v1901, %v1897
        %v1904 = vmul.f32 %v1902, %v1899
        %v1905 = vstv %s625
        %v1906 = vadd.f32 %v1903, %v1905
        %v1907 = vadd.f32 %v1904, %v1905
        %v1908 = vpack.c.bf16 %v1907, %v1906
        %v1909 = vld [vmem:[#allocation15] sm:$0xf]
        %v1910 = vld [vmem:[#allocation15 + $0x4] sm:$0xf]
        %v1911 = vld [vmem:[#allocation15 + $0x8] sm:$0xf]
        %v1912 = vld [vmem:[#allocation15 + $0xc] sm:$0xf]
        %v1913 = vld [vmem:[#allocation15 + $0x10] sm:$0xf]
        %v1914 = vld [vmem:[#allocation15 + $0x14] sm:$0xf]
        %v1915 = vld [vmem:[#allocation15 + $0x18] sm:$0xf]
        %v1916 = vld [vmem:[#allocation15 + $0x1c] sm:$0xf]
        %v1917 = vld [vmem:[%s12] sm:$0x1]
        %v1919 = vlaneseq
        %v1920 = vshrl.u32 %v1919, 7
        %v1921 = vsub.s32 0, %v1920
        %v1922 = vrot.slane %v1917, %v1921
        %v1932 = vunpack.c.l.b16 %v1909
        %v1933 = vunpack.c.l.b16 %v1910
        %v1934 = vunpack.c.l.b16 %v1911
        %v1935 = vunpack.c.l.b16 %v1912
        %v1936 = vunpack.c.l.b16 %v1913
        %v1937 = vunpack.c.l.b16 %v1914
        %v1938 = vunpack.c.l.b16 %v1915
        %v1939 = vunpack.c.l.b16 %v1916
        %v1940 = vpack.c.b16 %v1933, %v1932
        %v1941 = vpack.c.b16 %v1935, %v1934
        %v1942 = vpack.c.b16 %v1937, %v1936
        %v1943 = vpack.c.b16 %v1939, %v1938
        %v1949 = vsel %vm1012, %v1908, 0
        %1951 = vmatprep.subr.bf16.mxu0 0
        %1952 = vmatpush1.bf16.msra.mxu0 0
        %1953 = vmatprep.subr.bf16.mxu0 0
        %1954 = vmatpush1.bf16.msra.mxu0 0
        %1955 = vmatprep.subr.bf16.mxu0 0
        %1956 = vmatpush1.bf16.msra.mxu0 0
        %1957 = vmatprep.subr.bf16.mxu0 0
        %1958 = vmatpush1.bf16.msra.mxu0 0
        %1959 = vmatprep.subr.bf16.mxu0 0
        %1960 = vmatpush1.bf16.msra.mxu0 %v1943
        %1961 = vmatprep.subr.bf16.mxu0 0
        %1962 = vmatpush1.bf16.msra.mxu0 %v1942
        %1963 = vmatprep.subr.bf16.mxu0 0
        %1964 = vmatpush1.bf16.msra.mxu0 %v1941
        %1965 = vmatprep.subr.bf16.mxu0 0
        %1966 = vmatpush1.bf16.msra.mxu0 %v1940
        %1967 = vmatprep.subr.bf16.mxu0 0
        %1968 = vmatpush2.bf16.msra.mxu0 0
        %1969 = vmatprep.subr.bf16.mxu0 0
        %1970 = vmatpush2.bf16.msra.mxu0 0
        %1971 = vmatprep.subr.bf16.mxu0 0
        %1972 = vmatpush2.bf16.msra.mxu0 0
        %1973 = vmatprep.subr.bf16.mxu0 0
        %1974 = vmatpush2.bf16.msra.mxu0 0
        %1975 = vmatprep.subr.bf16.mxu0 0
        %1976 = vmatpush2.bf16.msra.mxu0 0
        %1977 = vmatprep.subr.bf16.mxu0 0
        %1978 = vmatpush2.bf16.msra.mxu0 0
        %1979 = vmatprep.subr.bf16.mxu0 0
        %1980 = vmatpush2.bf16.msra.mxu0 0
        %1981 = vmatprep.subr.bf16.mxu0 0
        %1982 = vmatpush2.bf16.msra.mxu0 0
        %1983 = vmatprep.mubr.bf16.mxu0 0
        %1984 = vmatmul.mubr.bf16.gmra.mxu0 %v1949
        %v1985 = vpop.f32.mrf.mxu0
        %v1986 = vadd.f32 %v1922, %v1985
        %v1987 = vpop.f32.mrf.mxu0
        %v1988 = vpop.f32.mrf.mxu0
        %v1989 = vadd.f32 %v1922, %v1988
        %v1990 = vpop.f32.mrf.mxu0
        %1991 = vdwg.mxu0
        %v1992 = vmax.f32 %v1986, 0.0
        %v1993 = vmax.f32 %v1989, 0.0
        %v1994 = vpack.c.bf16 %v1993, %v1992
        %v1995 = vld [vmem:[%s13] sm:$0xf]
        %v1996 = vld [vmem:[%s13 + $0x4] sm:$0xf]
        %v1997 = vld [vmem:[%s13 + $0x8] sm:$0xf]
        %v1998 = vld [vmem:[%s13 + $0xc] sm:$0xf]
        %v1999 = vld [vmem:[%s13 + $0x10] sm:$0xf]
        %v2000 = vld [vmem:[%s13 + $0x14] sm:$0xf]
        %v2001 = vld [vmem:[%s13 + $0x18] sm:$0xf]
        %v2002 = vld [vmem:[%s13 + $0x1c] sm:$0xf]
        %v2003 = vld [vmem:[%s13 + $0x20] sm:$0xf]
        %v2004 = vld [vmem:[%s13 + $0x24] sm:$0xf]
        %v2005 = vld [vmem:[%s13 + $0x28] sm:$0xf]
        %v2006 = vld [vmem:[%s13 + $0x2c] sm:$0xf]
        %v2007 = vld [vmem:[%s13 + $0x30] sm:$0xf]
        %v2008 = vld [vmem:[%s13 + $0x34] sm:$0xf]
        %v2009 = vld [vmem:[%s13 + $0x38] sm:$0xf]
        %v2010 = vld [vmem:[%s13 + $0x3c] sm:$0xf]
        %v2011 = vld [vmem:[%s14] sm:$0x1]
        %v2013 = vlaneseq
        %v2014 = vshrl.u32 %v2013, 7
        %v2015 = vsub.s32 0, %v2014
        %v2016 = vrot.slane %v2011, %v2015
        %v2034 = vunpack.c.l.b16 %v1995
        %v2035 = vunpack.c.l.b16 %v1996
        %v2036 = vunpack.c.l.b16 %v1997
        %v2037 = vunpack.c.l.b16 %v1998
        %v2038 = vunpack.c.l.b16 %v1999
        %v2039 = vunpack.c.l.b16 %v2000
        %v2040 = vunpack.c.l.b16 %v2001
        %v2041 = vunpack.c.l.b16 %v2002
        %v2042 = vunpack.c.l.b16 %v2003
        %v2043 = vunpack.c.l.b16 %v2004
        %v2044 = vunpack.c.l.b16 %v2005
        %v2045 = vunpack.c.l.b16 %v2006
        %v2046 = vunpack.c.l.b16 %v2007
        %v2047 = vunpack.c.l.b16 %v2008
        %v2048 = vunpack.c.l.b16 %v2009
        %v2049 = vunpack.c.l.b16 %v2010
        %v2050 = vpack.c.b16 %v2035, %v2034
        %v2051 = vpack.c.b16 %v2037, %v2036
        %v2052 = vpack.c.b16 %v2039, %v2038
        %v2053 = vpack.c.b16 %v2041, %v2040
        %v2054 = vpack.c.b16 %v2043, %v2042
        %v2055 = vpack.c.b16 %v2045, %v2044
        %v2056 = vpack.c.b16 %v2047, %v2046
        %v2057 = vpack.c.b16 %v2049, %v2048
        %2066 = vmatprep.subr.bf16.mxu0 0
        %2067 = vmatpush1.bf16.msra.mxu0 %v2057
        %2068 = vmatprep.subr.bf16.mxu0 0
        %2069 = vmatpush1.bf16.msra.mxu0 %v2056
        %2070 = vmatprep.subr.bf16.mxu0 0
        %2071 = vmatpush1.bf16.msra.mxu0 %v2055
        %2072 = vmatprep.subr.bf16.mxu0 0
        %2073 = vmatpush1.bf16.msra.mxu0 %v2054
        %2074 = vmatprep.subr.bf16.mxu0 0
        %2075 = vmatpush1.bf16.msra.mxu0 %v2053
        %2076 = vmatprep.subr.bf16.mxu0 0
        %2077 = vmatpush1.bf16.msra.mxu0 %v2052
        %2078 = vmatprep.subr.bf16.mxu0 0
        %2079 = vmatpush1.bf16.msra.mxu0 %v2051
        %2080 = vmatprep.subr.bf16.mxu0 0
        %2081 = vmatpush1.bf16.msra.mxu0 %v2050
        %2082 = vmatprep.subr.bf16.mxu0 0
        %2083 = vmatpush2.bf16.msra.mxu0 0
        %2084 = vmatprep.subr.bf16.mxu0 0
        %2085 = vmatpush2.bf16.msra.mxu0 0
        %2086 = vmatprep.subr.bf16.mxu0 0
        %2087 = vmatpush2.bf16.msra.mxu0 0
        %2088 = vmatprep.subr.bf16.mxu0 0
        %2089 = vmatpush2.bf16.msra.mxu0 0
        %2090 = vmatprep.subr.bf16.mxu0 0
        %2091 = vmatpush2.bf16.msra.mxu0 0
        %2092 = vmatprep.subr.bf16.mxu0 0
        %2093 = vmatpush2.bf16.msra.mxu0 0
        %2094 = vmatprep.subr.bf16.mxu0 0
        %2095 = vmatpush2.bf16.msra.mxu0 0
        %2096 = vmatprep.subr.bf16.mxu0 0
        %2097 = vmatpush2.bf16.msra.mxu0 0
        %2098 = vmatprep.mubr.bf16.mxu0 0
        %2099 = vmatmul.mubr.bf16.gmra.mxu0 %v1994
        %v2100 = vpop.f32.mrf.mxu0
        %v2101 = vadd.f32 %v2016, %v2100
        %v2102 = vpop.f32.mrf.mxu0
        %v2103 = vpop.f32.mrf.mxu0
        %v2104 = vadd.f32 %v2016, %v2103
        %v2105 = vpop.f32.mrf.mxu0
        %2106 = vdwg.mxu0
        %v2107 = vadd.f32 %v1858, %v2101
        %v2108 = vadd.f32 %v1859, %v2104
        %2109 = vst.msk [vmem:[%s613] sm:$0xff] %vm1012, %v2107
        %2110 = vst.msk [vmem:[%s613 + $0x8] sm:$0xff] %vm1012, %v2108
        %s2111 = sand.u32 %s382, 1
        %s2112 = scalar_lea.sflag [#allocation7], %s2111
        %s2113 = sand.u32 %s382, 1
        %s2114 = smul.addr %s2113, 16
        %s2115 = scalar_lea.vmem [#allocation16], %s2114
        // Predicated region
        $region109: #{tpu_custom_call.1} parent=79 // pred_check
          %p2116 = pneg %p392
        $region110: #{tpu_custom_call.1} parent=79 // pred_check_branch
          %2118 = sbr.rel (%p2116) target = $region112
        $region111: #{tpu_custom_call.1} parent=79 // pred_region
          %s2119 = smul.u32 2, %s40
          %s2121 = ssub.s32 256, 256
          %2122 = vsyncadd %s2112, %s2121
          %s2123 = smul.addr %s39, 4
          %s2124 = sadd.s32 %s2119, %s2123
          %s2125 = smul.addr %s2124, 128
          %s2126 = scalar_lea.hbm %s15, %s2125
          %s2127 = sshll.u32 %s2115, 4
          %s2128 = int_to_ptr.vmem [resolvable:$true] %s2127
          %2133 = dma.vmem_to_hbm [thread:$0]  %s2128, 256, %s2126, %s2112, 128, 128, 8
        $region112: #{tpu_custom_call.1} parent=79 // pred_fallthru
          _
      $region80: #{tpu_custom_call.1} parent=5 // pred_fallthru
        _
      %p2134 = scmp.le.s32.totalorder 2, %s30
      // Predicated region
      $region113: #{tpu_custom_call.1} parent=5 // pred_check
        %p2135 = pneg %p2134
      $region114: #{tpu_custom_call.1} parent=5 // pred_check_branch
        %2137 = sbr.rel (%p2135) target = $region116
      $region115: #{tpu_custom_call.1} parent=5 // pred_region
        %s2138 = ssub.s32 %s30, 2
        // Predicated region
        $region117: #{tpu_custom_call.1} parent=115 // pred_check
          %p2139 = pneg %p398
        $region118: #{tpu_custom_call.1} parent=115 // pred_check_branch
          %2141 = sbr.rel (%p2139) target = $region120
        $region119: #{tpu_custom_call.1} parent=115 // pred_region
          %s2142 = sand.u32 %s383, 1
          %s2143 = scalar_lea.sflag [#allocation7], %s2142
          %s2144 = sand.u32 %s383, 1
          %s2145 = smul.addr %s2144, 16
          %s2146 = scalar_lea.vmem [#allocation16], %s2145
          %2147 = dma.done %s2143, 256
        $region120: #{tpu_custom_call.1} parent=115 // pred_fallthru
          _
      $region116: #{tpu_custom_call.1} parent=5 // pred_fallthru
        _
    $region6: #{tpu_custom_call.1} parent=1 // loop_footer
      %s34 = sadd.s32 1, %s30
    $region7: #{tpu_custom_call.1} parent=1 // loop_footer_branch
      %29 = sbr.rel target = $region3
    $region8: #{tpu_custom_call.1} parent=1 // loop_exit
      _
    %2148 = vsyncpa [#allocation6], 1
    %s2149 = scalar_lea.sflag [#allocation6], 1
    %2150 = vsyncpa %s2149, 1
    %2151 = vsyncpa [#allocation11], 1
    %2152 = vsyncpa [#allocation14], 1
    %2153 = vsyncpa [#allocation7], 1
    %s2154 = scalar_lea.sflag [#allocation7], 1
    %2155 = vsyncpa %s2154, 1
    %2156 = vsyncpa [#allocation8], 1
    %s2157 = scalar_lea.sflag [#allocation8], 1
    %2158 = vsyncpa %s2157, 1

</llo_original>
